<compile_context>
chip_gen: v7x
topology: tpu7x:2x2x1
jax: 0.10.0
libtpu: 0.0.40
codegen_flags: <defaults>
</compile_context>

<pallas_src>
import functools

import jax
import jax.numpy as jnp
import numpy as np
from jax.experimental import pallas as pl
from jax.experimental.pallas import tpu as pltpu


# ---------------------------------------------------------------------------
# Kernel
# ---------------------------------------------------------------------------
def _mod_kernel(x_ref, wr_ref, wa_ref, rb_ref, gamma_ref, beta_ref,
                w1_ref, b1_ref, w2_ref, b2_ref, o_ref,
                h_scratch, acc_scratch):
    """grid = (token_tiles, F_tiles).  One token tile; FFN streamed along F."""
    f_idx = pl.program_id(1)

    # ---- first F step: LayerNorm (one-pass stats) + init the accumulator ----
    @pl.when(f_idx == 0)
    def _():
        x = x_ref[...].astype(jnp.float32)                       # (tile, H)
        inv_h = jnp.float32(1.0 / x.shape[-1])
        s1 = jnp.sum(x, axis=-1, keepdims=True)
        s2 = jnp.sum(x * x, axis=-1, keepdims=True)
        mean = s1 * inv_h
        var = s2 * inv_h - mean * mean                           # E[x^2]-E[x]^2
        h = (x - mean) * jax.lax.rsqrt(var + jnp.float32(1e-5))
        h = h * gamma_ref[...] + beta_ref[...]
        h_scratch[...] = h.astype(jnp.bfloat16)
        acc_scratch[...] = jnp.zeros_like(acc_scratch)

    # ---- FFN slab for this F tile: bf16 MXU matmuls, f32 accumulation -------
    f = jnp.dot(h_scratch[...], w1_ref[...],
                preferred_element_type=jnp.float32) + b1_ref[...]
    f = jax.nn.gelu(f, approximate=True)                         # tanh GELU (EUP)
    acc_scratch[...] += jnp.dot(f.astype(jnp.bfloat16), w2_ref[...],
                                preferred_element_type=jnp.float32)

    # ---- last F step: f32 router/aux, residual, MoD select ------------------
    @pl.when(f_idx == pl.num_programs(1) - 1)
    def _():
        x = x_ref[...].astype(jnp.float32)
        rb = rb_ref[...]                                         # (1, 2)
        router_w = jnp.sum(x * wr_ref[...], axis=-1, keepdims=True) + rb[:, 0:1]
        aux_logit = jnp.sum(x * wa_ref[...], axis=-1, keepdims=True) + rb[:, 1:2]
        y = x + acc_scratch[...] + b2_ref[...]
        # sigmoid(z) > 0.5  <=>  z > 0
        o_ref[...] = jnp.where(aux_logit > 0.0, y * router_w, x).astype(o_ref.dtype)


# ---------------------------------------------------------------------------
# Static configuration helpers
# ---------------------------------------------------------------------------
_VMEM_LIMIT = None


def _vmem_limit_bytes():
    """Generation-aware VMEM budget (~3/4 of physical, capped at 100 MiB)."""
    global _VMEM_LIMIT
    if _VMEM_LIMIT is None:
        try:
            cap = int(pltpu.get_tpu_info().vmem_capacity_bytes)
        except Exception:
            cap = 64 * 1024 * 1024            # conservative (v7x-sized) fallback
        _VMEM_LIMIT = min((cap * 3) // 4, 100 * 1024 * 1024)
    return _VMEM_LIMIT


def _pick_token_tile(total_tokens, hidden, token_tile, vmem_limit, act_bytes):
    # Per-token VMEM: double-buffered x + out blocks, bf16 LN scratch, f32 acc.
    per_token = 2 * 2 * act_bytes * hidden + 2 * hidden + 4 * hidden
    budget = max(8, (vmem_limit // 2) // per_token)
    cands = [t for t in (1024, 512, 256, 128, 64, 32, 16, 8)
             if t <= token_tile and t <= budget]
    # Prefer an even number of token tiles so v7x's two TensorCores both get work.
    for t in cands:
        if total_tokens % t == 0 and (total_tokens // t) % 2 == 0:
            return t
    for t in cands:
        if total_tokens % t == 0:
            return t
    raise ValueError("B*S must be a multiple of 8")


def _pick_f_tile(ffn, hidden, vmem_limit):
    # Double-buffered bf16 (H, tf) + (tf, H) weight tiles must fit comfortably.
    fallback = None
    for tf in (2048, 1024, 512, 256, 128):
        if ffn % tf == 0:
            fallback = tf                     # shrinks to smallest dividing tile
            if 8 * hidden * tf <= vmem_limit // 3:
                return tf
    return fallback if fallback is not None else ffn


# ---------------------------------------------------------------------------
# One-time parameter preparation (kept OUT of the per-step jit)
# ---------------------------------------------------------------------------
def prepare_params(params):
    """Fuse router/aux biases and pre-cast FFN weights to bf16 once, so the
    forward pass never re-reads/re-writes f32 weight copies per call."""
    return {
        "wr": params["wr"],                                          # (1, H) f32
        "wa": params["wa"],                                          # (1, H) f32
        "rb": jnp.concatenate([params["br"], params["ba"]], axis=1),  # (1, 2) f32
        "gamma": params["gamma"], "beta": params["beta"],
        "w1": params["w1"].astype(jnp.bfloat16), "b1": params["b1"],
        "w2": params["w2"].astype(jnp.bfloat16), "b2": params["b2"],
    }


# ---------------------------------------------------------------------------
# Forward pass
# ---------------------------------------------------------------------------
@functools.partial(jax.jit, static_argnames=("token_tile",))
def mod_transformer_forward(x, prepped, token_tile=1024):
    """x: (B, S, H).  Returns (B, S, H) — eval-mode MoD forward.
    Accepts f32 or bf16 activations; output keeps x.dtype, math runs in f32."""
    B, S, H = x.shape
    T = B * S
    F_dim = prepped["w1"].shape[1]
    vmem_limit = _vmem_limit_bytes()
    tile = _pick_token_tile(T, H, token_tile, vmem_limit, x.dtype.itemsize)
    tf = _pick_f_tile(F_dim, H, vmem_limit)
    n_tok, n_f = T // tile, F_dim // tf
    xt = x.reshape(T, H)

    cost = pl.CostEstimate(
        flops=int(4 * T * H * F_dim + 16 * T * H),
        transcendentals=int(T * F_dim + T),
        bytes_accessed=int(2 * T * H * x.dtype.itemsize        # x in, out
                           + n_tok * 2 * H * F_dim * 2         # bf16 weights / token tile
                           + (6 * H + F_dim + 2) * 4),
    )

    out = pl.pallas_call(
        _mod_kernel,
        out_shape=jax.ShapeDtypeStruct((T, H), x.dtype),
        grid_spec=pltpu.PrefetchScalarGridSpec(
            num_scalar_prefetch=0,
            grid=(n_tok, n_f),
            in_specs=[
                pl.BlockSpec((tile, H), lambda i, f: (i, 0)),   # x tokens
                pl.BlockSpec((1, H), lambda i, f: (0, 0)),      # router weight (f32)
                pl.BlockSpec((1, H), lambda i, f: (0, 0)),      # aux weight (f32)
                pl.BlockSpec((1, 2), lambda i, f: (0, 0)),      # [router_b, aux_b]
                pl.BlockSpec((1, H), lambda i, f: (0, 0)),      # layernorm gamma
                pl.BlockSpec((1, H), lambda i, f: (0, 0)),      # layernorm beta
                pl.BlockSpec((H, tf), lambda i, f: (0, f)),     # ffn w1 tile (bf16)
                pl.BlockSpec((1, tf), lambda i, f: (0, f)),     # ffn b1 tile
                pl.BlockSpec((tf, H), lambda i, f: (f, 0)),     # ffn w2 tile (bf16)
                pl.BlockSpec((1, H), lambda i, f: (0, 0)),      # ffn b2
            ],
            out_specs=pl.BlockSpec((tile, H), lambda i, f: (i, 0)),
            scratch_shapes=[
                pltpu.VMEM((tile, H), jnp.bfloat16),   # LN(x), reused across F tiles
                pltpu.VMEM((tile, H), jnp.float32),    # FFN accumulator
            ],
        ),
        compiler_params=pltpu.CompilerParams(
            dimension_semantics=("parallel", "arbitrary"),
            vmem_limit_bytes=vmem_limit),
        cost_estimate=cost,
    )(xt, prepped["wr"], prepped["wa"], prepped["rb"],
      prepped["gamma"], prepped["beta"],
      prepped["w1"], prepped["b1"], prepped["w2"], prepped["b2"])
    return out.reshape(B, S, H)


# ---------------------------------------------------------------------------
# Pure-JAX reference (same precision choices: f32 routing, bf16 FFN matmuls)
# ---------------------------------------------------------------------------
def ref_forward(x, params):
    B, S, H = x.shape
    x2 = x.reshape(B * S, H).astype(jnp.float32)

    router_w = jnp.sum(x2 * params["wr"], axis=-1, keepdims=True) + params["br"][0, 0]
    aux_logit = jnp.sum(x2 * params["wa"], axis=-1, keepdims=True) + params["ba"][0, 0]
    decision = aux_logit > 0.0

    mean = jnp.mean(x2, axis=-1, keepdims=True)
    var = jnp.mean((x2 - mean) ** 2, axis=-1, keepdims=True)
    h = (x2 - mean) * jax.lax.rsqrt(var + 1e-5) * params["gamma"] + params["beta"]
    f = jnp.dot(h.astype(jnp.bfloat16), params["w1"].astype(jnp.bfloat16),
                preferred_element_type=jnp.float32) + params["b1"]
    f = jax.nn.gelu(f, approximate=True)
    y = x2 + jnp.dot(f.astype(jnp.bfloat16), params["w2"].astype(jnp.bfloat16),
                     preferred_element_type=jnp.float32) + params["b2"]
    out = jnp.where(decision, y * router_w, x2)
    return out.reshape(B, S, H).astype(x.dtype)


def init_params(hidden_size, ffn_size, key):
    ks = jax.random.split(key, 6)
    s_h = 1.0 / jnp.sqrt(hidden_size)
    s_f = 1.0 / jnp.sqrt(ffn_size)
    return {
        "wr": (jax.random.normal(ks[0], (1, hidden_size)) * s_h).astype(jnp.float32),
        "br": jnp.full((1, 1), 0.01, jnp.float32),
        "wa": (jax.random.normal(ks[1], (1, hidden_size)) * s_h).astype(jnp.float32),
        "ba": jnp.full((1, 1), -0.02, jnp.float32),
        "gamma": jnp.ones((1, hidden_size), jnp.float32),
        "beta": jnp.zeros((1, hidden_size), jnp.float32),
        "w1": (jax.random.normal(ks[2], (hidden_size, ffn_size)) * s_h).astype(jnp.float32),
        "b1": (jax.random.normal(ks[3], (1, ffn_size)) * 0.01).astype(jnp.float32),
        "w2": (jax.random.normal(ks[4], (ffn_size, hidden_size)) * s_f).astype(jnp.float32),
        "b2": (jax.random.normal(ks[5], (1, hidden_size)) * 0.01).astype(jnp.float32),
    }


if __name__ == "__main__":
    # Small but tile-friendly shapes: B*S = 512 tokens.  The tile picker keeps the
    # token grid even (2 tiles of 256) so both v7x TensorCores are used; F=512
    # streams as a single FFN tile.
    B, S, H = 2, 256, 128
    F_dim = 4 * H

    key = jax.random.PRNGKey(0)
    kx, kp = jax.random.split(key)
    x = jax.random.normal(kx, (B, S, H), jnp.float32)
    params = init_params(H, F_dim, kp)
    prepped = prepare_params(params)     # one-time weight prep (fusion + bf16 cast)

    out = mod_transformer_forward(x, prepped)    # token_tile=1024 default
    out = jax.block_until_ready(out)

    ref = ref_forward(x, params)
    np.testing.assert_allclose(np.asarray(out), np.asarray(ref), rtol=3e-3, atol=3e-3)

    print("KERNEL_OK")
</pallas_src>

<mosaic_0001>
module attributes {stable_mosaic.version = 11 : i64} {
  func.func @_mod_kernel(%arg0: i32, %arg1: i32, %arg2: memref<256x128xf32, #tpu.memory_space<vmem>>, %arg3: memref<1x128xf32, #tpu.memory_space<vmem>>, %arg4: memref<1x128xf32, #tpu.memory_space<vmem>>, %arg5: memref<1x2xf32, #tpu.memory_space<vmem>>, %arg6: memref<1x128xf32, #tpu.memory_space<vmem>>, %arg7: memref<1x128xf32, #tpu.memory_space<vmem>>, %arg8: memref<128x512xbf16, #tpu.memory_space<vmem>>, %arg9: memref<1x512xf32, #tpu.memory_space<vmem>>, %arg10: memref<512x128xbf16, #tpu.memory_space<vmem>>, %arg11: memref<1x128xf32, #tpu.memory_space<vmem>>, %arg12: memref<256x128xf32, #tpu.memory_space<vmem>>, %arg13: memref<256x128xbf16, #tpu.memory_space<vmem>>, %arg14: memref<256x128xf32, #tpu.memory_space<vmem>>) attributes {dimension_semantics = [#tpu.dimension_semantics<parallel>, #tpu.dimension_semantics<arbitrary>], iteration_bounds = array<i64: 2, 1>, scalar_prefetch = 0 : i64, scratch_operands = 2 : i64, tpu.core_type = #tpu.core_type<tc>, window_params = [{transform_indices = @transform_0, window_bounds = array<i64: 256, 128>}, {pipeline_mode = #tpu.pipeline_mode<synchronous>, transform_indices = @transform_1, window_bounds = array<i64: 1, 128>}, {pipeline_mode = #tpu.pipeline_mode<synchronous>, transform_indices = @transform_2, window_bounds = array<i64: 1, 128>}, {pipeline_mode = #tpu.pipeline_mode<synchronous>, transform_indices = @transform_3, window_bounds = array<i64: 1, 2>}, {pipeline_mode = #tpu.pipeline_mode<synchronous>, transform_indices = @transform_4, window_bounds = array<i64: 1, 128>}, {pipeline_mode = #tpu.pipeline_mode<synchronous>, transform_indices = @transform_5, window_bounds = array<i64: 1, 128>}, {transform_indices = @transform_6, window_bounds = array<i64: 128, 512>}, {transform_indices = @transform_7, window_bounds = array<i64: 1, 512>}, {transform_indices = @transform_8, window_bounds = array<i64: 512, 128>}, {pipeline_mode = #tpu.pipeline_mode<synchronous>, transform_indices = @transform_9, window_bounds = array<i64: 1, 128>}, {transform_indices = @transform_10, window_bounds = array<i64: 256, 128>}]} {
    %c0_i32 = arith.constant 0 : i32
    %0 = arith.cmpi eq, %arg1, %c0_i32 : i32
    %1 = arith.extui %0 : i1 to i32
    %c0_i32_0 = arith.constant 0 : i32
    %2 = arith.cmpi ne, %1, %c0_i32_0 : i32
    scf.if %2 {
      %c0_19 = arith.constant 0 : index
      %c0_20 = arith.constant 0 : index
      %31 = vector.load %arg2[%c0_19, %c0_20] : memref<256x128xf32, #tpu.memory_space<vmem>>, vector<256x128xf32>
      %cst_21 = arith.constant dense<0.000000e+00> : vector<256xf32>
      %32 = vector.multi_reduction <add>, %31, %cst_21 [1] : vector<256x128xf32> to vector<256xf32>
      %33 = vector.shape_cast %32 : vector<256xf32> to vector<256x1xf32>
      %34 = arith.mulf %31, %31 : vector<256x128xf32>
      %cst_22 = arith.constant dense<0.000000e+00> : vector<256xf32>
      %35 = vector.multi_reduction <add>, %34, %cst_22 [1] : vector<256x128xf32> to vector<256xf32>
      %36 = vector.shape_cast %35 : vector<256xf32> to vector<256x1xf32>
      %cst_23 = arith.constant 7.812500e-03 : f32
      %37 = vector.broadcast %cst_23 : f32 to vector<256x1xf32>
      %38 = arith.mulf %33, %37 : vector<256x1xf32>
      %cst_24 = arith.constant 7.812500e-03 : f32
      %39 = vector.broadcast %cst_24 : f32 to vector<256x1xf32>
      %40 = arith.mulf %36, %39 : vector<256x1xf32>
      %41 = arith.mulf %38, %38 : vector<256x1xf32>
      %42 = arith.subf %40, %41 : vector<256x1xf32>
      %43 = vector.broadcast %38 : vector<256x1xf32> to vector<256x128xf32>
      %44 = arith.subf %31, %43 : vector<256x128xf32>
      %cst_25 = arith.constant 9.99999974E-6 : f32
      %45 = vector.broadcast %cst_25 : f32 to vector<256x1xf32>
      %46 = arith.addf %42, %45 : vector<256x1xf32>
      %47 = math.rsqrt %46 : vector<256x1xf32>
      %48 = vector.broadcast %47 : vector<256x1xf32> to vector<256x128xf32>
      %49 = arith.mulf %44, %48 : vector<256x128xf32>
      %c0_26 = arith.constant 0 : index
      %c0_27 = arith.constant 0 : index
      %50 = vector.load %arg6[%c0_26, %c0_27] : memref<1x128xf32, #tpu.memory_space<vmem>>, vector<1x128xf32>
      %51 = vector.broadcast %50 : vector<1x128xf32> to vector<256x128xf32>
      %52 = arith.mulf %49, %51 : vector<256x128xf32>
      %c0_28 = arith.constant 0 : index
      %c0_29 = arith.constant 0 : index
      %53 = vector.load %arg7[%c0_28, %c0_29] : memref<1x128xf32, #tpu.memory_space<vmem>>, vector<1x128xf32>
      %54 = vector.broadcast %53 : vector<1x128xf32> to vector<256x128xf32>
      %55 = arith.addf %52, %54 : vector<256x128xf32>
      %56 = arith.truncf %55 : vector<256x128xf32> to vector<256x128xbf16>
      %c0_30 = arith.constant 0 : index
      %c0_31 = arith.constant 0 : index
      %57 = vector.load %arg13[%c0_30, %c0_31] : memref<256x128xbf16, #tpu.memory_space<vmem>>, vector<256x128xbf16>
      tpu.vector_store %arg13[%c0_30, %c0_31], %56 {strides = array<i32>} : memref<256x128xbf16, #tpu.memory_space<vmem>>, vector<256x128xbf16>,
      %cst_32 = arith.constant 0.000000e+00 : f32
      %58 = vector.broadcast %cst_32 : f32 to vector<256x128xf32>
      %c0_33 = arith.constant 0 : index
      %c0_34 = arith.constant 0 : index
      %59 = vector.load %arg14[%c0_33, %c0_34] : memref<256x128xf32, #tpu.memory_space<vmem>>, vector<256x128xf32>
      tpu.vector_store %arg14[%c0_33, %c0_34], %58 {strides = array<i32>} : memref<256x128xf32, #tpu.memory_space<vmem>>, vector<256x128xf32>,
    } else {
    }
    %c0 = arith.constant 0 : index
    %c0_1 = arith.constant 0 : index
    %3 = vector.load %arg13[%c0, %c0_1] : memref<256x128xbf16, #tpu.memory_space<vmem>>, vector<256x128xbf16>
    %c0_2 = arith.constant 0 : index
    %c0_3 = arith.constant 0 : index
    %4 = vector.load %arg8[%c0_2, %c0_3] : memref<128x512xbf16, #tpu.memory_space<vmem>>, vector<128x512xbf16>
    %cst = arith.constant dense<0.000000e+00> : vector<256x512xf32>
    %5 = tpu.matmul %3, %4, %cst {dimension_numbers = #tpu.dot_dimension_numbers<[1], [0], [0], [1], [0, 0, 1, 1], [], []>} : vector<256x128xbf16>, vector<128x512xbf16>, vector<256x512xf32> -> vector<256x512xf32>
    %c0_4 = arith.constant 0 : index
    %c0_5 = arith.constant 0 : index
    %6 = vector.load %arg9[%c0_4, %c0_5] : memref<1x512xf32, #tpu.memory_space<vmem>>, vector<1x512xf32>
    %7 = vector.broadcast %6 : vector<1x512xf32> to vector<256x512xf32>
    %8 = arith.addf %5, %7 : vector<256x512xf32>
    %9 = arith.mulf %8, %8 : vector<256x512xf32>
    %10 = arith.mulf %8, %9 : vector<256x512xf32>
    %cst_6 = arith.constant 4.471500e-02 : f32
    %11 = vector.broadcast %cst_6 : f32 to vector<256x512xf32>
    %12 = arith.mulf %11, %10 : vector<256x512xf32>
    %13 = arith.addf %8, %12 : vector<256x512xf32>
    %cst_7 = arith.constant 0.797884583 : f32
    %14 = vector.broadcast %cst_7 : f32 to vector<256x512xf32>
    %15 = arith.mulf %14, %13 : vector<256x512xf32>
    %16 = math.tanh %15 : vector<256x512xf32>
    %cst_8 = arith.constant 1.000000e+00 : f32
    %17 = vector.broadcast %cst_8 : f32 to vector<256x512xf32>
    %18 = arith.addf %17, %16 : vector<256x512xf32>
    %cst_9 = arith.constant 5.000000e-01 : f32
    %19 = vector.broadcast %cst_9 : f32 to vector<256x512xf32>
    %20 = arith.mulf %19, %18 : vector<256x512xf32>
    %21 = arith.mulf %8, %20 : vector<256x512xf32>
    %c0_10 = arith.constant 0 : index
    %c0_11 = arith.constant 0 : index
    %22 = vector.load %arg14[%c0_10, %c0_11] : memref<256x128xf32, #tpu.memory_space<vmem>>, vector<256x128xf32>
    %23 = arith.truncf %21 : vector<256x512xf32> to vector<256x512xbf16>
    %c0_12 = arith.constant 0 : index
    %c0_13 = arith.constant 0 : index
    %24 = vector.load %arg10[%c0_12, %c0_13] : memref<512x128xbf16, #tpu.memory_space<vmem>>, vector<512x128xbf16>
    %cst_14 = arith.constant dense<0.000000e+00> : vector<256x128xf32>
    %25 = tpu.matmul %23, %24, %cst_14 {dimension_numbers = #tpu.dot_dimension_numbers<[1], [0], [0], [1], [0, 0, 1, 1], [], []>} : vector<256x512xbf16>, vector<512x128xbf16>, vector<256x128xf32> -> vector<256x128xf32>
    %26 = arith.addf %22, %25 : vector<256x128xf32>
    %c0_15 = arith.constant 0 : index
    %c0_16 = arith.constant 0 : index
    %27 = vector.load %arg14[%c0_15, %c0_16] : memref<256x128xf32, #tpu.memory_space<vmem>>, vector<256x128xf32>
    tpu.vector_store %arg14[%c0_15, %c0_16], %26 {strides = array<i32>} : memref<256x128xf32, #tpu.memory_space<vmem>>, vector<256x128xf32>,
    %c0_i32_17 = arith.constant 0 : i32
    %28 = arith.cmpi eq, %arg1, %c0_i32_17 : i32
    %29 = arith.extui %28 : i1 to i32
    %c0_i32_18 = arith.constant 0 : i32
    %30 = arith.cmpi ne, %29, %c0_i32_18 : i32
    scf.if %30 {
      %c0_19 = arith.constant 0 : index
      %c0_20 = arith.constant 0 : index
      %31 = vector.load %arg2[%c0_19, %c0_20] : memref<256x128xf32, #tpu.memory_space<vmem>>, vector<256x128xf32>
      %c0_21 = arith.constant 0 : index
      %c0_22 = arith.constant 0 : index
      %32 = vector.load %arg5[%c0_21, %c0_22] : memref<1x2xf32, #tpu.memory_space<vmem>>, vector<1x2xf32>
      %c0_23 = arith.constant 0 : index
      %c0_24 = arith.constant 0 : index
      %33 = vector.load %arg3[%c0_23, %c0_24] : memref<1x128xf32, #tpu.memory_space<vmem>>, vector<1x128xf32>
      %34 = vector.broadcast %33 : vector<1x128xf32> to vector<256x128xf32>
      %35 = arith.mulf %31, %34 : vector<256x128xf32>
      %cst_25 = arith.constant dense<0.000000e+00> : vector<256xf32>
      %36 = vector.multi_reduction <add>, %35, %cst_25 [1] : vector<256x128xf32> to vector<256xf32>
      %37 = vector.shape_cast %36 : vector<256xf32> to vector<256x1xf32>
      %38 = vector.extract_strided_slice %32 {offsets = [0, 0], sizes = [1, 1], strides = [1, 1]} : vector<1x2xf32> to vector<1x1xf32>
      %39 = vector.broadcast %38 : vector<1x1xf32> to vector<256x1xf32>
      %40 = arith.addf %37, %39 : vector<256x1xf32>
      %c0_26 = arith.constant 0 : index
      %c0_27 = arith.constant 0 : index
      %41 = vector.load %arg4[%c0_26, %c0_27] : memref<1x128xf32, #tpu.memory_space<vmem>>, vector<1x128xf32>
      %42 = vector.broadcast %41 : vector<1x128xf32> to vector<256x128xf32>
      %43 = arith.mulf %31, %42 : vector<256x128xf32>
      %cst_28 = arith.constant dense<0.000000e+00> : vector<256xf32>
      %44 = vector.multi_reduction <add>, %43, %cst_28 [1] : vector<256x128xf32> to vector<256xf32>
      %45 = vector.shape_cast %44 : vector<256xf32> to vector<256x1xf32>
      %46 = vector.extract_strided_slice %32 {offsets = [0, 1], sizes = [1, 1], strides = [1, 1]} : vector<1x2xf32> to vector<1x1xf32>
      %47 = vector.broadcast %46 : vector<1x1xf32> to vector<256x1xf32>
      %48 = arith.addf %45, %47 : vector<256x1xf32>
      %c0_29 = arith.constant 0 : index
      %c0_30 = arith.constant 0 : index
      %49 = vector.load %arg14[%c0_29, %c0_30] : memref<256x128xf32, #tpu.memory_space<vmem>>, vector<256x128xf32>
      %50 = arith.addf %31, %49 : vector<256x128xf32>
      %c0_31 = arith.constant 0 : index
      %c0_32 = arith.constant 0 : index
      %51 = vector.load %arg11[%c0_31, %c0_32] : memref<1x128xf32, #tpu.memory_space<vmem>>, vector<1x128xf32>
      %52 = vector.broadcast %51 : vector<1x128xf32> to vector<256x128xf32>
      %53 = arith.addf %50, %52 : vector<256x128xf32>
      %cst_33 = arith.constant 0.000000e+00 : f32
      %54 = vector.broadcast %cst_33 : f32 to vector<256x1xf32>
      %55 = arith.cmpf ogt, %48, %54 : vector<256x1xf32>
      %56 = vector.broadcast %40 : vector<256x1xf32> to vector<256x128xf32>
      %57 = arith.mulf %53, %56 : vector<256x128xf32>
      %58 = vector.shape_cast %55 : vector<256x1xi1> to vector<256x1xi1>
      %59 = vector.broadcast %58 : vector<256x1xi1> to vector<256x128xi1>
      %60 = arith.select %59, %57, %31 : vector<256x128xi1>, vector<256x128xf32>
      %c0_34 = arith.constant 0 : index
      %c0_35 = arith.constant 0 : index
      %61 = vector.load %arg12[%c0_34, %c0_35] : memref<256x128xf32, #tpu.memory_space<vmem>>, vector<256x128xf32>
      tpu.vector_store %arg12[%c0_34, %c0_35], %60 {strides = array<i32>} : memref<256x128xf32, #tpu.memory_space<vmem>>, vector<256x128xf32>,
    } else {
    }
    return
  }
  func.func @transform_0(%arg0: i32, %arg1: i32) -> (i32, i32) {
    %c0_i32 = arith.constant 0 : i32
    %c0_i32_0 = arith.constant 0 : i32
    return %arg0, %c0_i32 : i32, i32
  }
  func.func @transform_1(%arg0: i32, %arg1: i32) -> (i32, i32) {
    %c0_i32 = arith.constant 0 : i32
    %c0_i32_0 = arith.constant 0 : i32
    %c0_i32_1 = arith.constant 0 : i32
    return %c0_i32, %c0_i32_0 : i32, i32
  }
  func.func @transform_2(%arg0: i32, %arg1: i32) -> (i32, i32) {
    %c0_i32 = arith.constant 0 : i32
    %c0_i32_0 = arith.constant 0 : i32
    %c0_i32_1 = arith.constant 0 : i32
    return %c0_i32, %c0_i32_0 : i32, i32
  }
  func.func @transform_3(%arg0: i32, %arg1: i32) -> (i32, i32) {
    %c0_i32 = arith.constant 0 : i32
    %c0_i32_0 = arith.constant 0 : i32
    %c0_i32_1 = arith.constant 0 : i32
    return %c0_i32, %c0_i32_0 : i32, i32
  }
  func.func @transform_4(%arg0: i32, %arg1: i32) -> (i32, i32) {
    %c0_i32 = arith.constant 0 : i32
    %c0_i32_0 = arith.constant 0 : i32
    %c0_i32_1 = arith.constant 0 : i32
    return %c0_i32, %c0_i32_0 : i32, i32
  }
  func.func @transform_5(%arg0: i32, %arg1: i32) -> (i32, i32) {
    %c0_i32 = arith.constant 0 : i32
    %c0_i32_0 = arith.constant 0 : i32
    %c0_i32_1 = arith.constant 0 : i32
    return %c0_i32, %c0_i32_0 : i32, i32
  }
  func.func @transform_6(%arg0: i32, %arg1: i32) -> (i32, i32) {
    %c0_i32 = arith.constant 0 : i32
    %c0_i32_0 = arith.constant 0 : i32
    return %c0_i32, %arg1 : i32, i32
  }
  func.func @transform_7(%arg0: i32, %arg1: i32) -> (i32, i32) {
    %c0_i32 = arith.constant 0 : i32
    %c0_i32_0 = arith.constant 0 : i32
    return %c0_i32, %arg1 : i32, i32
  }
  func.func @transform_8(%arg0: i32, %arg1: i32) -> (i32, i32) {
    %c0_i32 = arith.constant 0 : i32
    %c0_i32_0 = arith.constant 0 : i32
    return %arg1, %c0_i32 : i32, i32
  }
  func.func @transform_9(%arg0: i32, %arg1: i32) -> (i32, i32) {
    %c0_i32 = arith.constant 0 : i32
    %c0_i32_0 = arith.constant 0 : i32
    %c0_i32_1 = arith.constant 0 : i32
    return %c0_i32, %c0_i32_0 : i32, i32
  }
  func.func @transform_10(%arg0: i32, %arg1: i32) -> (i32, i32) {
    %c0_i32 = arith.constant 0 : i32
    %c0_i32_0 = arith.constant 0 : i32
    return %arg0, %c0_i32 : i32, i32
  }
}

</mosaic_0001>

<llo_original>
// kernel: mod_transformer_forward.1
$region0: #{mod_transformer_forward.1}
  #allocation0 [shape = 'u32[]', space=smem, size = 0x4, offset = 0x4, fixed_abs, tag = 'smem constant byte address 0x4 - core index']
  #allocation1 [shape = 'u32[144,128]{1,0:T(1,128)}', space=vmem, size = 0x12000, scoped, tag = 'internal scratch']
  #allocation2 [shape = 'bf16[256,128]{1,0:T(16,128)(2,1)}', space=vmem, size = 0x10000, scoped, tag = 'scratch operand']
  #allocation3 [shape = 'f32[256,128]{1,0:T(8,128)}', space=vmem, size = 0x20000, scoped, tag = 'scratch operand']
  %s0 = inlined_call_operand.hbm [shape: f32[512,128], index: 0, kind: input, shape index: {}]
  %s1 = inlined_call_operand.vmem [shape: f32[1,128], index: 1, kind: input, shape index: {}]
  %s2 = inlined_call_operand.vmem [shape: f32[1,128], index: 2, kind: input, shape index: {}]
  %s3 = inlined_call_operand.vmem [shape: f32[1,2], index: 3, kind: input, shape index: {}]
  %s4 = inlined_call_operand.vmem [shape: f32[1,128], index: 4, kind: input, shape index: {}]
  %s5 = inlined_call_operand.vmem [shape: f32[1,128], index: 5, kind: input, shape index: {}]
  %s6 = inlined_call_operand.hbm [shape: bf16[128,512], index: 6, kind: input, shape index: {}]
  %s7 = inlined_call_operand.vmem [shape: f32[1,512], index: 7, kind: input, shape index: {}]
  %s8 = inlined_call_operand.hbm [shape: bf16[512,128], index: 8, kind: input, shape index: {}]
  %s9 = inlined_call_operand.vmem [shape: f32[1,128], index: 9, kind: input, shape index: {}]
  %s10 = inlined_call_operand.hbm [shape: f32[512,128], index: 10, kind: output, shape index: {}]
  %s11 = sld [smem:[#allocation0]]
  $region93: #{mod_transformer_forward.1} parent=0
    _
  %s13 = ssub.s32 1, %s11
  %s14 = scalar_select 0, %s13, %s11
  $region1: #{mod_transformer_forward.1} parent=0
    #allocation4 [shape = 'u8[262144]{0}', space=vmem, size = 0x40000, scoped, tag = 'input window, operand 0']
    #allocation5 [shape = 's32[2]{0}', space=sflag, size = 0x8, scoped, tag = 'scoped memory for mod_transformer_forward.1']
    #allocation6 [shape = 's32[2]{0}', space=sflag, size = 0x8, scoped, tag = 'scoped memory for mod_transformer_forward.1']
    #allocation7 [shape = 'u8[131072]{0}', space=vmem, size = 0x20000, scoped, tag = 'input window, operand 6, single buffered']
    #allocation8 [shape = 's32[1]{0}', space=sflag, size = 0x4, scoped, tag = 'scoped memory for mod_transformer_forward.1']
    #allocation9 [shape = 'u8[131072]{0}', space=vmem, size = 0x20000, scoped, tag = 'input window, operand 8, single buffered']
    #allocation10 [shape = 'u8[262144]{0}', space=vmem, size = 0x40000, scoped, tag = 'output window, operand 0']
    %15 = vsyncpa [#allocation5], 0
    %s16 = scalar_lea.sflag [#allocation5], 1
    %17 = vsyncpa %s16, 0
    %18 = vsyncpa [#allocation8], 0
    %19 = vsyncpa [#allocation6], 0
    %s20 = scalar_lea.sflag [#allocation6], 1
    %21 = vsyncpa %s20, 0
    loop: start=0, step=1, limit=4
    $region2: #{mod_transformer_forward.1} parent=1 // loop_pre_header
      _
    $region3: #{mod_transformer_forward.1} parent=1 // loop_header
      %s23 = sphi 0, %s27
      %p24 = scmp.ge.s32.totalorder %s23, 4
      %s30 = sphi 0, %s42
      %s31 = sphi 0, %s38
      %s32 = sphi 0, %s30
      %s33 = sphi 0, %s31
      %s34 = sphi 0, %s32
      %s35 = sphi 0, %s33
      %s45 = sphi 0, %s47
      %s48 = sphi 0, %s45
      %s49 = sphi 0, %s48
      %s65 = sphi 0, %s49
      %s69 = sphi 0, %s69
      %s71 = sphi 0, %s69
      %s72 = sphi 0, %s71
      %s86 = sphi 0, %s72
      %s90 = sphi 0, %s90
      %s92 = sphi 0, %s90
      %s93 = sphi 0, %s92
      %s107 = sphi 0, %s93
      %s111 = sphi 0, %s111
      %s113 = sphi 0, %s111
      %s114 = sphi 0, %s113
      %s128 = sphi 0, %s114
      %s132 = sphi 0, %s132
      %s134 = sphi 0, %s132
      %s135 = sphi 0, %s134
      %s149 = sphi 0, %s135
      %s153 = sphi 0, %s153
      %s155 = sphi 0, %s153
      %s156 = sphi 0, %s155
      %s170 = sphi 0, %s156
      %s176 = sphi 0, %s178
      %s179 = sphi 0, %s176
      %s180 = sphi 0, %s179
      %s196 = sphi 0, %s180
      %s202 = sphi 0, %s204
      %s205 = sphi 0, %s202
      %s206 = sphi 0, %s205
      %s222 = sphi 0, %s206
      %s228 = sphi 0, %s230
      %s231 = sphi 0, %s228
      %s232 = sphi 0, %s231
      %s248 = sphi 0, %s232
      %s252 = sphi 0, %s252
      %s254 = sphi 0, %s252
      %s255 = sphi 0, %s254
      %s269 = sphi 0, %s255
      %s275 = sphi 0, %s277
      %s278 = sphi 0, %s275
      %s279 = sphi 0, %s278
      %s295 = sphi 0, %s279
    $region4: #{mod_transformer_forward.1} parent=1 // loop_header_branch
      %26 = sbr.rel (%p24) target = $region8
    $region5: #{mod_transformer_forward.1} parent=1 // loop_body
      %s28 = ssub.s32 %s23, 1
      %s29 = ssub.s32 %s23, 2
      %s36 = sadd.s32 1, %s31
      %p37 = scmp.ge.s32.totalorder %s36, 1
      %s38 = scalar_select %p37, 0, %s36
      %s39 = sadd.s32 1, %s30
      %s40 = scalar_select %p37, %s39, %s30
      %p41 = scmp.ge.s32.totalorder %s40, 2
      %s42 = scalar_select %p41, 0, %s40
      %s43 = ssub.s32 %s30, %s42
      %p44 = scmp.eq.s32.totalorder %s43, 0
      %s46 = sadd.s32 %s45, 1
      %s47 = scalar_select %p44, %s45, %s46
      %p50 = pneg %p44
      %p51 = scmp.eq.s32.totalorder %s23, 1
      %p52 = por %p50, %p51
      %p53 = scmp.ne.s32.totalorder %s45, %s48
      %p54 = scmp.eq.s32.totalorder %s23, 0
      %p55 = por %p53, %p54
      %p56 = scmp.ne.s32.totalorder %s45, %s48
      %p57 = scmp.eq.s32.totalorder %s28, 1
      %p58 = por %p56, %p57
      %p59 = scmp.ne.s32.totalorder %s48, %s49
      %p60 = scmp.eq.s32.totalorder %s28, 0
      %p61 = por %p59, %p60
      %p62 = scmp.ne.s32.totalorder %s48, %s49
      %p63 = scmp.eq.s32.totalorder %s29, 1
      %p64 = por %p62, %p63
      %p66 = scmp.ne.s32.totalorder %s49, %s65
      %p67 = scmp.eq.s32.totalorder %s29, 0
      %p68 = por %p66, %p67
      %s70 = sadd.s32 %s69, 1
      %p73 = scmp.eq.s32.totalorder %s23, 1
      %p74 = scmp.ne.s32.totalorder %s69, %s71
      %p75 = scmp.eq.s32.totalorder %s23, 0
      %p76 = por %p74, %p75
      %p77 = scmp.ne.s32.totalorder %s69, %s71
      %p78 = scmp.eq.s32.totalorder %s28, 1
      %p79 = por %p77, %p78
      %p80 = scmp.ne.s32.totalorder %s71, %s72
      %p81 = scmp.eq.s32.totalorder %s28, 0
      %p82 = por %p80, %p81
      %p83 = scmp.ne.s32.totalorder %s71, %s72
      %p84 = scmp.eq.s32.totalorder %s29, 1
      %p85 = por %p83, %p84
      %p87 = scmp.ne.s32.totalorder %s72, %s86
      %p88 = scmp.eq.s32.totalorder %s29, 0
      %p89 = por %p87, %p88
      %s91 = sadd.s32 %s90, 1
      %p94 = scmp.eq.s32.totalorder %s23, 1
      %p95 = scmp.ne.s32.totalorder %s90, %s92
      %p96 = scmp.eq.s32.totalorder %s23, 0
      %p97 = por %p95, %p96
      %p98 = scmp.ne.s32.totalorder %s90, %s92
      %p99 = scmp.eq.s32.totalorder %s28, 1
      %p100 = por %p98, %p99
      %p101 = scmp.ne.s32.totalorder %s92, %s93
      %p102 = scmp.eq.s32.totalorder %s28, 0
      %p103 = por %p101, %p102
      %p104 = scmp.ne.s32.totalorder %s92, %s93
      %p105 = scmp.eq.s32.totalorder %s29, 1
      %p106 = por %p104, %p105
      %p108 = scmp.ne.s32.totalorder %s93, %s107
      %p109 = scmp.eq.s32.totalorder %s29, 0
      %p110 = por %p108, %p109
      %s112 = sadd.s32 %s111, 1
      %p115 = scmp.eq.s32.totalorder %s23, 1
      %p116 = scmp.ne.s32.totalorder %s111, %s113
      %p117 = scmp.eq.s32.totalorder %s23, 0
      %p118 = por %p116, %p117
      %p119 = scmp.ne.s32.totalorder %s111, %s113
      %p120 = scmp.eq.s32.totalorder %s28, 1
      %p121 = por %p119, %p120
      %p122 = scmp.ne.s32.totalorder %s113, %s114
      %p123 = scmp.eq.s32.totalorder %s28, 0
      %p124 = por %p122, %p123
      %p125 = scmp.ne.s32.totalorder %s113, %s114
      %p126 = scmp.eq.s32.totalorder %s29, 1
      %p127 = por %p125, %p126
      %p129 = scmp.ne.s32.totalorder %s114, %s128
      %p130 = scmp.eq.s32.totalorder %s29, 0
      %p131 = por %p129, %p130
      %s133 = sadd.s32 %s132, 1
      %p136 = scmp.eq.s32.totalorder %s23, 1
      %p137 = scmp.ne.s32.totalorder %s132, %s134
      %p138 = scmp.eq.s32.totalorder %s23, 0
      %p139 = por %p137, %p138
      %p140 = scmp.ne.s32.totalorder %s132, %s134
      %p141 = scmp.eq.s32.totalorder %s28, 1
      %p142 = por %p140, %p141
      %p143 = scmp.ne.s32.totalorder %s134, %s135
      %p144 = scmp.eq.s32.totalorder %s28, 0
      %p145 = por %p143, %p144
      %p146 = scmp.ne.s32.totalorder %s134, %s135
      %p147 = scmp.eq.s32.totalorder %s29, 1
      %p148 = por %p146, %p147
      %p150 = scmp.ne.s32.totalorder %s135, %s149
      %p151 = scmp.eq.s32.totalorder %s29, 0
      %p152 = por %p150, %p151
      %s154 = sadd.s32 %s153, 1
      %p157 = scmp.eq.s32.totalorder %s23, 1
      %p158 = scmp.ne.s32.totalorder %s153, %s155
      %p159 = scmp.eq.s32.totalorder %s23, 0
      %p160 = por %p158, %p159
      %p161 = scmp.ne.s32.totalorder %s153, %s155
      %p162 = scmp.eq.s32.totalorder %s28, 1
      %p163 = por %p161, %p162
      %p164 = scmp.ne.s32.totalorder %s155, %s156
      %p165 = scmp.eq.s32.totalorder %s28, 0
      %p166 = por %p164, %p165
      %p167 = scmp.ne.s32.totalorder %s155, %s156
      %p168 = scmp.eq.s32.totalorder %s29, 1
      %p169 = por %p167, %p168
      %p171 = scmp.ne.s32.totalorder %s156, %s170
      %p172 = scmp.eq.s32.totalorder %s29, 0
      %p173 = por %p171, %p172
      %s174 = ssub.s32 %s31, %s38
      %p175 = scmp.eq.s32.totalorder %s174, 0
      %s177 = sadd.s32 %s176, 1
      %s178 = scalar_select %p175, %s176, %s177
      %p181 = pneg %p175
      %p182 = scmp.eq.s32.totalorder %s23, 1
      %p183 = por %p181, %p182
      %p184 = scmp.ne.s32.totalorder %s176, %s179
      %p185 = scmp.eq.s32.totalorder %s23, 0
      %p186 = por %p184, %p185
      %p187 = scmp.ne.s32.totalorder %s176, %s179
      %p188 = scmp.eq.s32.totalorder %s28, 1
      %p189 = por %p187, %p188
      %p190 = scmp.ne.s32.totalorder %s179, %s180
      %p191 = scmp.eq.s32.totalorder %s28, 0
      %p192 = por %p190, %p191
      %p193 = scmp.ne.s32.totalorder %s179, %s180
      %p194 = scmp.eq.s32.totalorder %s29, 1
      %p195 = por %p193, %p194
      %p197 = scmp.ne.s32.totalorder %s180, %s196
      %p198 = scmp.eq.s32.totalorder %s29, 0
      %p199 = por %p197, %p198
      %s200 = ssub.s32 %s31, %s38
      %p201 = scmp.eq.s32.totalorder %s200, 0
      %s203 = sadd.s32 %s202, 1
      %s204 = scalar_select %p201, %s202, %s203
      %p207 = pneg %p201
      %p208 = scmp.eq.s32.totalorder %s23, 1
      %p209 = por %p207, %p208
      %p210 = scmp.ne.s32.totalorder %s202, %s205
      %p211 = scmp.eq.s32.totalorder %s23, 0
      %p212 = por %p210, %p211
      %p213 = scmp.ne.s32.totalorder %s202, %s205
      %p214 = scmp.eq.s32.totalorder %s28, 1
      %p215 = por %p213, %p214
      %p216 = scmp.ne.s32.totalorder %s205, %s206
      %p217 = scmp.eq.s32.totalorder %s28, 0
      %p218 = por %p216, %p217
      %p219 = scmp.ne.s32.totalorder %s205, %s206
      %p220 = scmp.eq.s32.totalorder %s29, 1
      %p221 = por %p219, %p220
      %p223 = scmp.ne.s32.totalorder %s206, %s222
      %p224 = scmp.eq.s32.totalorder %s29, 0
      %p225 = por %p223, %p224
      %s226 = ssub.s32 %s31, %s38
      %p227 = scmp.eq.s32.totalorder %s226, 0
      %s229 = sadd.s32 %s228, 1
      %s230 = scalar_select %p227, %s228, %s229
      %p233 = pneg %p227
      %p234 = scmp.eq.s32.totalorder %s23, 1
      %p235 = por %p233, %p234
      %p236 = scmp.ne.s32.totalorder %s228, %s231
      %p237 = scmp.eq.s32.totalorder %s23, 0
      %p238 = por %p236, %p237
      %p239 = scmp.ne.s32.totalorder %s228, %s231
      %p240 = scmp.eq.s32.totalorder %s28, 1
      %p241 = por %p239, %p240
      %p242 = scmp.ne.s32.totalorder %s231, %s232
      %p243 = scmp.eq.s32.totalorder %s28, 0
      %p244 = por %p242, %p243
      %p245 = scmp.ne.s32.totalorder %s231, %s232
      %p246 = scmp.eq.s32.totalorder %s29, 1
      %p247 = por %p245, %p246
      %p249 = scmp.ne.s32.totalorder %s232, %s248
      %p250 = scmp.eq.s32.totalorder %s29, 0
      %p251 = por %p249, %p250
      %s253 = sadd.s32 %s252, 1
      %p256 = scmp.eq.s32.totalorder %s23, 1
      %p257 = scmp.ne.s32.totalorder %s252, %s254
      %p258 = scmp.eq.s32.totalorder %s23, 0
      %p259 = por %p257, %p258
      %p260 = scmp.ne.s32.totalorder %s252, %s254
      %p261 = scmp.eq.s32.totalorder %s28, 1
      %p262 = por %p260, %p261
      %p263 = scmp.ne.s32.totalorder %s254, %s255
      %p264 = scmp.eq.s32.totalorder %s28, 0
      %p265 = por %p263, %p264
      %p266 = scmp.ne.s32.totalorder %s254, %s255
      %p267 = scmp.eq.s32.totalorder %s29, 1
      %p268 = por %p266, %p267
      %p270 = scmp.ne.s32.totalorder %s255, %s269
      %p271 = scmp.eq.s32.totalorder %s29, 0
      %p272 = por %p270, %p271
      %s273 = ssub.s32 %s30, %s42
      %p274 = scmp.eq.s32.totalorder %s273, 0
      %s276 = sadd.s32 %s275, 1
      %s277 = scalar_select %p274, %s275, %s276
      %p280 = pneg %p274
      %p281 = scmp.eq.s32.totalorder %s23, 1
      %p282 = por %p280, %p281
      %p283 = scmp.ne.s32.totalorder %s275, %s278
      %p284 = scmp.eq.s32.totalorder %s23, 0
      %p285 = por %p283, %p284
      %p286 = scmp.ne.s32.totalorder %s275, %s278
      %p287 = scmp.eq.s32.totalorder %s28, 1
      %p288 = por %p286, %p287
      %p289 = scmp.ne.s32.totalorder %s278, %s279
      %p290 = scmp.eq.s32.totalorder %s28, 0
      %p291 = por %p289, %p290
      %p292 = scmp.ne.s32.totalorder %s278, %s279
      %p293 = scmp.eq.s32.totalorder %s29, 1
      %p294 = por %p292, %p293
      %p296 = scmp.ne.s32.totalorder %s279, %s295
      %p297 = scmp.eq.s32.totalorder %s29, 0
      %p298 = por %p296, %p297
      %p299 = scmp.le.s32.totalorder 1, %s23
      %p300 = scmp.lt.s32.totalorder %s23, 3
      %p301 = pnand %p299, %p300
      %p302 = pneg %p301
      // Predicated region
      $region9: #{mod_transformer_forward.1} parent=5 // pred_check
        _
      $region10: #{mod_transformer_forward.1} parent=5 // pred_check_branch
        %304 = sbr.rel (%p301) target = $region12
      $region11: #{mod_transformer_forward.1} parent=5 // pred_region
        %s305 = ssub.s32 %s23, 1
        // Predicated region
        $region13: #{mod_transformer_forward.1} parent=11 // pred_check
          %p306 = pneg %p82
        $region14: #{mod_transformer_forward.1} parent=11 // pred_check_branch
          %308 = sbr.rel (%p306) target = $region16
        $region15: #{mod_transformer_forward.1} parent=11 // pred_region
          _
        $region16: #{mod_transformer_forward.1} parent=11 // pred_fallthru
          _
        // Predicated region
        $region17: #{mod_transformer_forward.1} parent=11 // pred_check
          %p309 = pneg %p103
        $region18: #{mod_transformer_forward.1} parent=11 // pred_check_branch
          %311 = sbr.rel (%p309) target = $region20
        $region19: #{mod_transformer_forward.1} parent=11 // pred_region
          _
        $region20: #{mod_transformer_forward.1} parent=11 // pred_fallthru
          _
        // Predicated region
        $region21: #{mod_transformer_forward.1} parent=11 // pred_check
          %p312 = pneg %p124
        $region22: #{mod_transformer_forward.1} parent=11 // pred_check_branch
          %314 = sbr.rel (%p312) target = $region24
        $region23: #{mod_transformer_forward.1} parent=11 // pred_region
          _
        $region24: #{mod_transformer_forward.1} parent=11 // pred_fallthru
          _
        // Predicated region
        $region25: #{mod_transformer_forward.1} parent=11 // pred_check
          %p315 = pneg %p145
        $region26: #{mod_transformer_forward.1} parent=11 // pred_check_branch
          %317 = sbr.rel (%p315) target = $region28
        $region27: #{mod_transformer_forward.1} parent=11 // pred_region
          _
        $region28: #{mod_transformer_forward.1} parent=11 // pred_fallthru
          _
        // Predicated region
        $region29: #{mod_transformer_forward.1} parent=11 // pred_check
          %p318 = pneg %p166
        $region30: #{mod_transformer_forward.1} parent=11 // pred_check_branch
          %320 = sbr.rel (%p318) target = $region32
        $region31: #{mod_transformer_forward.1} parent=11 // pred_region
          _
        $region32: #{mod_transformer_forward.1} parent=11 // pred_fallthru
          _
        // Predicated region
        $region33: #{mod_transformer_forward.1} parent=11 // pred_check
          %p321 = pneg %p192
        $region34: #{mod_transformer_forward.1} parent=11 // pred_check_branch
          %323 = sbr.rel (%p321) target = $region36
        $region35: #{mod_transformer_forward.1} parent=11 // pred_region
          %s324 = smul.u32 4, %s33
          %s326 = ssub.s32 4096, 4096
          %327 = vsyncadd [#allocation8], %s326
          %s328 = smul.addr %s324, 64
          %s329 = scalar_lea.hbm %s6, %s328
          %s330 = sshll.u32 [#allocation7], 4
          %s331 = int_to_ptr.vmem [resolvable:$true] %s330
          %336 = dma.hbm_to_vmem [thread:$0]  %s329, 4096, %s331, [#allocation8], 256, 256, 16
        $region36: #{mod_transformer_forward.1} parent=11 // pred_fallthru
          _
        // Predicated region
        $region37: #{mod_transformer_forward.1} parent=11 // pred_check
          %p337 = pneg %p218
        $region38: #{mod_transformer_forward.1} parent=11 // pred_check_branch
          %339 = sbr.rel (%p337) target = $region40
        $region39: #{mod_transformer_forward.1} parent=11 // pred_region
          %s340 = smul.u32 4, %s33
          %p341 = scmp.lt.s32.totalorder %s340, 3
          %s342 = scalar_select %p341, %s340, 3
          %s343 = scalar_lea.vmem %s7, %s342
          %s344 = smul.u32 4, %s33
        $region40: #{mod_transformer_forward.1} parent=11 // pred_fallthru
          _
        // Predicated region
        $region41: #{mod_transformer_forward.1} parent=11 // pred_check
          %p345 = pneg %p244
        $region42: #{mod_transformer_forward.1} parent=11 // pred_check_branch
          %347 = sbr.rel (%p345) target = $region44
        $region43: #{mod_transformer_forward.1} parent=11 // pred_region
          %s348 = smul.u32 64, %s33
          %s350 = ssub.s32 4096, 4096
          %351 = vsyncadd [#allocation8], %s350
          %s352 = smul.addr %s348, 64
          %s353 = scalar_lea.hbm %s8, %s352
          %s354 = sshll.u32 [#allocation9], 4
          %s355 = int_to_ptr.vmem [resolvable:$true] %s354
          %360 = dma.hbm_to_vmem [thread:$0]  %s353, 4096, %s355, [#allocation8], 64, 64, 4
        $region44: #{mod_transformer_forward.1} parent=11 // pred_fallthru
          _
        // Predicated region
        $region45: #{mod_transformer_forward.1} parent=11 // pred_check
          %p361 = pneg %p265
        $region46: #{mod_transformer_forward.1} parent=11 // pred_check_branch
          %363 = sbr.rel (%p361) target = $region48
        $region47: #{mod_transformer_forward.1} parent=11 // pred_region
          _
        $region48: #{mod_transformer_forward.1} parent=11 // pred_fallthru
          _
      $region12: #{mod_transformer_forward.1} parent=5 // pred_fallthru
        _
      %p364 = scmp.lt.s32.totalorder %s23, 2
      // Predicated region
      $region49: #{mod_transformer_forward.1} parent=5 // pred_check
        %p365 = pneg %p364
      $region50: #{mod_transformer_forward.1} parent=5 // pred_check_branch
        %367 = sbr.rel (%p365) target = $region52
      $region51: #{mod_transformer_forward.1} parent=5 // pred_region
        // Predicated region
        $region53: #{mod_transformer_forward.1} parent=51 // pred_check
          %p368 = pneg %p55
        $region54: #{mod_transformer_forward.1} parent=51 // pred_check_branch
          %370 = sbr.rel (%p368) target = $region56
        $region55: #{mod_transformer_forward.1} parent=51 // pred_region
          %s371 = sand.u32 %s45, 1
          %s372 = scalar_lea.sflag [#allocation5], %s371
          %s373 = sand.u32 %s45, 1
          %s374 = smul.addr %s373, 256
          %s375 = scalar_lea.vmem [#allocation4], %s374
          %s376 = smul.u32 32, %s30
          %s378 = ssub.s32 4096, 4096
          %379 = vsyncadd %s372, %s378
          %s380 = smul.addr %s376, 128
          %s381 = scalar_lea.hbm %s0, %s380
          %s382 = sshll.u32 %s375, 4
          %s383 = int_to_ptr.vmem [resolvable:$true] %s382
          %388 = dma.hbm_to_vmem [thread:$0]  %s381, 4096, %s383, %s372, 128, 128, 8
        $region56: #{mod_transformer_forward.1} parent=51 // pred_fallthru
          _
      $region52: #{mod_transformer_forward.1} parent=5 // pred_fallthru
        _
      %p389 = scmp.le.s32.totalorder 1, %s23
      %p390 = scmp.lt.s32.totalorder %s23, 3
      %p391 = pnand %p389, %p390
      %p392 = pneg %p391
      // Predicated region
      $region57: #{mod_transformer_forward.1} parent=5 // pred_check
        _
      $region58: #{mod_transformer_forward.1} parent=5 // pred_check_branch
        %394 = sbr.rel (%p391) target = $region60
      $region59: #{mod_transformer_forward.1} parent=5 // pred_region
        %s395 = ssub.s32 %s23, 1
        %s396 = sand.u32 %s48, 1
        %s397 = scalar_lea.sflag [#allocation5], %s396
        %s398 = sand.u32 %s48, 1
        %s399 = smul.addr %s398, 256
        %s400 = scalar_lea.vmem [#allocation4], %s399
        // Predicated region
        $region61: #{mod_transformer_forward.1} parent=59 // pred_check
          %p401 = pneg %p61
        $region62: #{mod_transformer_forward.1} parent=59 // pred_check_branch
          %403 = sbr.rel (%p401) target = $region64
        $region63: #{mod_transformer_forward.1} parent=59 // pred_region
          %404 = dma.done %s397, 4096
        $region64: #{mod_transformer_forward.1} parent=59 // pred_fallthru
          _
        // Predicated region
        $region65: #{mod_transformer_forward.1} parent=59 // pred_check
          %p405 = pneg %p192
        $region66: #{mod_transformer_forward.1} parent=59 // pred_check_branch
          %407 = sbr.rel (%p405) target = $region68
        $region67: #{mod_transformer_forward.1} parent=59 // pred_region
          %408 = dma.done [#allocation8], 4096
        $region68: #{mod_transformer_forward.1} parent=59 // pred_fallthru
          _
        // Predicated region
        $region69: #{mod_transformer_forward.1} parent=59 // pred_check
          %p409 = pneg %p244
        $region70: #{mod_transformer_forward.1} parent=59 // pred_check_branch
          %411 = sbr.rel (%p409) target = $region72
        $region71: #{mod_transformer_forward.1} parent=59 // pred_region
          %412 = dma.done [#allocation8], 4096
        $region72: #{mod_transformer_forward.1} parent=59 // pred_fallthru
          _
        %s413 = sand.u32 %s48, 1
        %s414 = scalar_lea.sflag [#allocation5], %s413
        %s415 = sand.u32 %s48, 1
        %s416 = smul.addr %s415, 256
        %s417 = scalar_lea.vmem [#allocation4], %s416
        %p418 = pneg %p61
        %p419 = pneg %p58
        %p420 = pneg %p82
        %p421 = pneg %p79
        %p422 = pneg %p103
        %p423 = pneg %p100
        %p424 = pneg %p124
        %p425 = pneg %p121
        %p426 = pneg %p145
        %p427 = pneg %p142
        %p428 = pneg %p166
        %p429 = pneg %p163
        %p430 = pneg %p192
        %p431 = pneg %p189
        %s432 = smul.u32 4, %s33
        %p433 = scmp.lt.s32.totalorder %s432, 3
        %s434 = scalar_select %p433, %s432, 3
        %s435 = scalar_lea.vmem %s7, %s434
        %p436 = pneg %p218
        %p437 = pneg %p215
        %p438 = pneg %p244
        %p439 = pneg %p241
        %p440 = pneg %p265
        %p441 = pneg %p262
        %p442 = pneg %p291
        %p443 = pneg %p288
        %s444 = sand.u32 %s278, 1
        %s445 = scalar_lea.sflag [#allocation6], %s444
        %s446 = sand.u32 %s278, 1
        %s447 = smul.addr %s446, 256
        %s448 = scalar_lea.vmem [#allocation10], %s447
        %s449 = smul.u32 32, %s32
        %s450 = smul.u32 4, %s33
        %s451 = smul.u32 4, %s33
        %p452 = scmp.lt.s32.totalorder %s451, 3
        %s453 = scalar_select %p452, %s451, 3
        %s454 = scalar_lea.vmem %s7, %s453
        %s455 = smul.u32 4, %s33
        %s456 = smul.u32 64, %s33
        %s457 = smul.u32 32, %s32
        %p459 = scmp.eq.s32.totalorder %s33, 0
        // Predicated region
        $region73: #{mod_transformer_forward.1} parent=59 // pred_check
          %p460 = pneg %p459
        $region74: #{mod_transformer_forward.1} parent=59 // pred_check_branch
          %462 = sbr.rel (%p460) target = $region76
        $region75: #{mod_transformer_forward.1} parent=59 // pred_region
          %v463 = vld [vmem:[%s400] sm:$0xff]
          %v464 = vld [vmem:[%s400 + $0x8] sm:$0xff]
          %v465 = vld [vmem:[%s400 + $0x10] sm:$0xff]
          %v466 = vld [vmem:[%s400 + $0x18] sm:$0xff]
          %v467 = vld [vmem:[%s400 + $0x20] sm:$0xff]
          %v468 = vld [vmem:[%s400 + $0x28] sm:$0xff]
          %v469 = vld [vmem:[%s400 + $0x30] sm:$0xff]
          %v470 = vld [vmem:[%s400 + $0x38] sm:$0xff]
          %v471 = vld [vmem:[%s400 + $0x40] sm:$0xff]
          %v472 = vld [vmem:[%s400 + $0x48] sm:$0xff]
          %v473 = vld [vmem:[%s400 + $0x50] sm:$0xff]
          %v474 = vld [vmem:[%s400 + $0x58] sm:$0xff]
          %v475 = vld [vmem:[%s400 + $0x60] sm:$0xff]
          %v476 = vld [vmem:[%s400 + $0x68] sm:$0xff]
          %v477 = vld [vmem:[%s400 + $0x70] sm:$0xff]
          %v478 = vld [vmem:[%s400 + $0x78] sm:$0xff]
          %v479 = vld [vmem:[%s400 + $0x80] sm:$0xff]
          %v480 = vld [vmem:[%s400 + $0x88] sm:$0xff]
          %v481 = vld [vmem:[%s400 + $0x90] sm:$0xff]
          %v482 = vld [vmem:[%s400 + $0x98] sm:$0xff]
          %v483 = vld [vmem:[%s400 + $0xa0] sm:$0xff]
          %v484 = vld [vmem:[%s400 + $0xa8] sm:$0xff]
          %v485 = vld [vmem:[%s400 + $0xb0] sm:$0xff]
          %v486 = vld [vmem:[%s400 + $0xb8] sm:$0xff]
          %v487 = vld [vmem:[%s400 + $0xc0] sm:$0xff]
          %v488 = vld [vmem:[%s400 + $0xc8] sm:$0xff]
          %v489 = vld [vmem:[%s400 + $0xd0] sm:$0xff]
          %v490 = vld [vmem:[%s400 + $0xd8] sm:$0xff]
          %v491 = vld [vmem:[%s400 + $0xe0] sm:$0xff]
          %v492 = vld [vmem:[%s400 + $0xe8] sm:$0xff]
          %v493 = vld [vmem:[%s400 + $0xf0] sm:$0xff]
          %v494 = vld [vmem:[%s400 + $0xf8] sm:$0xff]
          %495 = vadd.xlane.f32.xlu0 %v463
          %v496 = vpop.xlane.xlu0 %495
          %497 = vadd.xlane.f32.xlu0 %v464
          %v498 = vpop.xlane.xlu0 %497
          %499 = vadd.xlane.f32.xlu0 %v465
          %v500 = vpop.xlane.xlu0 %499
          %501 = vadd.xlane.f32.xlu0 %v466
          %v502 = vpop.xlane.xlu0 %501
          %503 = vadd.xlane.f32.xlu0 %v467
          %v504 = vpop.xlane.xlu0 %503
          %505 = vadd.xlane.f32.xlu0 %v468
          %v506 = vpop.xlane.xlu0 %505
          %507 = vadd.xlane.f32.xlu0 %v469
          %v508 = vpop.xlane.xlu0 %507
          %509 = vadd.xlane.f32.xlu0 %v470
          %v510 = vpop.xlane.xlu0 %509
          %511 = vadd.xlane.f32.xlu0 %v471
          %v512 = vpop.xlane.xlu0 %511
          %513 = vadd.xlane.f32.xlu0 %v472
          %v514 = vpop.xlane.xlu0 %513
          %515 = vadd.xlane.f32.xlu0 %v473
          %v516 = vpop.xlane.xlu0 %515
          %517 = vadd.xlane.f32.xlu0 %v474
          %v518 = vpop.xlane.xlu0 %517
          %519 = vadd.xlane.f32.xlu0 %v475
          %v520 = vpop.xlane.xlu0 %519
          %521 = vadd.xlane.f32.xlu0 %v476
          %v522 = vpop.xlane.xlu0 %521
          %523 = vadd.xlane.f32.xlu0 %v477
          %v524 = vpop.xlane.xlu0 %523
          %525 = vadd.xlane.f32.xlu0 %v478
          %v526 = vpop.xlane.xlu0 %525
          %527 = vadd.xlane.f32.xlu0 %v479
          %v528 = vpop.xlane.xlu0 %527
          %529 = vadd.xlane.f32.xlu0 %v480
          %v530 = vpop.xlane.xlu0 %529
          %531 = vadd.xlane.f32.xlu0 %v481
          %v532 = vpop.xlane.xlu0 %531
          %533 = vadd.xlane.f32.xlu0 %v482
          %v534 = vpop.xlane.xlu0 %533
          %535 = vadd.xlane.f32.xlu0 %v483
          %v536 = vpop.xlane.xlu0 %535
          %537 = vadd.xlane.f32.xlu0 %v484
          %v538 = vpop.xlane.xlu0 %537
          %539 = vadd.xlane.f32.xlu0 %v485
          %v540 = vpop.xlane.xlu0 %539
          %541 = vadd.xlane.f32.xlu0 %v486
          %v542 = vpop.xlane.xlu0 %541
          %543 = vadd.xlane.f32.xlu0 %v487
          %v544 = vpop.xlane.xlu0 %543
          %545 = vadd.xlane.f32.xlu0 %v488
          %v546 = vpop.xlane.xlu0 %545
          %547 = vadd.xlane.f32.xlu0 %v489
          %v548 = vpop.xlane.xlu0 %547
          %549 = vadd.xlane.f32.xlu0 %v490
          %v550 = vpop.xlane.xlu0 %549
          %551 = vadd.xlane.f32.xlu0 %v491
          %v552 = vpop.xlane.xlu0 %551
          %553 = vadd.xlane.f32.xlu0 %v492
          %v554 = vpop.xlane.xlu0 %553
          %555 = vadd.xlane.f32.xlu0 %v493
          %v556 = vpop.xlane.xlu0 %555
          %557 = vadd.xlane.f32.xlu0 %v494
          %v558 = vpop.xlane.xlu0 %557
          %v559 = vmul.f32 %v463, %v463
          %v560 = vmul.f32 %v464, %v464
          %v561 = vmul.f32 %v465, %v465
          %v562 = vmul.f32 %v466, %v466
          %v563 = vmul.f32 %v467, %v467
          %v564 = vmul.f32 %v468, %v468
          %v565 = vmul.f32 %v469, %v469
          %v566 = vmul.f32 %v470, %v470
          %v567 = vmul.f32 %v471, %v471
          %v568 = vmul.f32 %v472, %v472
          %v569 = vmul.f32 %v473, %v473
          %v570 = vmul.f32 %v474, %v474
          %v571 = vmul.f32 %v475, %v475
          %v572 = vmul.f32 %v476, %v476
          %v573 = vmul.f32 %v477, %v477
          %v574 = vmul.f32 %v478, %v478
          %v575 = vmul.f32 %v479, %v479
          %v576 = vmul.f32 %v480, %v480
          %v577 = vmul.f32 %v481, %v481
          %v578 = vmul.f32 %v482, %v482
          %v579 = vmul.f32 %v483, %v483
          %v580 = vmul.f32 %v484, %v484
          %v581 = vmul.f32 %v485, %v485
          %v582 = vmul.f32 %v486, %v486
          %v583 = vmul.f32 %v487, %v487
          %v584 = vmul.f32 %v488, %v488
          %v585 = vmul.f32 %v489, %v489
          %v586 = vmul.f32 %v490, %v490
          %v587 = vmul.f32 %v491, %v491
          %v588 = vmul.f32 %v492, %v492
          %v589 = vmul.f32 %v493, %v493
          %v590 = vmul.f32 %v494, %v494
          %591 = vadd.xlane.f32.xlu0 %v559
          %v592 = vpop.xlane.xlu0 %591
          %593 = vadd.xlane.f32.xlu0 %v560
          %v594 = vpop.xlane.xlu0 %593
          %595 = vadd.xlane.f32.xlu0 %v561
          %v596 = vpop.xlane.xlu0 %595
          %597 = vadd.xlane.f32.xlu0 %v562
          %v598 = vpop.xlane.xlu0 %597
          %599 = vadd.xlane.f32.xlu0 %v563
          %v600 = vpop.xlane.xlu0 %599
          %601 = vadd.xlane.f32.xlu0 %v564
          %v602 = vpop.xlane.xlu0 %601
          %603 = vadd.xlane.f32.xlu0 %v565
          %v604 = vpop.xlane.xlu0 %603
          %605 = vadd.xlane.f32.xlu0 %v566
          %v606 = vpop.xlane.xlu0 %605
          %607 = vadd.xlane.f32.xlu0 %v567
          %v608 = vpop.xlane.xlu0 %607
          %609 = vadd.xlane.f32.xlu0 %v568
          %v610 = vpop.xlane.xlu0 %609
          %611 = vadd.xlane.f32.xlu0 %v569
          %v612 = vpop.xlane.xlu0 %611
          %613 = vadd.xlane.f32.xlu0 %v570
          %v614 = vpop.xlane.xlu0 %613
          %615 = vadd.xlane.f32.xlu0 %v571
          %v616 = vpop.xlane.xlu0 %615
          %617 = vadd.xlane.f32.xlu0 %v572
          %v618 = vpop.xlane.xlu0 %617
          %619 = vadd.xlane.f32.xlu0 %v573
          %v620 = vpop.xlane.xlu0 %619
          %621 = vadd.xlane.f32.xlu0 %v574
          %v622 = vpop.xlane.xlu0 %621
          %623 = vadd.xlane.f32.xlu0 %v575
          %v624 = vpop.xlane.xlu0 %623
          %625 = vadd.xlane.f32.xlu0 %v576
          %v626 = vpop.xlane.xlu0 %625
          %627 = vadd.xlane.f32.xlu0 %v577
          %v628 = vpop.xlane.xlu0 %627
          %629 = vadd.xlane.f32.xlu0 %v578
          %v630 = vpop.xlane.xlu0 %629
          %631 = vadd.xlane.f32.xlu0 %v579
          %v632 = vpop.xlane.xlu0 %631
          %633 = vadd.xlane.f32.xlu0 %v580
          %v634 = vpop.xlane.xlu0 %633
          %635 = vadd.xlane.f32.xlu0 %v581
          %v636 = vpop.xlane.xlu0 %635
          %637 = vadd.xlane.f32.xlu0 %v582
          %v638 = vpop.xlane.xlu0 %637
          %639 = vadd.xlane.f32.xlu0 %v583
          %v640 = vpop.xlane.xlu0 %639
          %641 = vadd.xlane.f32.xlu0 %v584
          %v642 = vpop.xlane.xlu0 %641
          %643 = vadd.xlane.f32.xlu0 %v585
          %v644 = vpop.xlane.xlu0 %643
          %645 = vadd.xlane.f32.xlu0 %v586
          %v646 = vpop.xlane.xlu0 %645
          %647 = vadd.xlane.f32.xlu0 %v587
          %v648 = vpop.xlane.xlu0 %647
          %649 = vadd.xlane.f32.xlu0 %v588
          %v650 = vpop.xlane.xlu0 %649
          %651 = vadd.xlane.f32.xlu0 %v589
          %v652 = vpop.xlane.xlu0 %651
          %653 = vadd.xlane.f32.xlu0 %v590
          %v654 = vpop.xlane.xlu0 %653
          %v655 = vmul.f32 %v496, 0.0078125
          %v656 = vmul.f32 %v498, 0.0078125
          %v657 = vmul.f32 %v500, 0.0078125
          %v658 = vmul.f32 %v502, 0.0078125
          %v659 = vmul.f32 %v504, 0.0078125
          %v660 = vmul.f32 %v506, 0.0078125
          %v661 = vmul.f32 %v508, 0.0078125
          %v662 = vmul.f32 %v510, 0.0078125
          %v663 = vmul.f32 %v512, 0.0078125
          %v664 = vmul.f32 %v514, 0.0078125
          %v665 = vmul.f32 %v516, 0.0078125
          %v666 = vmul.f32 %v518, 0.0078125
          %v667 = vmul.f32 %v520, 0.0078125
          %v668 = vmul.f32 %v522, 0.0078125
          %v669 = vmul.f32 %v524, 0.0078125
          %v670 = vmul.f32 %v526, 0.0078125
          %v671 = vmul.f32 %v528, 0.0078125
          %v672 = vmul.f32 %v530, 0.0078125
          %v673 = vmul.f32 %v532, 0.0078125
          %v674 = vmul.f32 %v534, 0.0078125
          %v675 = vmul.f32 %v536, 0.0078125
          %v676 = vmul.f32 %v538, 0.0078125
          %v677 = vmul.f32 %v540, 0.0078125
          %v678 = vmul.f32 %v542, 0.0078125
          %v679 = vmul.f32 %v544, 0.0078125
          %v680 = vmul.f32 %v546, 0.0078125
          %v681 = vmul.f32 %v548, 0.0078125
          %v682 = vmul.f32 %v550, 0.0078125
          %v683 = vmul.f32 %v552, 0.0078125
          %v684 = vmul.f32 %v554, 0.0078125
          %v685 = vmul.f32 %v556, 0.0078125
          %v686 = vmul.f32 %v558, 0.0078125
          %v687 = vmul.f32 %v592, 0.0078125
          %v688 = vmul.f32 %v594, 0.0078125
          %v689 = vmul.f32 %v596, 0.0078125
          %v690 = vmul.f32 %v598, 0.0078125
          %v691 = vmul.f32 %v600, 0.0078125
          %v692 = vmul.f32 %v602, 0.0078125
          %v693 = vmul.f32 %v604, 0.0078125
          %v694 = vmul.f32 %v606, 0.0078125
          %v695 = vmul.f32 %v608, 0.0078125
          %v696 = vmul.f32 %v610, 0.0078125
          %v697 = vmul.f32 %v612, 0.0078125
          %v698 = vmul.f32 %v614, 0.0078125
          %v699 = vmul.f32 %v616, 0.0078125
          %v700 = vmul.f32 %v618, 0.0078125
          %v701 = vmul.f32 %v620, 0.0078125
          %v702 = vmul.f32 %v622, 0.0078125
          %v703 = vmul.f32 %v624, 0.0078125
          %v704 = vmul.f32 %v626, 0.0078125
          %v705 = vmul.f32 %v628, 0.0078125
          %v706 = vmul.f32 %v630, 0.0078125
          %v707 = vmul.f32 %v632, 0.0078125
          %v708 = vmul.f32 %v634, 0.0078125
          %v709 = vmul.f32 %v636, 0.0078125
          %v710 = vmul.f32 %v638, 0.0078125
          %v711 = vmul.f32 %v640, 0.0078125
          %v712 = vmul.f32 %v642, 0.0078125
          %v713 = vmul.f32 %v644, 0.0078125
          %v714 = vmul.f32 %v646, 0.0078125
          %v715 = vmul.f32 %v648, 0.0078125
          %v716 = vmul.f32 %v650, 0.0078125
          %v717 = vmul.f32 %v652, 0.0078125
          %v718 = vmul.f32 %v654, 0.0078125
          %v719 = vmul.f32 %v655, %v655
          %v720 = vmul.f32 %v656, %v656
          %v721 = vmul.f32 %v657, %v657
          %v722 = vmul.f32 %v658, %v658
          %v723 = vmul.f32 %v659, %v659
          %v724 = vmul.f32 %v660, %v660
          %v725 = vmul.f32 %v661, %v661
          %v726 = vmul.f32 %v662, %v662
          %v727 = vmul.f32 %v663, %v663
          %v728 = vmul.f32 %v664, %v664
          %v729 = vmul.f32 %v665, %v665
          %v730 = vmul.f32 %v666, %v666
          %v731 = vmul.f32 %v667, %v667
          %v732 = vmul.f32 %v668, %v668
          %v733 = vmul.f32 %v669, %v669
          %v734 = vmul.f32 %v670, %v670
          %v735 = vmul.f32 %v671, %v671
          %v736 = vmul.f32 %v672, %v672
          %v737 = vmul.f32 %v673, %v673
          %v738 = vmul.f32 %v674, %v674
          %v739 = vmul.f32 %v675, %v675
          %v740 = vmul.f32 %v676, %v676
          %v741 = vmul.f32 %v677, %v677
          %v742 = vmul.f32 %v678, %v678
          %v743 = vmul.f32 %v679, %v679
          %v744 = vmul.f32 %v680, %v680
          %v745 = vmul.f32 %v681, %v681
          %v746 = vmul.f32 %v682, %v682
          %v747 = vmul.f32 %v683, %v683
          %v748 = vmul.f32 %v684, %v684
          %v749 = vmul.f32 %v685, %v685
          %v750 = vmul.f32 %v686, %v686
          %v751 = vsub.f32 %v687, %v719
          %v752 = vsub.f32 %v688, %v720
          %v753 = vsub.f32 %v689, %v721
          %v754 = vsub.f32 %v690, %v722
          %v755 = vsub.f32 %v691, %v723
          %v756 = vsub.f32 %v692, %v724
          %v757 = vsub.f32 %v693, %v725
          %v758 = vsub.f32 %v694, %v726
          %v759 = vsub.f32 %v695, %v727
          %v760 = vsub.f32 %v696, %v728
          %v761 = vsub.f32 %v697, %v729
          %v762 = vsub.f32 %v698, %v730
          %v763 = vsub.f32 %v699, %v731
          %v764 = vsub.f32 %v700, %v732
          %v765 = vsub.f32 %v701, %v733
          %v766 = vsub.f32 %v702, %v734
          %v767 = vsub.f32 %v703, %v735
          %v768 = vsub.f32 %v704, %v736
          %v769 = vsub.f32 %v705, %v737
          %v770 = vsub.f32 %v706, %v738
          %v771 = vsub.f32 %v707, %v739
          %v772 = vsub.f32 %v708, %v740
          %v773 = vsub.f32 %v709, %v741
          %v774 = vsub.f32 %v710, %v742
          %v775 = vsub.f32 %v711, %v743
          %v776 = vsub.f32 %v712, %v744
          %v777 = vsub.f32 %v713, %v745
          %v778 = vsub.f32 %v714, %v746
          %v779 = vsub.f32 %v715, %v747
          %v780 = vsub.f32 %v716, %v748
          %v781 = vsub.f32 %v717, %v749
          %v782 = vsub.f32 %v718, %v750
          %v783 = vsub.f32 %v463, %v655
          %v784 = vsub.f32 %v464, %v656
          %v785 = vsub.f32 %v465, %v657
          %v786 = vsub.f32 %v466, %v658
          %v787 = vsub.f32 %v467, %v659
          %v788 = vsub.f32 %v468, %v660
          %v789 = vsub.f32 %v469, %v661
          %v790 = vsub.f32 %v470, %v662
          %v791 = vsub.f32 %v471, %v663
          %v792 = vsub.f32 %v472, %v664
          %v793 = vsub.f32 %v473, %v665
          %v794 = vsub.f32 %v474, %v666
          %v795 = vsub.f32 %v475, %v667
          %v796 = vsub.f32 %v476, %v668
          %v797 = vsub.f32 %v477, %v669
          %v798 = vsub.f32 %v478, %v670
          %v799 = vsub.f32 %v479, %v671
          %v800 = vsub.f32 %v480, %v672
          %v801 = vsub.f32 %v481, %v673
          %v802 = vsub.f32 %v482, %v674
          %v803 = vsub.f32 %v483, %v675
          %v804 = vsub.f32 %v484, %v676
          %v805 = vsub.f32 %v485, %v677
          %v806 = vsub.f32 %v486, %v678
          %v807 = vsub.f32 %v487, %v679
          %v808 = vsub.f32 %v488, %v680
          %v809 = vsub.f32 %v489, %v681
          %v810 = vsub.f32 %v490, %v682
          %v811 = vsub.f32 %v491, %v683
          %v812 = vsub.f32 %v492, %v684
          %v813 = vsub.f32 %v493, %v685
          %v814 = vsub.f32 %v494, %v686
          %v815 = vadd.f32 %v751, 1e-05
          %v816 = vadd.f32 %v752, 1e-05
          %v817 = vadd.f32 %v753, 1e-05
          %v818 = vadd.f32 %v754, 1e-05
          %v819 = vadd.f32 %v755, 1e-05
          %v820 = vadd.f32 %v756, 1e-05
          %v821 = vadd.f32 %v757, 1e-05
          %v822 = vadd.f32 %v758, 1e-05
          %v823 = vadd.f32 %v759, 1e-05
          %v824 = vadd.f32 %v760, 1e-05
          %v825 = vadd.f32 %v761, 1e-05
          %v826 = vadd.f32 %v762, 1e-05
          %v827 = vadd.f32 %v763, 1e-05
          %v828 = vadd.f32 %v764, 1e-05
          %v829 = vadd.f32 %v765, 1e-05
          %v830 = vadd.f32 %v766, 1e-05
          %v831 = vadd.f32 %v767, 1e-05
          %v832 = vadd.f32 %v768, 1e-05
          %v833 = vadd.f32 %v769, 1e-05
          %v834 = vadd.f32 %v770, 1e-05
          %v835 = vadd.f32 %v771, 1e-05
          %v836 = vadd.f32 %v772, 1e-05
          %v837 = vadd.f32 %v773, 1e-05
          %v838 = vadd.f32 %v774, 1e-05
          %v839 = vadd.f32 %v775, 1e-05
          %v840 = vadd.f32 %v776, 1e-05
          %v841 = vadd.f32 %v777, 1e-05
          %v842 = vadd.f32 %v778, 1e-05
          %v843 = vadd.f32 %v779, 1e-05
          %v844 = vadd.f32 %v780, 1e-05
          %v845 = vadd.f32 %v781, 1e-05
          %v846 = vadd.f32 %v782, 1e-05
          %v847 = vrsqrt.pop %v815
          %v848 = vrsqrt.pop %v816
          %v849 = vrsqrt.pop %v817
          %v850 = vrsqrt.pop %v818
          %v851 = vrsqrt.pop %v819
          %v852 = vrsqrt.pop %v820
          %v853 = vrsqrt.pop %v821
          %v854 = vrsqrt.pop %v822
          %v855 = vrsqrt.pop %v823
          %v856 = vrsqrt.pop %v824
          %v857 = vrsqrt.pop %v825
          %v858 = vrsqrt.pop %v826
          %v859 = vrsqrt.pop %v827
          %v860 = vrsqrt.pop %v828
          %v861 = vrsqrt.pop %v829
          %v862 = vrsqrt.pop %v830
          %v863 = vrsqrt.pop %v831
          %v864 = vrsqrt.pop %v832
          %v865 = vrsqrt.pop %v833
          %v866 = vrsqrt.pop %v834
          %v867 = vrsqrt.pop %v835
          %v868 = vrsqrt.pop %v836
          %v869 = vrsqrt.pop %v837
          %v870 = vrsqrt.pop %v838
          %v871 = vrsqrt.pop %v839
          %v872 = vrsqrt.pop %v840
          %v873 = vrsqrt.pop %v841
          %v874 = vrsqrt.pop %v842
          %v875 = vrsqrt.pop %v843
          %v876 = vrsqrt.pop %v844
          %v877 = vrsqrt.pop %v845
          %v878 = vrsqrt.pop %v846
          %v879 = vmul.f32 %v783, %v847
          %v880 = vmul.f32 %v784, %v848
          %v881 = vmul.f32 %v785, %v849
          %v882 = vmul.f32 %v786, %v850
          %v883 = vmul.f32 %v787, %v851
          %v884 = vmul.f32 %v788, %v852
          %v885 = vmul.f32 %v789, %v853
          %v886 = vmul.f32 %v790, %v854
          %v887 = vmul.f32 %v791, %v855
          %v888 = vmul.f32 %v792, %v856
          %v889 = vmul.f32 %v793, %v857
          %v890 = vmul.f32 %v794, %v858
          %v891 = vmul.f32 %v795, %v859
          %v892 = vmul.f32 %v796, %v860
          %v893 = vmul.f32 %v797, %v861
          %v894 = vmul.f32 %v798, %v862
          %v895 = vmul.f32 %v799, %v863
          %v896 = vmul.f32 %v800, %v864
          %v897 = vmul.f32 %v801, %v865
          %v898 = vmul.f32 %v802, %v866
          %v899 = vmul.f32 %v803, %v867
          %v900 = vmul.f32 %v804, %v868
          %v901 = vmul.f32 %v805, %v869
          %v902 = vmul.f32 %v806, %v870
          %v903 = vmul.f32 %v807, %v871
          %v904 = vmul.f32 %v808, %v872
          %v905 = vmul.f32 %v809, %v873
          %v906 = vmul.f32 %v810, %v874
          %v907 = vmul.f32 %v811, %v875
          %v908 = vmul.f32 %v812, %v876
          %v909 = vmul.f32 %v813, %v877
          %v910 = vmul.f32 %v814, %v878
          %v911 = vld [vmem:[%s4] sm:$0x1]
          %v913 = vlaneseq
          %v914 = vshrl.u32 %v913, 7
          %v915 = vsub.s32 0, %v914
          %v916 = vrot.slane %v911, %v915
          %v918 = vmul.f32 %v879, %v916
          %v919 = vmul.f32 %v880, %v916
          %v920 = vmul.f32 %v881, %v916
          %v921 = vmul.f32 %v882, %v916
          %v922 = vmul.f32 %v883, %v916
          %v923 = vmul.f32 %v884, %v916
          %v924 = vmul.f32 %v885, %v916
          %v925 = vmul.f32 %v886, %v916
          %v926 = vmul.f32 %v887, %v916
          %v927 = vmul.f32 %v888, %v916
          %v928 = vmul.f32 %v889, %v916
          %v929 = vmul.f32 %v890, %v916
          %v930 = vmul.f32 %v891, %v916
          %v931 = vmul.f32 %v892, %v916
          %v932 = vmul.f32 %v893, %v916
          %v933 = vmul.f32 %v894, %v916
          %v934 = vmul.f32 %v895, %v916
          %v935 = vmul.f32 %v896, %v916
          %v936 = vmul.f32 %v897, %v916
          %v937 = vmul.f32 %v898, %v916
          %v938 = vmul.f32 %v899, %v916
          %v939 = vmul.f32 %v900, %v916
          %v940 = vmul.f32 %v901, %v916
          %v941 = vmul.f32 %v902, %v916
          %v942 = vmul.f32 %v903, %v916
          %v943 = vmul.f32 %v904, %v916
          %v944 = vmul.f32 %v905, %v916
          %v945 = vmul.f32 %v906, %v916
          %v946 = vmul.f32 %v907, %v916
          %v947 = vmul.f32 %v908, %v916
          %v948 = vmul.f32 %v909, %v916
          %v949 = vmul.f32 %v910, %v916
          %v950 = vld [vmem:[%s5] sm:$0x1]
          %v952 = vlaneseq
          %v953 = vshrl.u32 %v952, 7
          %v954 = vsub.s32 0, %v953
          %v955 = vrot.slane %v950, %v954
          %v957 = vadd.f32 %v918, %v955
          %v958 = vadd.f32 %v919, %v955
          %v959 = vadd.f32 %v920, %v955
          %v960 = vadd.f32 %v921, %v955
          %v961 = vadd.f32 %v922, %v955
          %v962 = vadd.f32 %v923, %v955
          %v963 = vadd.f32 %v924, %v955
          %v964 = vadd.f32 %v925, %v955
          %v965 = vadd.f32 %v926, %v955
          %v966 = vadd.f32 %v927, %v955
          %v967 = vadd.f32 %v928, %v955
          %v968 = vadd.f32 %v929, %v955
          %v969 = vadd.f32 %v930, %v955
          %v970 = vadd.f32 %v931, %v955
          %v971 = vadd.f32 %v932, %v955
          %v972 = vadd.f32 %v933, %v955
          %v973 = vadd.f32 %v934, %v955
          %v974 = vadd.f32 %v935, %v955
          %v975 = vadd.f32 %v936, %v955
          %v976 = vadd.f32 %v937, %v955
          %v977 = vadd.f32 %v938, %v955
          %v978 = vadd.f32 %v939, %v955
          %v979 = vadd.f32 %v940, %v955
          %v980 = vadd.f32 %v941, %v955
          %v981 = vadd.f32 %v942, %v955
          %v982 = vadd.f32 %v943, %v955
          %v983 = vadd.f32 %v944, %v955
          %v984 = vadd.f32 %v945, %v955
          %v985 = vadd.f32 %v946, %v955
          %v986 = vadd.f32 %v947, %v955
          %v987 = vadd.f32 %v948, %v955
          %v988 = vadd.f32 %v949, %v955
          %v989 = vpack.c.bf16 %v958, %v957
          %v990 = vpack.c.bf16 %v960, %v959
          %v991 = vpack.c.bf16 %v962, %v961
          %v992 = vpack.c.bf16 %v964, %v963
          %v993 = vpack.c.bf16 %v966, %v965
          %v994 = vpack.c.bf16 %v968, %v967
          %v995 = vpack.c.bf16 %v970, %v969
          %v996 = vpack.c.bf16 %v972, %v971
          %v997 = vpack.c.bf16 %v974, %v973
          %v998 = vpack.c.bf16 %v976, %v975
          %v999 = vpack.c.bf16 %v978, %v977
          %v1000 = vpack.c.bf16 %v980, %v979
          %v1001 = vpack.c.bf16 %v982, %v981
          %v1002 = vpack.c.bf16 %v984, %v983
          %v1003 = vpack.c.bf16 %v986, %v985
          %v1004 = vpack.c.bf16 %v988, %v987
          %1005 = vst [vmem:[#allocation2] sm:$0xff] %v989
          %1006 = vst [vmem:[#allocation2 + $0x8] sm:$0xff] %v990
          %1007 = vst [vmem:[#allocation2 + $0x10] sm:$0xff] %v991
          %1008 = vst [vmem:[#allocation2 + $0x18] sm:$0xff] %v992
          %1009 = vst [vmem:[#allocation2 + $0x20] sm:$0xff] %v993
          %1010 = vst [vmem:[#allocation2 + $0x28] sm:$0xff] %v994
          %1011 = vst [vmem:[#allocation2 + $0x30] sm:$0xff] %v995
          %1012 = vst [vmem:[#allocation2 + $0x38] sm:$0xff] %v996
          %1013 = vst [vmem:[#allocation2 + $0x40] sm:$0xff] %v997
          %1014 = vst [vmem:[#allocation2 + $0x48] sm:$0xff] %v998
          %1015 = vst [vmem:[#allocation2 + $0x50] sm:$0xff] %v999
          %1016 = vst [vmem:[#allocation2 + $0x58] sm:$0xff] %v1000
          %1017 = vst [vmem:[#allocation2 + $0x60] sm:$0xff] %v1001
          %1018 = vst [vmem:[#allocation2 + $0x68] sm:$0xff] %v1002
          %1019 = vst [vmem:[#allocation2 + $0x70] sm:$0xff] %v1003
          %1020 = vst [vmem:[#allocation2 + $0x78] sm:$0xff] %v1004
          %1021 = vst [vmem:[#allocation3] sm:$0xff] 0.0
          %1022 = vst [vmem:[#allocation3 + $0x8] sm:$0xff] 0.0
          %1023 = vst [vmem:[#allocation3 + $0x10] sm:$0xff] 0.0
          %1024 = vst [vmem:[#allocation3 + $0x18] sm:$0xff] 0.0
          %1025 = vst [vmem:[#allocation3 + $0x20] sm:$0xff] 0.0
          %1026 = vst [vmem:[#allocation3 + $0x28] sm:$0xff] 0.0
          %1027 = vst [vmem:[#allocation3 + $0x30] sm:$0xff] 0.0
          %1028 = vst [vmem:[#allocation3 + $0x38] sm:$0xff] 0.0
          %1029 = vst [vmem:[#allocation3 + $0x40] sm:$0xff] 0.0
          %1030 = vst [vmem:[#allocation3 + $0x48] sm:$0xff] 0.0
          %1031 = vst [vmem:[#allocation3 + $0x50] sm:$0xff] 0.0
          %1032 = vst [vmem:[#allocation3 + $0x58] sm:$0xff] 0.0
          %1033 = vst [vmem:[#allocation3 + $0x60] sm:$0xff] 0.0
          %1034 = vst [vmem:[#allocation3 + $0x68] sm:$0xff] 0.0
          %1035 = vst [vmem:[#allocation3 + $0x70] sm:$0xff] 0.0
          %1036 = vst [vmem:[#allocation3 + $0x78] sm:$0xff] 0.0
          %1037 = vst [vmem:[#allocation3 + $0x80] sm:$0xff] 0.0
          %1038 = vst [vmem:[#allocation3 + $0x88] sm:$0xff] 0.0
          %1039 = vst [vmem:[#allocation3 + $0x90] sm:$0xff] 0.0
          %1040 = vst [vmem:[#allocation3 + $0x98] sm:$0xff] 0.0
          %1041 = vst [vmem:[#allocation3 + $0xa0] sm:$0xff] 0.0
          %1042 = vst [vmem:[#allocation3 + $0xa8] sm:$0xff] 0.0
          %1043 = vst [vmem:[#allocation3 + $0xb0] sm:$0xff] 0.0
          %1044 = vst [vmem:[#allocation3 + $0xb8] sm:$0xff] 0.0
          %1045 = vst [vmem:[#allocation3 + $0xc0] sm:$0xff] 0.0
          %1046 = vst [vmem:[#allocation3 + $0xc8] sm:$0xff] 0.0
          %1047 = vst [vmem:[#allocation3 + $0xd0] sm:$0xff] 0.0
          %1048 = vst [vmem:[#allocation3 + $0xd8] sm:$0xff] 0.0
          %1049 = vst [vmem:[#allocation3 + $0xe0] sm:$0xff] 0.0
          %1050 = vst [vmem:[#allocation3 + $0xe8] sm:$0xff] 0.0
          %1051 = vst [vmem:[#allocation3 + $0xf0] sm:$0xff] 0.0
          %1052 = vst [vmem:[#allocation3 + $0xf8] sm:$0xff] 0.0
        $region76: #{mod_transformer_forward.1} parent=59 // pred_fallthru
          _
        %v1053 = vld [vmem:[#allocation2] sm:$0xff]
        %v1054 = vld [vmem:[#allocation2 + $0x8] sm:$0xff]
        %v1055 = vld [vmem:[#allocation2 + $0x10] sm:$0xff]
        %v1056 = vld [vmem:[#allocation2 + $0x18] sm:$0xff]
        %v1057 = vld [vmem:[#allocation2 + $0x20] sm:$0xff]
        %v1058 = vld [vmem:[#allocation2 + $0x28] sm:$0xff]
        %v1059 = vld [vmem:[#allocation2 + $0x30] sm:$0xff]
        %v1060 = vld [vmem:[#allocation2 + $0x38] sm:$0xff]
        %v1061 = vld [vmem:[#allocation2 + $0x40] sm:$0xff]
        %v1062 = vld [vmem:[#allocation2 + $0x48] sm:$0xff]
        %v1063 = vld [vmem:[#allocation2 + $0x50] sm:$0xff]
        %v1064 = vld [vmem:[#allocation2 + $0x58] sm:$0xff]
        %v1065 = vld [vmem:[#allocation2 + $0x60] sm:$0xff]
        %v1066 = vld [vmem:[#allocation2 + $0x68] sm:$0xff]
        %v1067 = vld [vmem:[#allocation2 + $0x70] sm:$0xff]
        %v1068 = vld [vmem:[#allocation2 + $0x78] sm:$0xff]
        %v1069 = vld [vmem:[#allocation7] sm:$0xff]
        %v1070 = vld [vmem:[#allocation7 + $0x8] sm:$0xff]
        %v1071 = vld [vmem:[#allocation7 + $0x10] sm:$0xff]
        %v1072 = vld [vmem:[#allocation7 + $0x18] sm:$0xff]
        %v1073 = vld [vmem:[#allocation7 + $0x20] sm:$0xff]
        %v1074 = vld [vmem:[#allocation7 + $0x28] sm:$0xff]
        %v1075 = vld [vmem:[#allocation7 + $0x30] sm:$0xff]
        %v1076 = vld [vmem:[#allocation7 + $0x38] sm:$0xff]
        %v1077 = vld [vmem:[#allocation7 + $0x40] sm:$0xff]
        %v1078 = vld [vmem:[#allocation7 + $0x48] sm:$0xff]
        %v1079 = vld [vmem:[#allocation7 + $0x50] sm:$0xff]
        %v1080 = vld [vmem:[#allocation7 + $0x58] sm:$0xff]
        %v1081 = vld [vmem:[#allocation7 + $0x60] sm:$0xff]
        %v1082 = vld [vmem:[#allocation7 + $0x68] sm:$0xff]
        %v1083 = vld [vmem:[#allocation7 + $0x70] sm:$0xff]
        %v1084 = vld [vmem:[#allocation7 + $0x78] sm:$0xff]
        %v1085 = vld [vmem:[#allocation7 + $0x80] sm:$0xff]
        %v1086 = vld [vmem:[#allocation7 + $0x88] sm:$0xff]
        %v1087 = vld [vmem:[#allocation7 + $0x90] sm:$0xff]
        %v1088 = vld [vmem:[#allocation7 + $0x98] sm:$0xff]
        %v1089 = vld [vmem:[#allocation7 + $0xa0] sm:$0xff]
        %v1090 = vld [vmem:[#allocation7 + $0xa8] sm:$0xff]
        %v1091 = vld [vmem:[#allocation7 + $0xb0] sm:$0xff]
        %v1092 = vld [vmem:[#allocation7 + $0xb8] sm:$0xff]
        %v1093 = vld [vmem:[#allocation7 + $0xc0] sm:$0xff]
        %v1094 = vld [vmem:[#allocation7 + $0xc8] sm:$0xff]
        %v1095 = vld [vmem:[#allocation7 + $0xd0] sm:$0xff]
        %v1096 = vld [vmem:[#allocation7 + $0xd8] sm:$0xff]
        %v1097 = vld [vmem:[#allocation7 + $0xe0] sm:$0xff]
        %v1098 = vld [vmem:[#allocation7 + $0xe8] sm:$0xff]
        %v1099 = vld [vmem:[#allocation7 + $0xf0] sm:$0xff]
        %v1100 = vld [vmem:[#allocation7 + $0xf8] sm:$0xff]
        %v1101 = vld [vmem:[%s454] sm:$0xf]
        %v1103 = vlaneseq
        %v1104 = vshrl.u32 %v1103, 7
        %v1105 = vsub.s32 0, %v1104
        %v1106 = vrot.slane %v1101, %v1105
        %v1107 = vlaneseq
        %v1108 = vshrl.u32 %v1107, 7
        %v1109 = vsub.s32 1, %v1108
        %v1110 = vrot.slane %v1101, %v1109
        %v1111 = vlaneseq
        %v1112 = vshrl.u32 %v1111, 7
        %v1113 = vsub.s32 2, %v1112
        %v1114 = vrot.slane %v1101, %v1113
        %v1115 = vlaneseq
        %v1116 = vshrl.u32 %v1115, 7
        %v1117 = vsub.s32 3, %v1116
        %v1118 = vrot.slane %v1101, %v1117
        %v1155 = vunpack.c.l.b16 %v1069
        %v1156 = vunpack.c.h.b16 %v1069
        %v1157 = vunpack.c.l.b16 %v1070
        %v1158 = vunpack.c.h.b16 %v1070
        %v1159 = vunpack.c.l.b16 %v1071
        %v1160 = vunpack.c.h.b16 %v1071
        %v1161 = vunpack.c.l.b16 %v1072
        %v1162 = vunpack.c.h.b16 %v1072
        %v1163 = vunpack.c.l.b16 %v1073
        %v1164 = vunpack.c.h.b16 %v1073
        %v1165 = vunpack.c.l.b16 %v1074
        %v1166 = vunpack.c.h.b16 %v1074
        %v1167 = vunpack.c.l.b16 %v1075
        %v1168 = vunpack.c.h.b16 %v1075
        %v1169 = vunpack.c.l.b16 %v1076
        %v1170 = vunpack.c.h.b16 %v1076
        %v1171 = vunpack.c.l.b16 %v1077
        %v1172 = vunpack.c.h.b16 %v1077
        %v1173 = vunpack.c.l.b16 %v1078
        %v1174 = vunpack.c.h.b16 %v1078
        %v1175 = vunpack.c.l.b16 %v1079
        %v1176 = vunpack.c.h.b16 %v1079
        %v1177 = vunpack.c.l.b16 %v1080
        %v1178 = vunpack.c.h.b16 %v1080
        %v1179 = vunpack.c.l.b16 %v1081
        %v1180 = vunpack.c.h.b16 %v1081
        %v1181 = vunpack.c.l.b16 %v1082
        %v1182 = vunpack.c.h.b16 %v1082
        %v1183 = vunpack.c.l.b16 %v1083
        %v1184 = vunpack.c.h.b16 %v1083
        %v1185 = vunpack.c.l.b16 %v1084
        %v1186 = vunpack.c.h.b16 %v1084
        %v1187 = vunpack.c.l.b16 %v1085
        %v1188 = vunpack.c.h.b16 %v1085
        %v1189 = vunpack.c.l.b16 %v1086
        %v1190 = vunpack.c.h.b16 %v1086
        %v1191 = vunpack.c.l.b16 %v1087
        %v1192 = vunpack.c.h.b16 %v1087
        %v1193 = vunpack.c.l.b16 %v1088
        %v1194 = vunpack.c.h.b16 %v1088
        %v1195 = vunpack.c.l.b16 %v1089
        %v1196 = vunpack.c.h.b16 %v1089
        %v1197 = vunpack.c.l.b16 %v1090
        %v1198 = vunpack.c.h.b16 %v1090
        %v1199 = vunpack.c.l.b16 %v1091
        %v1200 = vunpack.c.h.b16 %v1091
        %v1201 = vunpack.c.l.b16 %v1092
        %v1202 = vunpack.c.h.b16 %v1092
        %v1203 = vunpack.c.l.b16 %v1093
        %v1204 = vunpack.c.h.b16 %v1093
        %v1205 = vunpack.c.l.b16 %v1094
        %v1206 = vunpack.c.h.b16 %v1094
        %v1207 = vunpack.c.l.b16 %v1095
        %v1208 = vunpack.c.h.b16 %v1095
        %v1209 = vunpack.c.l.b16 %v1096
        %v1210 = vunpack.c.h.b16 %v1096
        %v1211 = vunpack.c.l.b16 %v1097
        %v1212 = vunpack.c.h.b16 %v1097
        %v1213 = vunpack.c.l.b16 %v1098
        %v1214 = vunpack.c.h.b16 %v1098
        %v1215 = vunpack.c.l.b16 %v1099
        %v1216 = vunpack.c.h.b16 %v1099
        %v1217 = vunpack.c.l.b16 %v1100
        %v1218 = vunpack.c.h.b16 %v1100
        %v1219 = vpack.c.b16 %v1159, %v1155
        %v1220 = vpack.c.b16 %v1160, %v1156
        %v1221 = vpack.c.b16 %v1161, %v1157
        %v1222 = vpack.c.b16 %v1162, %v1158
        %v1223 = vpack.c.b16 %v1167, %v1163
        %v1224 = vpack.c.b16 %v1168, %v1164
        %v1225 = vpack.c.b16 %v1169, %v1165
        %v1226 = vpack.c.b16 %v1170, %v1166
        %v1227 = vpack.c.b16 %v1175, %v1171
        %v1228 = vpack.c.b16 %v1176, %v1172
        %v1229 = vpack.c.b16 %v1177, %v1173
        %v1230 = vpack.c.b16 %v1178, %v1174
        %v1231 = vpack.c.b16 %v1183, %v1179
        %v1232 = vpack.c.b16 %v1184, %v1180
        %v1233 = vpack.c.b16 %v1185, %v1181
        %v1234 = vpack.c.b16 %v1186, %v1182
        %v1235 = vpack.c.b16 %v1191, %v1187
        %v1236 = vpack.c.b16 %v1192, %v1188
        %v1237 = vpack.c.b16 %v1193, %v1189
        %v1238 = vpack.c.b16 %v1194, %v1190
        %v1239 = vpack.c.b16 %v1199, %v1195
        %v1240 = vpack.c.b16 %v1200, %v1196
        %v1241 = vpack.c.b16 %v1201, %v1197
        %v1242 = vpack.c.b16 %v1202, %v1198
        %v1243 = vpack.c.b16 %v1207, %v1203
        %v1244 = vpack.c.b16 %v1208, %v1204
        %v1245 = vpack.c.b16 %v1209, %v1205
        %v1246 = vpack.c.b16 %v1210, %v1206
        %v1247 = vpack.c.b16 %v1215, %v1211
        %v1248 = vpack.c.b16 %v1216, %v1212
        %v1249 = vpack.c.b16 %v1217, %v1213
        %v1250 = vpack.c.b16 %v1218, %v1214
        %1283 = vmatprep.subr.bf16.mxu0 %v1220
        %1284 = vmatpush1.bf16.msra.mxu0 %v1219
        %1285 = vmatprep.subr.bf16.mxu0 %v1224
        %1286 = vmatpush1.bf16.msra.mxu0 %v1223
        %1287 = vmatprep.subr.bf16.mxu0 %v1228
        %1288 = vmatpush1.bf16.msra.mxu0 %v1227
        %1289 = vmatprep.subr.bf16.mxu0 %v1232
        %1290 = vmatpush1.bf16.msra.mxu0 %v1231
        %1291 = vmatprep.subr.bf16.mxu0 %v1236
        %1292 = vmatpush1.bf16.msra.mxu0 %v1235
        %1293 = vmatprep.subr.bf16.mxu0 %v1240
        %1294 = vmatpush1.bf16.msra.mxu0 %v1239
        %1295 = vmatprep.subr.bf16.mxu0 %v1244
        %1296 = vmatpush1.bf16.msra.mxu0 %v1243
        %1297 = vmatprep.subr.bf16.mxu0 %v1248
        %1298 = vmatpush1.bf16.msra.mxu0 %v1247
        %1299 = vmatprep.subr.bf16.mxu0 0
        %1300 = vmatpush1.bf16.msra.mxu0 0
        %1301 = vmatprep.subr.bf16.mxu0 0
        %1302 = vmatpush1.bf16.msra.mxu0 0
        %1303 = vmatprep.subr.bf16.mxu0 0
        %1304 = vmatpush1.bf16.msra.mxu0 0
        %1305 = vmatprep.subr.bf16.mxu0 0
        %1306 = vmatpush1.bf16.msra.mxu0 0
        %1307 = vmatprep.subr.bf16.mxu0 0
        %1308 = vmatpush1.bf16.msra.mxu0 0
        %1309 = vmatprep.subr.bf16.mxu0 0
        %1310 = vmatpush1.bf16.msra.mxu0 0
        %1311 = vmatprep.subr.bf16.mxu0 0
        %1312 = vmatpush1.bf16.msra.mxu0 0
        %1313 = vmatprep.subr.bf16.mxu0 0
        %1314 = vmatpush1.bf16.msra.mxu0 0
        %1315 = vmatprep.mubr.bf16.mxu0 0
        %1316 = vmatmul.mubr.bf16.gmra.mrb[0].mxu0 %v1053
        %v1317 = vpop.f32.mrb[0].mxu0
        %v1318 = vadd.f32 %v1106, %v1317
        %v1319 = vpop.f32.mrb[0].mxu0
        %v1320 = vadd.f32 %v1110, %v1319
        %v1321 = vpop.f32.mrb[0].mxu0
        %v1322 = vadd.f32 %v1106, %v1321
        %v1323 = vpop.f32.mrb[0].mxu0
        %v1324 = vadd.f32 %v1110, %v1323
        %1325 = vmatprep.mubr.bf16.mxu0 0
        %1326 = vmatmul.mubr.bf16.gmra.mrb[0].mxu0 %v1054
        %v1327 = vpop.f32.mrb[0].mxu0
        %v1328 = vadd.f32 %v1106, %v1327
        %v1329 = vpop.f32.mrb[0].mxu0
        %v1330 = vadd.f32 %v1110, %v1329
        %v1331 = vpop.f32.mrb[0].mxu0
        %v1332 = vadd.f32 %v1106, %v1331
        %v1333 = vpop.f32.mrb[0].mxu0
        %v1334 = vadd.f32 %v1110, %v1333
        %1335 = vmatprep.mubr.bf16.mxu0 0
        %1336 = vmatmul.mubr.bf16.gmra.mrb[0].mxu0 %v1055
        %v1337 = vpop.f32.mrb[0].mxu0
        %v1338 = vadd.f32 %v1106, %v1337
        %v1339 = vpop.f32.mrb[0].mxu0
        %v1340 = vadd.f32 %v1110, %v1339
        %v1341 = vpop.f32.mrb[0].mxu0
        %v1342 = vadd.f32 %v1106, %v1341
        %v1343 = vpop.f32.mrb[0].mxu0
        %v1344 = vadd.f32 %v1110, %v1343
        %1345 = vmatprep.mubr.bf16.mxu0 0
        %1346 = vmatmul.mubr.bf16.gmra.mrb[0].mxu0 %v1056
        %v1347 = vpop.f32.mrb[0].mxu0
        %v1348 = vadd.f32 %v1106, %v1347
        %v1349 = vpop.f32.mrb[0].mxu0
        %v1350 = vadd.f32 %v1110, %v1349
        %v1351 = vpop.f32.mrb[0].mxu0
        %v1352 = vadd.f32 %v1106, %v1351
        %v1353 = vpop.f32.mrb[0].mxu0
        %v1354 = vadd.f32 %v1110, %v1353
        %1355 = vmatprep.mubr.bf16.mxu0 0
        %1356 = vmatmul.mubr.bf16.gmra.mrb[0].mxu0 %v1057
        %v1357 = vpop.f32.mrb[0].mxu0
        %v1358 = vadd.f32 %v1106, %v1357
        %v1359 = vpop.f32.mrb[0].mxu0
        %v1360 = vadd.f32 %v1110, %v1359
        %v1361 = vpop.f32.mrb[0].mxu0
        %v1362 = vadd.f32 %v1106, %v1361
        %v1363 = vpop.f32.mrb[0].mxu0
        %v1364 = vadd.f32 %v1110, %v1363
        %1365 = vmatprep.mubr.bf16.mxu0 0
        %1366 = vmatmul.mubr.bf16.gmra.mrb[0].mxu0 %v1058
        %v1367 = vpop.f32.mrb[0].mxu0
        %v1368 = vadd.f32 %v1106, %v1367
        %v1369 = vpop.f32.mrb[0].mxu0
        %v1370 = vadd.f32 %v1110, %v1369
        %v1371 = vpop.f32.mrb[0].mxu0
        %v1372 = vadd.f32 %v1106, %v1371
        %v1373 = vpop.f32.mrb[0].mxu0
        %v1374 = vadd.f32 %v1110, %v1373
        %1375 = vmatprep.mubr.bf16.mxu0 0
        %1376 = vmatmul.mubr.bf16.gmra.mrb[0].mxu0 %v1059
        %v1377 = vpop.f32.mrb[0].mxu0
        %v1378 = vadd.f32 %v1106, %v1377
        %v1379 = vpop.f32.mrb[0].mxu0
        %v1380 = vadd.f32 %v1110, %v1379
        %v1381 = vpop.f32.mrb[0].mxu0
        %v1382 = vadd.f32 %v1106, %v1381
        %v1383 = vpop.f32.mrb[0].mxu0
        %v1384 = vadd.f32 %v1110, %v1383
        %1385 = vmatprep.mubr.bf16.mxu0 0
        %1386 = vmatmul.mubr.bf16.gmra.mrb[0].mxu0 %v1060
        %v1387 = vpop.f32.mrb[0].mxu0
        %v1388 = vadd.f32 %v1106, %v1387
        %v1389 = vpop.f32.mrb[0].mxu0
        %v1390 = vadd.f32 %v1110, %v1389
        %v1391 = vpop.f32.mrb[0].mxu0
        %v1392 = vadd.f32 %v1106, %v1391
        %v1393 = vpop.f32.mrb[0].mxu0
        %v1394 = vadd.f32 %v1110, %v1393
        %1395 = vmatprep.mubr.bf16.mxu0 0
        %1396 = vmatmul.mubr.bf16.gmra.mrb[0].mxu0 %v1061
        %v1397 = vpop.f32.mrb[0].mxu0
        %v1398 = vadd.f32 %v1106, %v1397
        %v1399 = vpop.f32.mrb[0].mxu0
        %v1400 = vadd.f32 %v1110, %v1399
        %v1401 = vpop.f32.mrb[0].mxu0
        %v1402 = vadd.f32 %v1106, %v1401
        %v1403 = vpop.f32.mrb[0].mxu0
        %v1404 = vadd.f32 %v1110, %v1403
        %1405 = vmatprep.mubr.bf16.mxu0 0
        %1406 = vmatmul.mubr.bf16.gmra.mrb[0].mxu0 %v1062
        %v1407 = vpop.f32.mrb[0].mxu0
        %v1408 = vadd.f32 %v1106, %v1407
        %v1409 = vpop.f32.mrb[0].mxu0
        %v1410 = vadd.f32 %v1110, %v1409
        %v1411 = vpop.f32.mrb[0].mxu0
        %v1412 = vadd.f32 %v1106, %v1411
        %v1413 = vpop.f32.mrb[0].mxu0
        %v1414 = vadd.f32 %v1110, %v1413
        %1415 = vmatprep.mubr.bf16.mxu0 0
        %1416 = vmatmul.mubr.bf16.gmra.mrb[0].mxu0 %v1063
        %v1417 = vpop.f32.mrb[0].mxu0
        %v1418 = vadd.f32 %v1106, %v1417
        %v1419 = vpop.f32.mrb[0].mxu0
        %v1420 = vadd.f32 %v1110, %v1419
        %v1421 = vpop.f32.mrb[0].mxu0
        %v1422 = vadd.f32 %v1106, %v1421
        %v1423 = vpop.f32.mrb[0].mxu0
        %v1424 = vadd.f32 %v1110, %v1423
        %1425 = vmatprep.mubr.bf16.mxu0 0
        %1426 = vmatmul.mubr.bf16.gmra.mrb[0].mxu0 %v1064
        %v1427 = vpop.f32.mrb[0].mxu0
        %v1428 = vadd.f32 %v1106, %v1427
        %v1429 = vpop.f32.mrb[0].mxu0
        %v1430 = vadd.f32 %v1110, %v1429
        %v1431 = vpop.f32.mrb[0].mxu0
        %v1432 = vadd.f32 %v1106, %v1431
        %v1433 = vpop.f32.mrb[0].mxu0
        %v1434 = vadd.f32 %v1110, %v1433
        %1435 = vmatprep.mubr.bf16.mxu0 0
        %1436 = vmatmul.mubr.bf16.gmra.mrb[0].mxu0 %v1065
        %v1437 = vpop.f32.mrb[0].mxu0
        %v1438 = vadd.f32 %v1106, %v1437
        %v1439 = vpop.f32.mrb[0].mxu0
        %v1440 = vadd.f32 %v1110, %v1439
        %v1441 = vpop.f32.mrb[0].mxu0
        %v1442 = vadd.f32 %v1106, %v1441
        %v1443 = vpop.f32.mrb[0].mxu0
        %v1444 = vadd.f32 %v1110, %v1443
        %1445 = vmatprep.mubr.bf16.mxu0 0
        %1446 = vmatmul.mubr.bf16.gmra.mrb[0].mxu0 %v1066
        %v1447 = vpop.f32.mrb[0].mxu0
        %v1448 = vadd.f32 %v1106, %v1447
        %v1449 = vpop.f32.mrb[0].mxu0
        %v1450 = vadd.f32 %v1110, %v1449
        %v1451 = vpop.f32.mrb[0].mxu0
        %v1452 = vadd.f32 %v1106, %v1451
        %v1453 = vpop.f32.mrb[0].mxu0
        %v1454 = vadd.f32 %v1110, %v1453
        %1455 = vmatprep.mubr.bf16.mxu0 0
        %1456 = vmatmul.mubr.bf16.gmra.mrb[0].mxu0 %v1067
        %v1457 = vpop.f32.mrb[0].mxu0
        %v1458 = vadd.f32 %v1106, %v1457
        %v1459 = vpop.f32.mrb[0].mxu0
        %v1460 = vadd.f32 %v1110, %v1459
        %v1461 = vpop.f32.mrb[0].mxu0
        %v1462 = vadd.f32 %v1106, %v1461
        %v1463 = vpop.f32.mrb[0].mxu0
        %v1464 = vadd.f32 %v1110, %v1463
        %1465 = vmatprep.mubr.bf16.mxu0 0
        %1466 = vmatmul.mubr.bf16.gmra.mrb[0].mxu0 %v1068
        %v1467 = vpop.f32.mrb[0].mxu0
        %v1468 = vadd.f32 %v1106, %v1467
        %v1469 = vpop.f32.mrb[0].mxu0
        %v1470 = vadd.f32 %v1110, %v1469
        %v1471 = vpop.f32.mrb[0].mxu0
        %v1472 = vadd.f32 %v1106, %v1471
        %v1473 = vpop.f32.mrb[0].mxu0
        %v1474 = vadd.f32 %v1110, %v1473
        %1475 = vdwg.mxu0
        %1476 = vmatprep.subr.bf16.mxu0 %v1222
        %1477 = vmatpush1.bf16.msra.mxu0 %v1221
        %1478 = vmatprep.subr.bf16.mxu0 %v1226
        %1479 = vmatpush1.bf16.msra.mxu0 %v1225
        %1480 = vmatprep.subr.bf16.mxu0 %v1230
        %1481 = vmatpush1.bf16.msra.mxu0 %v1229
        %1482 = vmatprep.subr.bf16.mxu0 %v1234
        %1483 = vmatpush1.bf16.msra.mxu0 %v1233
        %1484 = vmatprep.subr.bf16.mxu0 %v1238
        %1485 = vmatpush1.bf16.msra.mxu0 %v1237
        %1486 = vmatprep.subr.bf16.mxu0 %v1242
        %1487 = vmatpush1.bf16.msra.mxu0 %v1241
        %1488 = vmatprep.subr.bf16.mxu0 %v1246
        %1489 = vmatpush1.bf16.msra.mxu0 %v1245
        %1490 = vmatprep.subr.bf16.mxu0 %v1250
        %1491 = vmatpush1.bf16.msra.mxu0 %v1249
        %1492 = vmatprep.subr.bf16.mxu0 0
        %1493 = vmatpush1.bf16.msra.mxu0 0
        %1494 = vmatprep.subr.bf16.mxu0 0
        %1495 = vmatpush1.bf16.msra.mxu0 0
        %1496 = vmatprep.subr.bf16.mxu0 0
        %1497 = vmatpush1.bf16.msra.mxu0 0
        %1498 = vmatprep.subr.bf16.mxu0 0
        %1499 = vmatpush1.bf16.msra.mxu0 0
        %1500 = vmatprep.subr.bf16.mxu0 0
        %1501 = vmatpush1.bf16.msra.mxu0 0
        %1502 = vmatprep.subr.bf16.mxu0 0
        %1503 = vmatpush1.bf16.msra.mxu0 0
        %1504 = vmatprep.subr.bf16.mxu0 0
        %1505 = vmatpush1.bf16.msra.mxu0 0
        %1506 = vmatprep.subr.bf16.mxu0 0
        %1507 = vmatpush1.bf16.msra.mxu0 0
        %1508 = vmatprep.mubr.bf16.mxu0 0
        %1509 = vmatmul.mubr.bf16.gmra.mrb[0].mxu0 %v1053
        %v1510 = vpop.f32.mrb[0].mxu0
        %v1511 = vadd.f32 %v1114, %v1510
        %v1512 = vpop.f32.mrb[0].mxu0
        %v1513 = vadd.f32 %v1118, %v1512
        %v1514 = vpop.f32.mrb[0].mxu0
        %v1515 = vadd.f32 %v1114, %v1514
        %v1516 = vpop.f32.mrb[0].mxu0
        %v1517 = vadd.f32 %v1118, %v1516
        %1518 = vmatprep.mubr.bf16.mxu0 0
        %1519 = vmatmul.mubr.bf16.gmra.mrb[0].mxu0 %v1054
        %v1520 = vpop.f32.mrb[0].mxu0
        %v1521 = vadd.f32 %v1114, %v1520
        %v1522 = vpop.f32.mrb[0].mxu0
        %v1523 = vadd.f32 %v1118, %v1522
        %v1524 = vpop.f32.mrb[0].mxu0
        %v1525 = vadd.f32 %v1114, %v1524
        %v1526 = vpop.f32.mrb[0].mxu0
        %v1527 = vadd.f32 %v1118, %v1526
        %1528 = vmatprep.mubr.bf16.mxu0 0
        %1529 = vmatmul.mubr.bf16.gmra.mrb[0].mxu0 %v1055
        %v1530 = vpop.f32.mrb[0].mxu0
        %v1531 = vadd.f32 %v1114, %v1530
        %v1532 = vpop.f32.mrb[0].mxu0
        %v1533 = vadd.f32 %v1118, %v1532
        %v1534 = vpop.f32.mrb[0].mxu0
        %v1535 = vadd.f32 %v1114, %v1534
        %v1536 = vpop.f32.mrb[0].mxu0
        %v1537 = vadd.f32 %v1118, %v1536
        %1538 = vmatprep.mubr.bf16.mxu0 0
        %1539 = vmatmul.mubr.bf16.gmra.mrb[0].mxu0 %v1056
        %v1540 = vpop.f32.mrb[0].mxu0
        %v1541 = vadd.f32 %v1114, %v1540
        %v1542 = vpop.f32.mrb[0].mxu0
        %v1543 = vadd.f32 %v1118, %v1542
        %v1544 = vpop.f32.mrb[0].mxu0
        %v1545 = vadd.f32 %v1114, %v1544
        %v1546 = vpop.f32.mrb[0].mxu0
        %v1547 = vadd.f32 %v1118, %v1546
        %1548 = vmatprep.mubr.bf16.mxu0 0
        %1549 = vmatmul.mubr.bf16.gmra.mrb[0].mxu0 %v1057
        %v1550 = vpop.f32.mrb[0].mxu0
        %v1551 = vadd.f32 %v1114, %v1550
        %v1552 = vpop.f32.mrb[0].mxu0
        %v1553 = vadd.f32 %v1118, %v1552
        %v1554 = vpop.f32.mrb[0].mxu0
        %v1555 = vadd.f32 %v1114, %v1554
        %v1556 = vpop.f32.mrb[0].mxu0
        %v1557 = vadd.f32 %v1118, %v1556
        %1558 = vmatprep.mubr.bf16.mxu0 0
        %1559 = vmatmul.mubr.bf16.gmra.mrb[0].mxu0 %v1058
        %v1560 = vpop.f32.mrb[0].mxu0
        %v1561 = vadd.f32 %v1114, %v1560
        %v1562 = vpop.f32.mrb[0].mxu0
        %v1563 = vadd.f32 %v1118, %v1562
        %v1564 = vpop.f32.mrb[0].mxu0
        %v1565 = vadd.f32 %v1114, %v1564
        %v1566 = vpop.f32.mrb[0].mxu0
        %v1567 = vadd.f32 %v1118, %v1566
        %1568 = vmatprep.mubr.bf16.mxu0 0
        %1569 = vmatmul.mubr.bf16.gmra.mrb[0].mxu0 %v1059
        %v1570 = vpop.f32.mrb[0].mxu0
        %v1571 = vadd.f32 %v1114, %v1570
        %v1572 = vpop.f32.mrb[0].mxu0
        %v1573 = vadd.f32 %v1118, %v1572
        %v1574 = vpop.f32.mrb[0].mxu0
        %v1575 = vadd.f32 %v1114, %v1574
        %v1576 = vpop.f32.mrb[0].mxu0
        %v1577 = vadd.f32 %v1118, %v1576
        %1578 = vmatprep.mubr.bf16.mxu0 0
        %1579 = vmatmul.mubr.bf16.gmra.mrb[0].mxu0 %v1060
        %v1580 = vpop.f32.mrb[0].mxu0
        %v1581 = vadd.f32 %v1114, %v1580
        %v1582 = vpop.f32.mrb[0].mxu0
        %v1583 = vadd.f32 %v1118, %v1582
        %v1584 = vpop.f32.mrb[0].mxu0
        %v1585 = vadd.f32 %v1114, %v1584
        %v1586 = vpop.f32.mrb[0].mxu0
        %v1587 = vadd.f32 %v1118, %v1586
        %1588 = vmatprep.mubr.bf16.mxu0 0
        %1589 = vmatmul.mubr.bf16.gmra.mrb[0].mxu0 %v1061
        %v1590 = vpop.f32.mrb[0].mxu0
        %v1591 = vadd.f32 %v1114, %v1590
        %v1592 = vpop.f32.mrb[0].mxu0
        %v1593 = vadd.f32 %v1118, %v1592
        %v1594 = vpop.f32.mrb[0].mxu0
        %v1595 = vadd.f32 %v1114, %v1594
        %v1596 = vpop.f32.mrb[0].mxu0
        %v1597 = vadd.f32 %v1118, %v1596
        %1598 = vmatprep.mubr.bf16.mxu0 0
        %1599 = vmatmul.mubr.bf16.gmra.mrb[0].mxu0 %v1062
        %v1600 = vpop.f32.mrb[0].mxu0
        %v1601 = vadd.f32 %v1114, %v1600
        %v1602 = vpop.f32.mrb[0].mxu0
        %v1603 = vadd.f32 %v1118, %v1602
        %v1604 = vpop.f32.mrb[0].mxu0
        %v1605 = vadd.f32 %v1114, %v1604
        %v1606 = vpop.f32.mrb[0].mxu0
        %v1607 = vadd.f32 %v1118, %v1606
        %1608 = vmatprep.mubr.bf16.mxu0 0
        %1609 = vmatmul.mubr.bf16.gmra.mrb[0].mxu0 %v1063
        %v1610 = vpop.f32.mrb[0].mxu0
        %v1611 = vadd.f32 %v1114, %v1610
        %v1612 = vpop.f32.mrb[0].mxu0
        %v1613 = vadd.f32 %v1118, %v1612
        %v1614 = vpop.f32.mrb[0].mxu0
        %v1615 = vadd.f32 %v1114, %v1614
        %v1616 = vpop.f32.mrb[0].mxu0
        %v1617 = vadd.f32 %v1118, %v1616
        %1618 = vmatprep.mubr.bf16.mxu0 0
        %1619 = vmatmul.mubr.bf16.gmra.mrb[0].mxu0 %v1064
        %v1620 = vpop.f32.mrb[0].mxu0
        %v1621 = vadd.f32 %v1114, %v1620
        %v1622 = vpop.f32.mrb[0].mxu0
        %v1623 = vadd.f32 %v1118, %v1622
        %v1624 = vpop.f32.mrb[0].mxu0
        %v1625 = vadd.f32 %v1114, %v1624
        %v1626 = vpop.f32.mrb[0].mxu0
        %v1627 = vadd.f32 %v1118, %v1626
        %1628 = vmatprep.mubr.bf16.mxu0 0
        %1629 = vmatmul.mubr.bf16.gmra.mrb[0].mxu0 %v1065
        %v1630 = vpop.f32.mrb[0].mxu0
        %v1631 = vadd.f32 %v1114, %v1630
        %v1632 = vpop.f32.mrb[0].mxu0
        %v1633 = vadd.f32 %v1118, %v1632
        %v1634 = vpop.f32.mrb[0].mxu0
        %v1635 = vadd.f32 %v1114, %v1634
        %v1636 = vpop.f32.mrb[0].mxu0
        %v1637 = vadd.f32 %v1118, %v1636
        %1638 = vmatprep.mubr.bf16.mxu0 0
        %1639 = vmatmul.mubr.bf16.gmra.mrb[0].mxu0 %v1066
        %v1640 = vpop.f32.mrb[0].mxu0
        %v1641 = vadd.f32 %v1114, %v1640
        %v1642 = vpop.f32.mrb[0].mxu0
        %v1643 = vadd.f32 %v1118, %v1642
        %v1644 = vpop.f32.mrb[0].mxu0
        %v1645 = vadd.f32 %v1114, %v1644
        %v1646 = vpop.f32.mrb[0].mxu0
        %v1647 = vadd.f32 %v1118, %v1646
        %1648 = vmatprep.mubr.bf16.mxu0 0
        %1649 = vmatmul.mubr.bf16.gmra.mrb[0].mxu0 %v1067
        %v1650 = vpop.f32.mrb[0].mxu0
        %v1651 = vadd.f32 %v1114, %v1650
        %v1652 = vpop.f32.mrb[0].mxu0
        %v1653 = vadd.f32 %v1118, %v1652
        %v1654 = vpop.f32.mrb[0].mxu0
        %v1655 = vadd.f32 %v1114, %v1654
        %v1656 = vpop.f32.mrb[0].mxu0
        %v1657 = vadd.f32 %v1118, %v1656
        %1658 = vmatprep.mubr.bf16.mxu0 0
        %1659 = vmatmul.mubr.bf16.gmra.mrb[0].mxu0 %v1068
        %v1660 = vpop.f32.mrb[0].mxu0
        %v1661 = vadd.f32 %v1114, %v1660
        %v1662 = vpop.f32.mrb[0].mxu0
        %v1663 = vadd.f32 %v1118, %v1662
        %v1664 = vpop.f32.mrb[0].mxu0
        %v1665 = vadd.f32 %v1114, %v1664
        %v1666 = vpop.f32.mrb[0].mxu0
        %v1667 = vadd.f32 %v1118, %v1666
        %1668 = vdwg.mxu0
        %v1669 = vmul.f32 %v1318, %v1318
        %v1670 = vmul.f32 %v1320, %v1320
        %v1671 = vmul.f32 %v1511, %v1511
        %v1672 = vmul.f32 %v1513, %v1513
        %v1673 = vmul.f32 %v1322, %v1322
        %v1674 = vmul.f32 %v1324, %v1324
        %v1675 = vmul.f32 %v1515, %v1515
        %v1676 = vmul.f32 %v1517, %v1517
        %v1677 = vmul.f32 %v1328, %v1328
        %v1678 = vmul.f32 %v1330, %v1330
        %v1679 = vmul.f32 %v1521, %v1521
        %v1680 = vmul.f32 %v1523, %v1523
        %v1681 = vmul.f32 %v1332, %v1332
        %v1682 = vmul.f32 %v1334, %v1334
        %v1683 = vmul.f32 %v1525, %v1525
        %v1684 = vmul.f32 %v1527, %v1527
        %v1685 = vmul.f32 %v1338, %v1338
        %v1686 = vmul.f32 %v1340, %v1340
        %v1687 = vmul.f32 %v1531, %v1531
        %v1688 = vmul.f32 %v1533, %v1533
        %v1689 = vmul.f32 %v1342, %v1342
        %v1690 = vmul.f32 %v1344, %v1344
        %v1691 = vmul.f32 %v1535, %v1535
        %v1692 = vmul.f32 %v1537, %v1537
        %v1693 = vmul.f32 %v1348, %v1348
        %v1694 = vmul.f32 %v1350, %v1350
        %v1695 = vmul.f32 %v1541, %v1541
        %v1696 = vmul.f32 %v1543, %v1543
        %v1697 = vmul.f32 %v1352, %v1352
        %v1698 = vmul.f32 %v1354, %v1354
        %v1699 = vmul.f32 %v1545, %v1545
        %v1700 = vmul.f32 %v1547, %v1547
        %v1701 = vmul.f32 %v1358, %v1358
        %v1702 = vmul.f32 %v1360, %v1360
        %v1703 = vmul.f32 %v1551, %v1551
        %v1704 = vmul.f32 %v1553, %v1553
        %v1705 = vmul.f32 %v1362, %v1362
        %v1706 = vmul.f32 %v1364, %v1364
        %v1707 = vmul.f32 %v1555, %v1555
        %v1708 = vmul.f32 %v1557, %v1557
        %v1709 = vmul.f32 %v1368, %v1368
        %v1710 = vmul.f32 %v1370, %v1370
        %v1711 = vmul.f32 %v1561, %v1561
        %v1712 = vmul.f32 %v1563, %v1563
        %v1713 = vmul.f32 %v1372, %v1372
        %v1714 = vmul.f32 %v1374, %v1374
        %v1715 = vmul.f32 %v1565, %v1565
        %v1716 = vmul.f32 %v1567, %v1567
        %v1717 = vmul.f32 %v1378, %v1378
        %v1718 = vmul.f32 %v1380, %v1380
        %v1719 = vmul.f32 %v1571, %v1571
        %v1720 = vmul.f32 %v1573, %v1573
        %v1721 = vmul.f32 %v1382, %v1382
        %v1722 = vmul.f32 %v1384, %v1384
        %v1723 = vmul.f32 %v1575, %v1575
        %v1724 = vmul.f32 %v1577, %v1577
        %v1725 = vmul.f32 %v1388, %v1388
        %v1726 = vmul.f32 %v1390, %v1390
        %v1727 = vmul.f32 %v1581, %v1581
        %v1728 = vmul.f32 %v1583, %v1583
        %v1729 = vmul.f32 %v1392, %v1392
        %v1730 = vmul.f32 %v1394, %v1394
        %v1731 = vmul.f32 %v1585, %v1585
        %v1732 = vmul.f32 %v1587, %v1587
        %v1733 = vmul.f32 %v1398, %v1398
        %v1734 = vmul.f32 %v1400, %v1400
        %v1735 = vmul.f32 %v1591, %v1591
        %v1736 = vmul.f32 %v1593, %v1593
        %v1737 = vmul.f32 %v1402, %v1402
        %v1738 = vmul.f32 %v1404, %v1404
        %v1739 = vmul.f32 %v1595, %v1595
        %v1740 = vmul.f32 %v1597, %v1597
        %v1741 = vmul.f32 %v1408, %v1408
        %v1742 = vmul.f32 %v1410, %v1410
        %v1743 = vmul.f32 %v1601, %v1601
        %v1744 = vmul.f32 %v1603, %v1603
        %v1745 = vmul.f32 %v1412, %v1412
        %v1746 = vmul.f32 %v1414, %v1414
        %v1747 = vmul.f32 %v1605, %v1605
        %v1748 = vmul.f32 %v1607, %v1607
        %v1749 = vmul.f32 %v1418, %v1418
        %v1750 = vmul.f32 %v1420, %v1420
        %v1751 = vmul.f32 %v1611, %v1611
        %v1752 = vmul.f32 %v1613, %v1613
        %v1753 = vmul.f32 %v1422, %v1422
        %v1754 = vmul.f32 %v1424, %v1424
        %v1755 = vmul.f32 %v1615, %v1615
        %v1756 = vmul.f32 %v1617, %v1617
        %v1757 = vmul.f32 %v1428, %v1428
        %v1758 = vmul.f32 %v1430, %v1430
        %v1759 = vmul.f32 %v1621, %v1621
        %v1760 = vmul.f32 %v1623, %v1623
        %v1761 = vmul.f32 %v1432, %v1432
        %v1762 = vmul.f32 %v1434, %v1434
        %v1763 = vmul.f32 %v1625, %v1625
        %v1764 = vmul.f32 %v1627, %v1627
        %v1765 = vmul.f32 %v1438, %v1438
        %v1766 = vmul.f32 %v1440, %v1440
        %v1767 = vmul.f32 %v1631, %v1631
        %v1768 = vmul.f32 %v1633, %v1633
        %v1769 = vmul.f32 %v1442, %v1442
        %v1770 = vmul.f32 %v1444, %v1444
        %v1771 = vmul.f32 %v1635, %v1635
        %v1772 = vmul.f32 %v1637, %v1637
        %v1773 = vmul.f32 %v1448, %v1448
        %v1774 = vmul.f32 %v1450, %v1450
        %v1775 = vmul.f32 %v1641, %v1641
        %v1776 = vmul.f32 %v1643, %v1643
        %v1777 = vmul.f32 %v1452, %v1452
        %v1778 = vmul.f32 %v1454, %v1454
        %v1779 = vmul.f32 %v1645, %v1645
        %v1780 = vmul.f32 %v1647, %v1647
        %v1781 = vmul.f32 %v1458, %v1458
        %v1782 = vmul.f32 %v1460, %v1460
        %v1783 = vmul.f32 %v1651, %v1651
        %v1784 = vmul.f32 %v1653, %v1653
        %v1785 = vmul.f32 %v1462, %v1462
        %v1786 = vmul.f32 %v1464, %v1464
        %v1787 = vmul.f32 %v1655, %v1655
        %v1788 = vmul.f32 %v1657, %v1657
        %v1789 = vmul.f32 %v1468, %v1468
        %v1790 = vmul.f32 %v1470, %v1470
        %v1791 = vmul.f32 %v1661, %v1661
        %v1792 = vmul.f32 %v1663, %v1663
        %v1793 = vmul.f32 %v1472, %v1472
        %v1794 = vmul.f32 %v1474, %v1474
        %v1795 = vmul.f32 %v1665, %v1665
        %v1796 = vmul.f32 %v1667, %v1667
        %v1797 = vmul.f32 %v1318, %v1669
        %v1798 = vmul.f32 %v1320, %v1670
        %v1799 = vmul.f32 %v1511, %v1671
        %v1800 = vmul.f32 %v1513, %v1672
        %v1801 = vmul.f32 %v1322, %v1673
        %v1802 = vmul.f32 %v1324, %v1674
        %v1803 = vmul.f32 %v1515, %v1675
        %v1804 = vmul.f32 %v1517, %v1676
        %v1805 = vmul.f32 %v1328, %v1677
        %v1806 = vmul.f32 %v1330, %v1678
        %v1807 = vmul.f32 %v1521, %v1679
        %v1808 = vmul.f32 %v1523, %v1680
        %v1809 = vmul.f32 %v1332, %v1681
        %v1810 = vmul.f32 %v1334, %v1682
        %v1811 = vmul.f32 %v1525, %v1683
        %v1812 = vmul.f32 %v1527, %v1684
        %v1813 = vmul.f32 %v1338, %v1685
        %v1814 = vmul.f32 %v1340, %v1686
        %v1815 = vmul.f32 %v1531, %v1687
        %v1816 = vmul.f32 %v1533, %v1688
        %v1817 = vmul.f32 %v1342, %v1689
        %v1818 = vmul.f32 %v1344, %v1690
        %v1819 = vmul.f32 %v1535, %v1691
        %v1820 = vmul.f32 %v1537, %v1692
        %v1821 = vmul.f32 %v1348, %v1693
        %v1822 = vmul.f32 %v1350, %v1694
        %v1823 = vmul.f32 %v1541, %v1695
        %v1824 = vmul.f32 %v1543, %v1696
        %v1825 = vmul.f32 %v1352, %v1697
        %v1826 = vmul.f32 %v1354, %v1698
        %v1827 = vmul.f32 %v1545, %v1699
        %v1828 = vmul.f32 %v1547, %v1700
        %v1829 = vmul.f32 %v1358, %v1701
        %v1830 = vmul.f32 %v1360, %v1702
        %v1831 = vmul.f32 %v1551, %v1703
        %v1832 = vmul.f32 %v1553, %v1704
        %v1833 = vmul.f32 %v1362, %v1705
        %v1834 = vmul.f32 %v1364, %v1706
        %v1835 = vmul.f32 %v1555, %v1707
        %v1836 = vmul.f32 %v1557, %v1708
        %v1837 = vmul.f32 %v1368, %v1709
        %v1838 = vmul.f32 %v1370, %v1710
        %v1839 = vmul.f32 %v1561, %v1711
        %v1840 = vmul.f32 %v1563, %v1712
        %v1841 = vmul.f32 %v1372, %v1713
        %v1842 = vmul.f32 %v1374, %v1714
        %v1843 = vmul.f32 %v1565, %v1715
        %v1844 = vmul.f32 %v1567, %v1716
        %v1845 = vmul.f32 %v1378, %v1717
        %v1846 = vmul.f32 %v1380, %v1718
        %v1847 = vmul.f32 %v1571, %v1719
        %v1848 = vmul.f32 %v1573, %v1720
        %v1849 = vmul.f32 %v1382, %v1721
        %v1850 = vmul.f32 %v1384, %v1722
        %v1851 = vmul.f32 %v1575, %v1723
        %v1852 = vmul.f32 %v1577, %v1724
        %v1853 = vmul.f32 %v1388, %v1725
        %v1854 = vmul.f32 %v1390, %v1726
        %v1855 = vmul.f32 %v1581, %v1727
        %v1856 = vmul.f32 %v1583, %v1728
        %v1857 = vmul.f32 %v1392, %v1729
        %v1858 = vmul.f32 %v1394, %v1730
        %v1859 = vmul.f32 %v1585, %v1731
        %v1860 = vmul.f32 %v1587, %v1732
        %v1861 = vmul.f32 %v1398, %v1733
        %v1862 = vmul.f32 %v1400, %v1734
        %v1863 = vmul.f32 %v1591, %v1735
        %v1864 = vmul.f32 %v1593, %v1736
        %v1865 = vmul.f32 %v1402, %v1737
        %v1866 = vmul.f32 %v1404, %v1738
        %v1867 = vmul.f32 %v1595, %v1739
        %v1868 = vmul.f32 %v1597, %v1740
        %v1869 = vmul.f32 %v1408, %v1741
        %v1870 = vmul.f32 %v1410, %v1742
        %v1871 = vmul.f32 %v1601, %v1743
        %v1872 = vmul.f32 %v1603, %v1744
        %v1873 = vmul.f32 %v1412, %v1745
        %v1874 = vmul.f32 %v1414, %v1746
        %v1875 = vmul.f32 %v1605, %v1747
        %v1876 = vmul.f32 %v1607, %v1748
        %v1877 = vmul.f32 %v1418, %v1749
        %v1878 = vmul.f32 %v1420, %v1750
        %v1879 = vmul.f32 %v1611, %v1751
        %v1880 = vmul.f32 %v1613, %v1752
        %v1881 = vmul.f32 %v1422, %v1753
        %v1882 = vmul.f32 %v1424, %v1754
        %v1883 = vmul.f32 %v1615, %v1755
        %v1884 = vmul.f32 %v1617, %v1756
        %v1885 = vmul.f32 %v1428, %v1757
        %v1886 = vmul.f32 %v1430, %v1758
        %v1887 = vmul.f32 %v1621, %v1759
        %v1888 = vmul.f32 %v1623, %v1760
        %v1889 = vmul.f32 %v1432, %v1761
        %v1890 = vmul.f32 %v1434, %v1762
        %v1891 = vmul.f32 %v1625, %v1763
        %v1892 = vmul.f32 %v1627, %v1764
        %v1893 = vmul.f32 %v1438, %v1765
        %v1894 = vmul.f32 %v1440, %v1766
        %v1895 = vmul.f32 %v1631, %v1767
        %v1896 = vmul.f32 %v1633, %v1768
        %v1897 = vmul.f32 %v1442, %v1769
        %v1898 = vmul.f32 %v1444, %v1770
        %v1899 = vmul.f32 %v1635, %v1771
        %v1900 = vmul.f32 %v1637, %v1772
        %v1901 = vmul.f32 %v1448, %v1773
        %v1902 = vmul.f32 %v1450, %v1774
        %v1903 = vmul.f32 %v1641, %v1775
        %v1904 = vmul.f32 %v1643, %v1776
        %v1905 = vmul.f32 %v1452, %v1777
        %v1906 = vmul.f32 %v1454, %v1778
        %v1907 = vmul.f32 %v1645, %v1779
        %v1908 = vmul.f32 %v1647, %v1780
        %v1909 = vmul.f32 %v1458, %v1781
        %v1910 = vmul.f32 %v1460, %v1782
        %v1911 = vmul.f32 %v1651, %v1783
        %v1912 = vmul.f32 %v1653, %v1784
        %v1913 = vmul.f32 %v1462, %v1785
        %v1914 = vmul.f32 %v1464, %v1786
        %v1915 = vmul.f32 %v1655, %v1787
        %v1916 = vmul.f32 %v1657, %v1788
        %v1917 = vmul.f32 %v1468, %v1789
        %v1918 = vmul.f32 %v1470, %v1790
        %v1919 = vmul.f32 %v1661, %v1791
        %v1920 = vmul.f32 %v1663, %v1792
        %v1921 = vmul.f32 %v1472, %v1793
        %v1922 = vmul.f32 %v1474, %v1794
        %v1923 = vmul.f32 %v1665, %v1795
        %v1924 = vmul.f32 %v1667, %v1796
        %v1925 = vmul.f32 %v1797, 0.044715
        %v1926 = vmul.f32 %v1798, 0.044715
        %v1927 = vmul.f32 %v1799, 0.044715
        %v1928 = vmul.f32 %v1800, 0.044715
        %v1929 = vmul.f32 %v1801, 0.044715
        %v1930 = vmul.f32 %v1802, 0.044715
        %v1931 = vmul.f32 %v1803, 0.044715
        %v1932 = vmul.f32 %v1804, 0.044715
        %v1933 = vmul.f32 %v1805, 0.044715
        %v1934 = vmul.f32 %v1806, 0.044715
        %v1935 = vmul.f32 %v1807, 0.044715
        %v1936 = vmul.f32 %v1808, 0.044715
        %v1937 = vmul.f32 %v1809, 0.044715
        %v1938 = vmul.f32 %v1810, 0.044715
        %v1939 = vmul.f32 %v1811, 0.044715
        %v1940 = vmul.f32 %v1812, 0.044715
        %v1941 = vmul.f32 %v1813, 0.044715
        %v1942 = vmul.f32 %v1814, 0.044715
        %v1943 = vmul.f32 %v1815, 0.044715
        %v1944 = vmul.f32 %v1816, 0.044715
        %v1945 = vmul.f32 %v1817, 0.044715
        %v1946 = vmul.f32 %v1818, 0.044715
        %v1947 = vmul.f32 %v1819, 0.044715
        %v1948 = vmul.f32 %v1820, 0.044715
        %v1949 = vmul.f32 %v1821, 0.044715
        %v1950 = vmul.f32 %v1822, 0.044715
        %v1951 = vmul.f32 %v1823, 0.044715
        %v1952 = vmul.f32 %v1824, 0.044715
        %v1953 = vmul.f32 %v1825, 0.044715
        %v1954 = vmul.f32 %v1826, 0.044715
        %v1955 = vmul.f32 %v1827, 0.044715
        %v1956 = vmul.f32 %v1828, 0.044715
        %v1957 = vmul.f32 %v1829, 0.044715
        %v1958 = vmul.f32 %v1830, 0.044715
        %v1959 = vmul.f32 %v1831, 0.044715
        %v1960 = vmul.f32 %v1832, 0.044715
        %v1961 = vmul.f32 %v1833, 0.044715
        %v1962 = vmul.f32 %v1834, 0.044715
        %v1963 = vmul.f32 %v1835, 0.044715
        %v1964 = vmul.f32 %v1836, 0.044715
        %v1965 = vmul.f32 %v1837, 0.044715
        %v1966 = vmul.f32 %v1838, 0.044715
        %v1967 = vmul.f32 %v1839, 0.044715
        %v1968 = vmul.f32 %v1840, 0.044715
        %v1969 = vmul.f32 %v1841, 0.044715
        %v1970 = vmul.f32 %v1842, 0.044715
        %v1971 = vmul.f32 %v1843, 0.044715
        %v1972 = vmul.f32 %v1844, 0.044715
        %v1973 = vmul.f32 %v1845, 0.044715
        %v1974 = vmul.f32 %v1846, 0.044715
        %v1975 = vmul.f32 %v1847, 0.044715
        %v1976 = vmul.f32 %v1848, 0.044715
        %v1977 = vmul.f32 %v1849, 0.044715
        %v1978 = vmul.f32 %v1850, 0.044715
        %v1979 = vmul.f32 %v1851, 0.044715
        %v1980 = vmul.f32 %v1852, 0.044715
        %v1981 = vmul.f32 %v1853, 0.044715
        %v1982 = vmul.f32 %v1854, 0.044715
        %v1983 = vmul.f32 %v1855, 0.044715
        %v1984 = vmul.f32 %v1856, 0.044715
        %v1985 = vmul.f32 %v1857, 0.044715
        %v1986 = vmul.f32 %v1858, 0.044715
        %v1987 = vmul.f32 %v1859, 0.044715
        %v1988 = vmul.f32 %v1860, 0.044715
        %v1989 = vmul.f32 %v1861, 0.044715
        %v1990 = vmul.f32 %v1862, 0.044715
        %v1991 = vmul.f32 %v1863, 0.044715
        %v1992 = vmul.f32 %v1864, 0.044715
        %v1993 = vmul.f32 %v1865, 0.044715
        %v1994 = vmul.f32 %v1866, 0.044715
        %v1995 = vmul.f32 %v1867, 0.044715
        %v1996 = vmul.f32 %v1868, 0.044715
        %v1997 = vmul.f32 %v1869, 0.044715
        %v1998 = vmul.f32 %v1870, 0.044715
        %v1999 = vmul.f32 %v1871, 0.044715
        %v2000 = vmul.f32 %v1872, 0.044715
        %v2001 = vmul.f32 %v1873, 0.044715
        %v2002 = vmul.f32 %v1874, 0.044715
        %v2003 = vmul.f32 %v1875, 0.044715
        %v2004 = vmul.f32 %v1876, 0.044715
        %v2005 = vmul.f32 %v1877, 0.044715
        %v2006 = vmul.f32 %v1878, 0.044715
        %v2007 = vmul.f32 %v1879, 0.044715
        %v2008 = vmul.f32 %v1880, 0.044715
        %v2009 = vmul.f32 %v1881, 0.044715
        %v2010 = vmul.f32 %v1882, 0.044715
        %v2011 = vmul.f32 %v1883, 0.044715
        %v2012 = vmul.f32 %v1884, 0.044715
        %v2013 = vmul.f32 %v1885, 0.044715
        %v2014 = vmul.f32 %v1886, 0.044715
        %v2015 = vmul.f32 %v1887, 0.044715
        %v2016 = vmul.f32 %v1888, 0.044715
        %v2017 = vmul.f32 %v1889, 0.044715
        %v2018 = vmul.f32 %v1890, 0.044715
        %v2019 = vmul.f32 %v1891, 0.044715
        %v2020 = vmul.f32 %v1892, 0.044715
        %v2021 = vmul.f32 %v1893, 0.044715
        %v2022 = vmul.f32 %v1894, 0.044715
        %v2023 = vmul.f32 %v1895, 0.044715
        %v2024 = vmul.f32 %v1896, 0.044715
        %v2025 = vmul.f32 %v1897, 0.044715
        %v2026 = vmul.f32 %v1898, 0.044715
        %v2027 = vmul.f32 %v1899, 0.044715
        %v2028 = vmul.f32 %v1900, 0.044715
        %v2029 = vmul.f32 %v1901, 0.044715
        %v2030 = vmul.f32 %v1902, 0.044715
        %v2031 = vmul.f32 %v1903, 0.044715
        %v2032 = vmul.f32 %v1904, 0.044715
        %v2033 = vmul.f32 %v1905, 0.044715
        %v2034 = vmul.f32 %v1906, 0.044715
        %v2035 = vmul.f32 %v1907, 0.044715
        %v2036 = vmul.f32 %v1908, 0.044715
        %v2037 = vmul.f32 %v1909, 0.044715
        %v2038 = vmul.f32 %v1910, 0.044715
        %v2039 = vmul.f32 %v1911, 0.044715
        %v2040 = vmul.f32 %v1912, 0.044715
        %v2041 = vmul.f32 %v1913, 0.044715
        %v2042 = vmul.f32 %v1914, 0.044715
        %v2043 = vmul.f32 %v1915, 0.044715
        %v2044 = vmul.f32 %v1916, 0.044715
        %v2045 = vmul.f32 %v1917, 0.044715
        %v2046 = vmul.f32 %v1918, 0.044715
        %v2047 = vmul.f32 %v1919, 0.044715
        %v2048 = vmul.f32 %v1920, 0.044715
        %v2049 = vmul.f32 %v1921, 0.044715
        %v2050 = vmul.f32 %v1922, 0.044715
        %v2051 = vmul.f32 %v1923, 0.044715
        %v2052 = vmul.f32 %v1924, 0.044715
        %v2053 = vadd.f32 %v1318, %v1925
        %v2054 = vadd.f32 %v1320, %v1926
        %v2055 = vadd.f32 %v1511, %v1927
        %v2056 = vadd.f32 %v1513, %v1928
        %v2057 = vadd.f32 %v1322, %v1929
        %v2058 = vadd.f32 %v1324, %v1930
        %v2059 = vadd.f32 %v1515, %v1931
        %v2060 = vadd.f32 %v1517, %v1932
        %v2061 = vadd.f32 %v1328, %v1933
        %v2062 = vadd.f32 %v1330, %v1934
        %v2063 = vadd.f32 %v1521, %v1935
        %v2064 = vadd.f32 %v1523, %v1936
        %v2065 = vadd.f32 %v1332, %v1937
        %v2066 = vadd.f32 %v1334, %v1938
        %v2067 = vadd.f32 %v1525, %v1939
        %v2068 = vadd.f32 %v1527, %v1940
        %v2069 = vadd.f32 %v1338, %v1941
        %v2070 = vadd.f32 %v1340, %v1942
        %v2071 = vadd.f32 %v1531, %v1943
        %v2072 = vadd.f32 %v1533, %v1944
        %v2073 = vadd.f32 %v1342, %v1945
        %v2074 = vadd.f32 %v1344, %v1946
        %v2075 = vadd.f32 %v1535, %v1947
        %v2076 = vadd.f32 %v1537, %v1948
        %v2077 = vadd.f32 %v1348, %v1949
        %v2078 = vadd.f32 %v1350, %v1950
        %v2079 = vadd.f32 %v1541, %v1951
        %v2080 = vadd.f32 %v1543, %v1952
        %v2081 = vadd.f32 %v1352, %v1953
        %v2082 = vadd.f32 %v1354, %v1954
        %v2083 = vadd.f32 %v1545, %v1955
        %v2084 = vadd.f32 %v1547, %v1956
        %v2085 = vadd.f32 %v1358, %v1957
        %v2086 = vadd.f32 %v1360, %v1958
        %v2087 = vadd.f32 %v1551, %v1959
        %v2088 = vadd.f32 %v1553, %v1960
        %v2089 = vadd.f32 %v1362, %v1961
        %v2090 = vadd.f32 %v1364, %v1962
        %v2091 = vadd.f32 %v1555, %v1963
        %v2092 = vadd.f32 %v1557, %v1964
        %v2093 = vadd.f32 %v1368, %v1965
        %v2094 = vadd.f32 %v1370, %v1966
        %v2095 = vadd.f32 %v1561, %v1967
        %v2096 = vadd.f32 %v1563, %v1968
        %v2097 = vadd.f32 %v1372, %v1969
        %v2098 = vadd.f32 %v1374, %v1970
        %v2099 = vadd.f32 %v1565, %v1971
        %v2100 = vadd.f32 %v1567, %v1972
        %v2101 = vadd.f32 %v1378, %v1973
        %v2102 = vadd.f32 %v1380, %v1974
        %v2103 = vadd.f32 %v1571, %v1975
        %v2104 = vadd.f32 %v1573, %v1976
        %v2105 = vadd.f32 %v1382, %v1977
        %v2106 = vadd.f32 %v1384, %v1978
        %v2107 = vadd.f32 %v1575, %v1979
        %v2108 = vadd.f32 %v1577, %v1980
        %v2109 = vadd.f32 %v1388, %v1981
        %v2110 = vadd.f32 %v1390, %v1982
        %v2111 = vadd.f32 %v1581, %v1983
        %v2112 = vadd.f32 %v1583, %v1984
        %v2113 = vadd.f32 %v1392, %v1985
        %v2114 = vadd.f32 %v1394, %v1986
        %v2115 = vadd.f32 %v1585, %v1987
        %v2116 = vadd.f32 %v1587, %v1988
        %v2117 = vadd.f32 %v1398, %v1989
        %v2118 = vadd.f32 %v1400, %v1990
        %v2119 = vadd.f32 %v1591, %v1991
        %v2120 = vadd.f32 %v1593, %v1992
        %v2121 = vadd.f32 %v1402, %v1993
        %v2122 = vadd.f32 %v1404, %v1994
        %v2123 = vadd.f32 %v1595, %v1995
        %v2124 = vadd.f32 %v1597, %v1996
        %v2125 = vadd.f32 %v1408, %v1997
        %v2126 = vadd.f32 %v1410, %v1998
        %v2127 = vadd.f32 %v1601, %v1999
        %v2128 = vadd.f32 %v1603, %v2000
        %v2129 = vadd.f32 %v1412, %v2001
        %v2130 = vadd.f32 %v1414, %v2002
        %v2131 = vadd.f32 %v1605, %v2003
        %v2132 = vadd.f32 %v1607, %v2004
        %v2133 = vadd.f32 %v1418, %v2005
        %v2134 = vadd.f32 %v1420, %v2006
        %v2135 = vadd.f32 %v1611, %v2007
        %v2136 = vadd.f32 %v1613, %v2008
        %v2137 = vadd.f32 %v1422, %v2009
        %v2138 = vadd.f32 %v1424, %v2010
        %v2139 = vadd.f32 %v1615, %v2011
        %v2140 = vadd.f32 %v1617, %v2012
        %v2141 = vadd.f32 %v1428, %v2013
        %v2142 = vadd.f32 %v1430, %v2014
        %v2143 = vadd.f32 %v1621, %v2015
        %v2144 = vadd.f32 %v1623, %v2016
        %v2145 = vadd.f32 %v1432, %v2017
        %v2146 = vadd.f32 %v1434, %v2018
        %v2147 = vadd.f32 %v1625, %v2019
        %v2148 = vadd.f32 %v1627, %v2020
        %v2149 = vadd.f32 %v1438, %v2021
        %v2150 = vadd.f32 %v1440, %v2022
        %v2151 = vadd.f32 %v1631, %v2023
        %v2152 = vadd.f32 %v1633, %v2024
        %v2153 = vadd.f32 %v1442, %v2025
        %v2154 = vadd.f32 %v1444, %v2026
        %v2155 = vadd.f32 %v1635, %v2027
        %v2156 = vadd.f32 %v1637, %v2028
        %v2157 = vadd.f32 %v1448, %v2029
        %v2158 = vadd.f32 %v1450, %v2030
        %v2159 = vadd.f32 %v1641, %v2031
        %v2160 = vadd.f32 %v1643, %v2032
        %v2161 = vadd.f32 %v1452, %v2033
        %v2162 = vadd.f32 %v1454, %v2034
        %v2163 = vadd.f32 %v1645, %v2035
        %v2164 = vadd.f32 %v1647, %v2036
        %v2165 = vadd.f32 %v1458, %v2037
        %v2166 = vadd.f32 %v1460, %v2038
        %v2167 = vadd.f32 %v1651, %v2039
        %v2168 = vadd.f32 %v1653, %v2040
        %v2169 = vadd.f32 %v1462, %v2041
        %v2170 = vadd.f32 %v1464, %v2042
        %v2171 = vadd.f32 %v1655, %v2043
        %v2172 = vadd.f32 %v1657, %v2044
        %v2173 = vadd.f32 %v1468, %v2045
        %v2174 = vadd.f32 %v1470, %v2046
        %v2175 = vadd.f32 %v1661, %v2047
        %v2176 = vadd.f32 %v1663, %v2048
        %v2177 = vadd.f32 %v1472, %v2049
        %v2178 = vadd.f32 %v1474, %v2050
        %v2179 = vadd.f32 %v1665, %v2051
        %v2180 = vadd.f32 %v1667, %v2052
        %v2181 = vmul.f32 %v2053, 0.7978846
        %v2182 = vmul.f32 %v2054, 0.7978846
        %v2183 = vmul.f32 %v2055, 0.7978846
        %v2184 = vmul.f32 %v2056, 0.7978846
        %v2185 = vmul.f32 %v2057, 0.7978846
        %v2186 = vmul.f32 %v2058, 0.7978846
        %v2187 = vmul.f32 %v2059, 0.7978846
        %v2188 = vmul.f32 %v2060, 0.7978846
        %v2189 = vmul.f32 %v2061, 0.7978846
        %v2190 = vmul.f32 %v2062, 0.7978846
        %v2191 = vmul.f32 %v2063, 0.7978846
        %v2192 = vmul.f32 %v2064, 0.7978846
        %v2193 = vmul.f32 %v2065, 0.7978846
        %v2194 = vmul.f32 %v2066, 0.7978846
        %v2195 = vmul.f32 %v2067, 0.7978846
        %v2196 = vmul.f32 %v2068, 0.7978846
        %v2197 = vmul.f32 %v2069, 0.7978846
        %v2198 = vmul.f32 %v2070, 0.7978846
        %v2199 = vmul.f32 %v2071, 0.7978846
        %v2200 = vmul.f32 %v2072, 0.7978846
        %v2201 = vmul.f32 %v2073, 0.7978846
        %v2202 = vmul.f32 %v2074, 0.7978846
        %v2203 = vmul.f32 %v2075, 0.7978846
        %v2204 = vmul.f32 %v2076, 0.7978846
        %v2205 = vmul.f32 %v2077, 0.7978846
        %v2206 = vmul.f32 %v2078, 0.7978846
        %v2207 = vmul.f32 %v2079, 0.7978846
        %v2208 = vmul.f32 %v2080, 0.7978846
        %v2209 = vmul.f32 %v2081, 0.7978846
        %v2210 = vmul.f32 %v2082, 0.7978846
        %v2211 = vmul.f32 %v2083, 0.7978846
        %v2212 = vmul.f32 %v2084, 0.7978846
        %v2213 = vmul.f32 %v2085, 0.7978846
        %v2214 = vmul.f32 %v2086, 0.7978846
        %v2215 = vmul.f32 %v2087, 0.7978846
        %v2216 = vmul.f32 %v2088, 0.7978846
        %v2217 = vmul.f32 %v2089, 0.7978846
        %v2218 = vmul.f32 %v2090, 0.7978846
        %v2219 = vmul.f32 %v2091, 0.7978846
        %v2220 = vmul.f32 %v2092, 0.7978846
        %v2221 = vmul.f32 %v2093, 0.7978846
        %v2222 = vmul.f32 %v2094, 0.7978846
        %v2223 = vmul.f32 %v2095, 0.7978846
        %v2224 = vmul.f32 %v2096, 0.7978846
        %v2225 = vmul.f32 %v2097, 0.7978846
        %v2226 = vmul.f32 %v2098, 0.7978846
        %v2227 = vmul.f32 %v2099, 0.7978846
        %v2228 = vmul.f32 %v2100, 0.7978846
        %v2229 = vmul.f32 %v2101, 0.7978846
        %v2230 = vmul.f32 %v2102, 0.7978846
        %v2231 = vmul.f32 %v2103, 0.7978846
        %v2232 = vmul.f32 %v2104, 0.7978846
        %v2233 = vmul.f32 %v2105, 0.7978846
        %v2234 = vmul.f32 %v2106, 0.7978846
        %v2235 = vmul.f32 %v2107, 0.7978846
        %v2236 = vmul.f32 %v2108, 0.7978846
        %v2237 = vmul.f32 %v2109, 0.7978846
        %v2238 = vmul.f32 %v2110, 0.7978846
        %v2239 = vmul.f32 %v2111, 0.7978846
        %v2240 = vmul.f32 %v2112, 0.7978846
        %v2241 = vmul.f32 %v2113, 0.7978846
        %v2242 = vmul.f32 %v2114, 0.7978846
        %v2243 = vmul.f32 %v2115, 0.7978846
        %v2244 = vmul.f32 %v2116, 0.7978846
        %v2245 = vmul.f32 %v2117, 0.7978846
        %v2246 = vmul.f32 %v2118, 0.7978846
        %v2247 = vmul.f32 %v2119, 0.7978846
        %v2248 = vmul.f32 %v2120, 0.7978846
        %v2249 = vmul.f32 %v2121, 0.7978846
        %v2250 = vmul.f32 %v2122, 0.7978846
        %v2251 = vmul.f32 %v2123, 0.7978846
        %v2252 = vmul.f32 %v2124, 0.7978846
        %v2253 = vmul.f32 %v2125, 0.7978846
        %v2254 = vmul.f32 %v2126, 0.7978846
        %v2255 = vmul.f32 %v2127, 0.7978846
        %v2256 = vmul.f32 %v2128, 0.7978846
        %v2257 = vmul.f32 %v2129, 0.7978846
        %v2258 = vmul.f32 %v2130, 0.7978846
        %v2259 = vmul.f32 %v2131, 0.7978846
        %v2260 = vmul.f32 %v2132, 0.7978846
        %v2261 = vmul.f32 %v2133, 0.7978846
        %v2262 = vmul.f32 %v2134, 0.7978846
        %v2263 = vmul.f32 %v2135, 0.7978846
        %v2264 = vmul.f32 %v2136, 0.7978846
        %v2265 = vmul.f32 %v2137, 0.7978846
        %v2266 = vmul.f32 %v2138, 0.7978846
        %v2267 = vmul.f32 %v2139, 0.7978846
        %v2268 = vmul.f32 %v2140, 0.7978846
        %v2269 = vmul.f32 %v2141, 0.7978846
        %v2270 = vmul.f32 %v2142, 0.7978846
        %v2271 = vmul.f32 %v2143, 0.7978846
        %v2272 = vmul.f32 %v2144, 0.7978846
        %v2273 = vmul.f32 %v2145, 0.7978846
        %v2274 = vmul.f32 %v2146, 0.7978846
        %v2275 = vmul.f32 %v2147, 0.7978846
        %v2276 = vmul.f32 %v2148, 0.7978846
        %v2277 = vmul.f32 %v2149, 0.7978846
        %v2278 = vmul.f32 %v2150, 0.7978846
        %v2279 = vmul.f32 %v2151, 0.7978846
        %v2280 = vmul.f32 %v2152, 0.7978846
        %v2281 = vmul.f32 %v2153, 0.7978846
        %v2282 = vmul.f32 %v2154, 0.7978846
        %v2283 = vmul.f32 %v2155, 0.7978846
        %v2284 = vmul.f32 %v2156, 0.7978846
        %v2285 = vmul.f32 %v2157, 0.7978846
        %v2286 = vmul.f32 %v2158, 0.7978846
        %v2287 = vmul.f32 %v2159, 0.7978846
        %v2288 = vmul.f32 %v2160, 0.7978846
        %v2289 = vmul.f32 %v2161, 0.7978846
        %v2290 = vmul.f32 %v2162, 0.7978846
        %v2291 = vmul.f32 %v2163, 0.7978846
        %v2292 = vmul.f32 %v2164, 0.7978846
        %v2293 = vmul.f32 %v2165, 0.7978846
        %v2294 = vmul.f32 %v2166, 0.7978846
        %v2295 = vmul.f32 %v2167, 0.7978846
        %v2296 = vmul.f32 %v2168, 0.7978846
        %v2297 = vmul.f32 %v2169, 0.7978846
        %v2298 = vmul.f32 %v2170, 0.7978846
        %v2299 = vmul.f32 %v2171, 0.7978846
        %v2300 = vmul.f32 %v2172, 0.7978846
        %v2301 = vmul.f32 %v2173, 0.7978846
        %v2302 = vmul.f32 %v2174, 0.7978846
        %v2303 = vmul.f32 %v2175, 0.7978846
        %v2304 = vmul.f32 %v2176, 0.7978846
        %v2305 = vmul.f32 %v2177, 0.7978846
        %v2306 = vmul.f32 %v2178, 0.7978846
        %v2307 = vmul.f32 %v2179, 0.7978846
        %v2308 = vmul.f32 %v2180, 0.7978846
        %v2309 = vtanh.pop %v2181
        %v2310 = vtanh.pop %v2182
        %v2311 = vtanh.pop %v2183
        %v2312 = vtanh.pop %v2184
        %v2313 = vtanh.pop %v2185
        %v2314 = vtanh.pop %v2186
        %v2315 = vtanh.pop %v2187
        %v2316 = vtanh.pop %v2188
        %v2317 = vtanh.pop %v2189
        %v2318 = vtanh.pop %v2190
        %v2319 = vtanh.pop %v2191
        %v2320 = vtanh.pop %v2192
        %v2321 = vtanh.pop %v2193
        %v2322 = vtanh.pop %v2194
        %v2323 = vtanh.pop %v2195
        %v2324 = vtanh.pop %v2196
        %v2325 = vtanh.pop %v2197
        %v2326 = vtanh.pop %v2198
        %v2327 = vtanh.pop %v2199
        %v2328 = vtanh.pop %v2200
        %v2329 = vtanh.pop %v2201
        %v2330 = vtanh.pop %v2202
        %v2331 = vtanh.pop %v2203
        %v2332 = vtanh.pop %v2204
        %v2333 = vtanh.pop %v2205
        %v2334 = vtanh.pop %v2206
        %v2335 = vtanh.pop %v2207
        %v2336 = vtanh.pop %v2208
        %v2337 = vtanh.pop %v2209
        %v2338 = vtanh.pop %v2210
        %v2339 = vtanh.pop %v2211
        %v2340 = vtanh.pop %v2212
        %v2341 = vtanh.pop %v2213
        %v2342 = vtanh.pop %v2214
        %v2343 = vtanh.pop %v2215
        %v2344 = vtanh.pop %v2216
        %v2345 = vtanh.pop %v2217
        %v2346 = vtanh.pop %v2218
        %v2347 = vtanh.pop %v2219
        %v2348 = vtanh.pop %v2220
        %v2349 = vtanh.pop %v2221
        %v2350 = vtanh.pop %v2222
        %v2351 = vtanh.pop %v2223
        %v2352 = vtanh.pop %v2224
        %v2353 = vtanh.pop %v2225
        %v2354 = vtanh.pop %v2226
        %v2355 = vtanh.pop %v2227
        %v2356 = vtanh.pop %v2228
        %v2357 = vtanh.pop %v2229
        %v2358 = vtanh.pop %v2230
        %v2359 = vtanh.pop %v2231
        %v2360 = vtanh.pop %v2232
        %v2361 = vtanh.pop %v2233
        %v2362 = vtanh.pop %v2234
        %v2363 = vtanh.pop %v2235
        %v2364 = vtanh.pop %v2236
        %v2365 = vtanh.pop %v2237
        %v2366 = vtanh.pop %v2238
        %v2367 = vtanh.pop %v2239
        %v2368 = vtanh.pop %v2240
        %v2369 = vtanh.pop %v2241
        %v2370 = vtanh.pop %v2242
        %v2371 = vtanh.pop %v2243
        %v2372 = vtanh.pop %v2244
        %v2373 = vtanh.pop %v2245
        %v2374 = vtanh.pop %v2246
        %v2375 = vtanh.pop %v2247
        %v2376 = vtanh.pop %v2248
        %v2377 = vtanh.pop %v2249
        %v2378 = vtanh.pop %v2250
        %v2379 = vtanh.pop %v2251
        %v2380 = vtanh.pop %v2252
        %v2381 = vtanh.pop %v2253
        %v2382 = vtanh.pop %v2254
        %v2383 = vtanh.pop %v2255
        %v2384 = vtanh.pop %v2256
        %v2385 = vtanh.pop %v2257
        %v2386 = vtanh.pop %v2258
        %v2387 = vtanh.pop %v2259
        %v2388 = vtanh.pop %v2260
        %v2389 = vtanh.pop %v2261
        %v2390 = vtanh.pop %v2262
        %v2391 = vtanh.pop %v2263
        %v2392 = vtanh.pop %v2264
        %v2393 = vtanh.pop %v2265
        %v2394 = vtanh.pop %v2266
        %v2395 = vtanh.pop %v2267
        %v2396 = vtanh.pop %v2268
        %v2397 = vtanh.pop %v2269
        %v2398 = vtanh.pop %v2270
        %v2399 = vtanh.pop %v2271
        %v2400 = vtanh.pop %v2272
        %v2401 = vtanh.pop %v2273
        %v2402 = vtanh.pop %v2274
        %v2403 = vtanh.pop %v2275
        %v2404 = vtanh.pop %v2276
        %v2405 = vtanh.pop %v2277
        %v2406 = vtanh.pop %v2278
        %v2407 = vtanh.pop %v2279
        %v2408 = vtanh.pop %v2280
        %v2409 = vtanh.pop %v2281
        %v2410 = vtanh.pop %v2282
        %v2411 = vtanh.pop %v2283
        %v2412 = vtanh.pop %v2284
        %v2413 = vtanh.pop %v2285
        %v2414 = vtanh.pop %v2286
        %v2415 = vtanh.pop %v2287
        %v2416 = vtanh.pop %v2288
        %v2417 = vtanh.pop %v2289
        %v2418 = vtanh.pop %v2290
        %v2419 = vtanh.pop %v2291
        %v2420 = vtanh.pop %v2292
        %v2421 = vtanh.pop %v2293
        %v2422 = vtanh.pop %v2294
        %v2423 = vtanh.pop %v2295
        %v2424 = vtanh.pop %v2296
        %v2425 = vtanh.pop %v2297
        %v2426 = vtanh.pop %v2298
        %v2427 = vtanh.pop %v2299
        %v2428 = vtanh.pop %v2300
        %v2429 = vtanh.pop %v2301
        %v2430 = vtanh.pop %v2302
        %v2431 = vtanh.pop %v2303
        %v2432 = vtanh.pop %v2304
        %v2433 = vtanh.pop %v2305
        %v2434 = vtanh.pop %v2306
        %v2435 = vtanh.pop %v2307
        %v2436 = vtanh.pop %v2308
        %v2437 = vadd.f32 %v2309, 1.0
        %v2438 = vadd.f32 %v2310, 1.0
        %v2439 = vadd.f32 %v2311, 1.0
        %v2440 = vadd.f32 %v2312, 1.0
        %v2441 = vadd.f32 %v2313, 1.0
        %v2442 = vadd.f32 %v2314, 1.0
        %v2443 = vadd.f32 %v2315, 1.0
        %v2444 = vadd.f32 %v2316, 1.0
        %v2445 = vadd.f32 %v2317, 1.0
        %v2446 = vadd.f32 %v2318, 1.0
        %v2447 = vadd.f32 %v2319, 1.0
        %v2448 = vadd.f32 %v2320, 1.0
        %v2449 = vadd.f32 %v2321, 1.0
        %v2450 = vadd.f32 %v2322, 1.0
        %v2451 = vadd.f32 %v2323, 1.0
        %v2452 = vadd.f32 %v2324, 1.0
        %v2453 = vadd.f32 %v2325, 1.0
        %v2454 = vadd.f32 %v2326, 1.0
        %v2455 = vadd.f32 %v2327, 1.0
        %v2456 = vadd.f32 %v2328, 1.0
        %v2457 = vadd.f32 %v2329, 1.0
        %v2458 = vadd.f32 %v2330, 1.0
        %v2459 = vadd.f32 %v2331, 1.0
        %v2460 = vadd.f32 %v2332, 1.0
        %v2461 = vadd.f32 %v2333, 1.0
        %v2462 = vadd.f32 %v2334, 1.0
        %v2463 = vadd.f32 %v2335, 1.0
        %v2464 = vadd.f32 %v2336, 1.0
        %v2465 = vadd.f32 %v2337, 1.0
        %v2466 = vadd.f32 %v2338, 1.0
        %v2467 = vadd.f32 %v2339, 1.0
        %v2468 = vadd.f32 %v2340, 1.0
        %v2469 = vadd.f32 %v2341, 1.0
        %v2470 = vadd.f32 %v2342, 1.0
        %v2471 = vadd.f32 %v2343, 1.0
        %v2472 = vadd.f32 %v2344, 1.0
        %v2473 = vadd.f32 %v2345, 1.0
        %v2474 = vadd.f32 %v2346, 1.0
        %v2475 = vadd.f32 %v2347, 1.0
        %v2476 = vadd.f32 %v2348, 1.0
        %v2477 = vadd.f32 %v2349, 1.0
        %v2478 = vadd.f32 %v2350, 1.0
        %v2479 = vadd.f32 %v2351, 1.0
        %v2480 = vadd.f32 %v2352, 1.0
        %v2481 = vadd.f32 %v2353, 1.0
        %v2482 = vadd.f32 %v2354, 1.0
        %v2483 = vadd.f32 %v2355, 1.0
        %v2484 = vadd.f32 %v2356, 1.0
        %v2485 = vadd.f32 %v2357, 1.0
        %v2486 = vadd.f32 %v2358, 1.0
        %v2487 = vadd.f32 %v2359, 1.0
        %v2488 = vadd.f32 %v2360, 1.0
        %v2489 = vadd.f32 %v2361, 1.0
        %v2490 = vadd.f32 %v2362, 1.0
        %v2491 = vadd.f32 %v2363, 1.0
        %v2492 = vadd.f32 %v2364, 1.0
        %v2493 = vadd.f32 %v2365, 1.0
        %v2494 = vadd.f32 %v2366, 1.0
        %v2495 = vadd.f32 %v2367, 1.0
        %v2496 = vadd.f32 %v2368, 1.0
        %v2497 = vadd.f32 %v2369, 1.0
        %v2498 = vadd.f32 %v2370, 1.0
        %v2499 = vadd.f32 %v2371, 1.0
        %v2500 = vadd.f32 %v2372, 1.0
        %v2501 = vadd.f32 %v2373, 1.0
        %v2502 = vadd.f32 %v2374, 1.0
        %v2503 = vadd.f32 %v2375, 1.0
        %v2504 = vadd.f32 %v2376, 1.0
        %v2505 = vadd.f32 %v2377, 1.0
        %v2506 = vadd.f32 %v2378, 1.0
        %v2507 = vadd.f32 %v2379, 1.0
        %v2508 = vadd.f32 %v2380, 1.0
        %v2509 = vadd.f32 %v2381, 1.0
        %v2510 = vadd.f32 %v2382, 1.0
        %v2511 = vadd.f32 %v2383, 1.0
        %v2512 = vadd.f32 %v2384, 1.0
        %v2513 = vadd.f32 %v2385, 1.0
        %v2514 = vadd.f32 %v2386, 1.0
        %v2515 = vadd.f32 %v2387, 1.0
        %v2516 = vadd.f32 %v2388, 1.0
        %v2517 = vadd.f32 %v2389, 1.0
        %v2518 = vadd.f32 %v2390, 1.0
        %v2519 = vadd.f32 %v2391, 1.0
        %v2520 = vadd.f32 %v2392, 1.0
        %v2521 = vadd.f32 %v2393, 1.0
        %v2522 = vadd.f32 %v2394, 1.0
        %v2523 = vadd.f32 %v2395, 1.0
        %v2524 = vadd.f32 %v2396, 1.0
        %v2525 = vadd.f32 %v2397, 1.0
        %v2526 = vadd.f32 %v2398, 1.0
        %v2527 = vadd.f32 %v2399, 1.0
        %v2528 = vadd.f32 %v2400, 1.0
        %v2529 = vadd.f32 %v2401, 1.0
        %v2530 = vadd.f32 %v2402, 1.0
        %v2531 = vadd.f32 %v2403, 1.0
        %v2532 = vadd.f32 %v2404, 1.0
        %v2533 = vadd.f32 %v2405, 1.0
        %v2534 = vadd.f32 %v2406, 1.0
        %v2535 = vadd.f32 %v2407, 1.0
        %v2536 = vadd.f32 %v2408, 1.0
        %v2537 = vadd.f32 %v2409, 1.0
        %v2538 = vadd.f32 %v2410, 1.0
        %v2539 = vadd.f32 %v2411, 1.0
        %v2540 = vadd.f32 %v2412, 1.0
        %v2541 = vadd.f32 %v2413, 1.0
        %v2542 = vadd.f32 %v2414, 1.0
        %v2543 = vadd.f32 %v2415, 1.0
        %v2544 = vadd.f32 %v2416, 1.0
        %v2545 = vadd.f32 %v2417, 1.0
        %v2546 = vadd.f32 %v2418, 1.0
        %v2547 = vadd.f32 %v2419, 1.0
        %v2548 = vadd.f32 %v2420, 1.0
        %v2549 = vadd.f32 %v2421, 1.0
        %v2550 = vadd.f32 %v2422, 1.0
        %v2551 = vadd.f32 %v2423, 1.0
        %v2552 = vadd.f32 %v2424, 1.0
        %v2553 = vadd.f32 %v2425, 1.0
        %v2554 = vadd.f32 %v2426, 1.0
        %v2555 = vadd.f32 %v2427, 1.0
        %v2556 = vadd.f32 %v2428, 1.0
        %v2557 = vadd.f32 %v2429, 1.0
        %v2558 = vadd.f32 %v2430, 1.0
        %v2559 = vadd.f32 %v2431, 1.0
        %v2560 = vadd.f32 %v2432, 1.0
        %v2561 = vadd.f32 %v2433, 1.0
        %v2562 = vadd.f32 %v2434, 1.0
        %v2563 = vadd.f32 %v2435, 1.0
        %v2564 = vadd.f32 %v2436, 1.0
        %v2565 = vmul.f32 %v2437, 0.5
        %v2566 = vmul.f32 %v2438, 0.5
        %v2567 = vmul.f32 %v2439, 0.5
        %v2568 = vmul.f32 %v2440, 0.5
        %v2569 = vmul.f32 %v2441, 0.5
        %v2570 = vmul.f32 %v2442, 0.5
        %v2571 = vmul.f32 %v2443, 0.5
        %v2572 = vmul.f32 %v2444, 0.5
        %v2573 = vmul.f32 %v2445, 0.5
        %v2574 = vmul.f32 %v2446, 0.5
        %v2575 = vmul.f32 %v2447, 0.5
        %v2576 = vmul.f32 %v2448, 0.5
        %v2577 = vmul.f32 %v2449, 0.5
        %v2578 = vmul.f32 %v2450, 0.5
        %v2579 = vmul.f32 %v2451, 0.5
        %v2580 = vmul.f32 %v2452, 0.5
        %v2581 = vmul.f32 %v2453, 0.5
        %v2582 = vmul.f32 %v2454, 0.5
        %v2583 = vmul.f32 %v2455, 0.5
        %v2584 = vmul.f32 %v2456, 0.5
        %v2585 = vmul.f32 %v2457, 0.5
        %v2586 = vmul.f32 %v2458, 0.5
        %v2587 = vmul.f32 %v2459, 0.5
        %v2588 = vmul.f32 %v2460, 0.5
        %v2589 = vmul.f32 %v2461, 0.5
        %v2590 = vmul.f32 %v2462, 0.5
        %v2591 = vmul.f32 %v2463, 0.5
        %v2592 = vmul.f32 %v2464, 0.5
        %v2593 = vmul.f32 %v2465, 0.5
        %v2594 = vmul.f32 %v2466, 0.5
        %v2595 = vmul.f32 %v2467, 0.5
        %v2596 = vmul.f32 %v2468, 0.5
        %v2597 = vmul.f32 %v2469, 0.5
        %v2598 = vmul.f32 %v2470, 0.5
        %v2599 = vmul.f32 %v2471, 0.5
        %v2600 = vmul.f32 %v2472, 0.5
        %v2601 = vmul.f32 %v2473, 0.5
        %v2602 = vmul.f32 %v2474, 0.5
        %v2603 = vmul.f32 %v2475, 0.5
        %v2604 = vmul.f32 %v2476, 0.5
        %v2605 = vmul.f32 %v2477, 0.5
        %v2606 = vmul.f32 %v2478, 0.5
        %v2607 = vmul.f32 %v2479, 0.5
        %v2608 = vmul.f32 %v2480, 0.5
        %v2609 = vmul.f32 %v2481, 0.5
        %v2610 = vmul.f32 %v2482, 0.5
        %v2611 = vmul.f32 %v2483, 0.5
        %v2612 = vmul.f32 %v2484, 0.5
        %v2613 = vmul.f32 %v2485, 0.5
        %v2614 = vmul.f32 %v2486, 0.5
        %v2615 = vmul.f32 %v2487, 0.5
        %v2616 = vmul.f32 %v2488, 0.5
        %v2617 = vmul.f32 %v2489, 0.5
        %v2618 = vmul.f32 %v2490, 0.5
        %v2619 = vmul.f32 %v2491, 0.5
        %v2620 = vmul.f32 %v2492, 0.5
        %v2621 = vmul.f32 %v2493, 0.5
        %v2622 = vmul.f32 %v2494, 0.5
        %v2623 = vmul.f32 %v2495, 0.5
        %v2624 = vmul.f32 %v2496, 0.5
        %v2625 = vmul.f32 %v2497, 0.5
        %v2626 = vmul.f32 %v2498, 0.5
        %v2627 = vmul.f32 %v2499, 0.5
        %v2628 = vmul.f32 %v2500, 0.5
        %v2629 = vmul.f32 %v2501, 0.5
        %v2630 = vmul.f32 %v2502, 0.5
        %v2631 = vmul.f32 %v2503, 0.5
        %v2632 = vmul.f32 %v2504, 0.5
        %v2633 = vmul.f32 %v2505, 0.5
        %v2634 = vmul.f32 %v2506, 0.5
        %v2635 = vmul.f32 %v2507, 0.5
        %v2636 = vmul.f32 %v2508, 0.5
        %v2637 = vmul.f32 %v2509, 0.5
        %v2638 = vmul.f32 %v2510, 0.5
        %v2639 = vmul.f32 %v2511, 0.5
        %v2640 = vmul.f32 %v2512, 0.5
        %v2641 = vmul.f32 %v2513, 0.5
        %v2642 = vmul.f32 %v2514, 0.5
        %v2643 = vmul.f32 %v2515, 0.5
        %v2644 = vmul.f32 %v2516, 0.5
        %v2645 = vmul.f32 %v2517, 0.5
        %v2646 = vmul.f32 %v2518, 0.5
        %v2647 = vmul.f32 %v2519, 0.5
        %v2648 = vmul.f32 %v2520, 0.5
        %v2649 = vmul.f32 %v2521, 0.5
        %v2650 = vmul.f32 %v2522, 0.5
        %v2651 = vmul.f32 %v2523, 0.5
        %v2652 = vmul.f32 %v2524, 0.5
        %v2653 = vmul.f32 %v2525, 0.5
        %v2654 = vmul.f32 %v2526, 0.5
        %v2655 = vmul.f32 %v2527, 0.5
        %v2656 = vmul.f32 %v2528, 0.5
        %v2657 = vmul.f32 %v2529, 0.5
        %v2658 = vmul.f32 %v2530, 0.5
        %v2659 = vmul.f32 %v2531, 0.5
        %v2660 = vmul.f32 %v2532, 0.5
        %v2661 = vmul.f32 %v2533, 0.5
        %v2662 = vmul.f32 %v2534, 0.5
        %v2663 = vmul.f32 %v2535, 0.5
        %v2664 = vmul.f32 %v2536, 0.5
        %v2665 = vmul.f32 %v2537, 0.5
        %v2666 = vmul.f32 %v2538, 0.5
        %v2667 = vmul.f32 %v2539, 0.5
        %v2668 = vmul.f32 %v2540, 0.5
        %v2669 = vmul.f32 %v2541, 0.5
        %v2670 = vmul.f32 %v2542, 0.5
        %v2671 = vmul.f32 %v2543, 0.5
        %v2672 = vmul.f32 %v2544, 0.5
        %v2673 = vmul.f32 %v2545, 0.5
        %v2674 = vmul.f32 %v2546, 0.5
        %v2675 = vmul.f32 %v2547, 0.5
        %v2676 = vmul.f32 %v2548, 0.5
        %v2677 = vmul.f32 %v2549, 0.5
        %v2678 = vmul.f32 %v2550, 0.5
        %v2679 = vmul.f32 %v2551, 0.5
        %v2680 = vmul.f32 %v2552, 0.5
        %v2681 = vmul.f32 %v2553, 0.5
        %v2682 = vmul.f32 %v2554, 0.5
        %v2683 = vmul.f32 %v2555, 0.5
        %v2684 = vmul.f32 %v2556, 0.5
        %v2685 = vmul.f32 %v2557, 0.5
        %v2686 = vmul.f32 %v2558, 0.5
        %v2687 = vmul.f32 %v2559, 0.5
        %v2688 = vmul.f32 %v2560, 0.5
        %v2689 = vmul.f32 %v2561, 0.5
        %v2690 = vmul.f32 %v2562, 0.5
        %v2691 = vmul.f32 %v2563, 0.5
        %v2692 = vmul.f32 %v2564, 0.5
        %v2693 = vmul.f32 %v1318, %v2565
        %v2694 = vmul.f32 %v1320, %v2566
        %v2695 = vmul.f32 %v1511, %v2567
        %v2696 = vmul.f32 %v1513, %v2568
        %v2697 = vmul.f32 %v1322, %v2569
        %v2698 = vmul.f32 %v1324, %v2570
        %v2699 = vmul.f32 %v1515, %v2571
        %v2700 = vmul.f32 %v1517, %v2572
        %v2701 = vmul.f32 %v1328, %v2573
        %v2702 = vmul.f32 %v1330, %v2574
        %v2703 = vmul.f32 %v1521, %v2575
        %v2704 = vmul.f32 %v1523, %v2576
        %v2705 = vmul.f32 %v1332, %v2577
        %v2706 = vmul.f32 %v1334, %v2578
        %v2707 = vmul.f32 %v1525, %v2579
        %v2708 = vmul.f32 %v1527, %v2580
        %v2709 = vmul.f32 %v1338, %v2581
        %v2710 = vmul.f32 %v1340, %v2582
        %v2711 = vmul.f32 %v1531, %v2583
        %v2712 = vmul.f32 %v1533, %v2584
        %v2713 = vmul.f32 %v1342, %v2585
        %v2714 = vmul.f32 %v1344, %v2586
        %v2715 = vmul.f32 %v1535, %v2587
        %v2716 = vmul.f32 %v1537, %v2588
        %v2717 = vmul.f32 %v1348, %v2589
        %v2718 = vmul.f32 %v1350, %v2590
        %v2719 = vmul.f32 %v1541, %v2591
        %v2720 = vmul.f32 %v1543, %v2592
        %v2721 = vmul.f32 %v1352, %v2593
        %v2722 = vmul.f32 %v1354, %v2594
        %v2723 = vmul.f32 %v1545, %v2595
        %v2724 = vmul.f32 %v1547, %v2596
        %v2725 = vmul.f32 %v1358, %v2597
        %v2726 = vmul.f32 %v1360, %v2598
        %v2727 = vmul.f32 %v1551, %v2599
        %v2728 = vmul.f32 %v1553, %v2600
        %v2729 = vmul.f32 %v1362, %v2601
        %v2730 = vmul.f32 %v1364, %v2602
        %v2731 = vmul.f32 %v1555, %v2603
        %v2732 = vmul.f32 %v1557, %v2604
        %v2733 = vmul.f32 %v1368, %v2605
        %v2734 = vmul.f32 %v1370, %v2606
        %v2735 = vmul.f32 %v1561, %v2607
        %v2736 = vmul.f32 %v1563, %v2608
        %v2737 = vmul.f32 %v1372, %v2609
        %v2738 = vmul.f32 %v1374, %v2610
        %v2739 = vmul.f32 %v1565, %v2611
        %v2740 = vmul.f32 %v1567, %v2612
        %v2741 = vmul.f32 %v1378, %v2613
        %v2742 = vmul.f32 %v1380, %v2614
        %v2743 = vmul.f32 %v1571, %v2615
        %v2744 = vmul.f32 %v1573, %v2616
        %v2745 = vmul.f32 %v1382, %v2617
        %v2746 = vmul.f32 %v1384, %v2618
        %v2747 = vmul.f32 %v1575, %v2619
        %v2748 = vmul.f32 %v1577, %v2620
        %v2749 = vmul.f32 %v1388, %v2621
        %v2750 = vmul.f32 %v1390, %v2622
        %v2751 = vmul.f32 %v1581, %v2623
        %v2752 = vmul.f32 %v1583, %v2624
        %v2753 = vmul.f32 %v1392, %v2625
        %v2754 = vmul.f32 %v1394, %v2626
        %v2755 = vmul.f32 %v1585, %v2627
        %v2756 = vmul.f32 %v1587, %v2628
        %v2757 = vmul.f32 %v1398, %v2629
        %v2758 = vmul.f32 %v1400, %v2630
        %v2759 = vmul.f32 %v1591, %v2631
        %v2760 = vmul.f32 %v1593, %v2632
        %v2761 = vmul.f32 %v1402, %v2633
        %v2762 = vmul.f32 %v1404, %v2634
        %v2763 = vmul.f32 %v1595, %v2635
        %v2764 = vmul.f32 %v1597, %v2636
        %v2765 = vmul.f32 %v1408, %v2637
        %v2766 = vmul.f32 %v1410, %v2638
        %v2767 = vmul.f32 %v1601, %v2639
        %v2768 = vmul.f32 %v1603, %v2640
        %v2769 = vmul.f32 %v1412, %v2641
        %v2770 = vmul.f32 %v1414, %v2642
        %v2771 = vmul.f32 %v1605, %v2643
        %v2772 = vmul.f32 %v1607, %v2644
        %v2773 = vmul.f32 %v1418, %v2645
        %v2774 = vmul.f32 %v1420, %v2646
        %v2775 = vmul.f32 %v1611, %v2647
        %v2776 = vmul.f32 %v1613, %v2648
        %v2777 = vmul.f32 %v1422, %v2649
        %v2778 = vmul.f32 %v1424, %v2650
        %v2779 = vmul.f32 %v1615, %v2651
        %v2780 = vmul.f32 %v1617, %v2652
        %v2781 = vmul.f32 %v1428, %v2653
        %v2782 = vmul.f32 %v1430, %v2654
        %v2783 = vmul.f32 %v1621, %v2655
        %v2784 = vmul.f32 %v1623, %v2656
        %v2785 = vmul.f32 %v1432, %v2657
        %v2786 = vmul.f32 %v1434, %v2658
        %v2787 = vmul.f32 %v1625, %v2659
        %v2788 = vmul.f32 %v1627, %v2660
        %v2789 = vmul.f32 %v1438, %v2661
        %v2790 = vmul.f32 %v1440, %v2662
        %v2791 = vmul.f32 %v1631, %v2663
        %v2792 = vmul.f32 %v1633, %v2664
        %v2793 = vmul.f32 %v1442, %v2665
        %v2794 = vmul.f32 %v1444, %v2666
        %v2795 = vmul.f32 %v1635, %v2667
        %v2796 = vmul.f32 %v1637, %v2668
        %v2797 = vmul.f32 %v1448, %v2669
        %v2798 = vmul.f32 %v1450, %v2670
        %v2799 = vmul.f32 %v1641, %v2671
        %v2800 = vmul.f32 %v1643, %v2672
        %v2801 = vmul.f32 %v1452, %v2673
        %v2802 = vmul.f32 %v1454, %v2674
        %v2803 = vmul.f32 %v1645, %v2675
        %v2804 = vmul.f32 %v1647, %v2676
        %v2805 = vmul.f32 %v1458, %v2677
        %v2806 = vmul.f32 %v1460, %v2678
        %v2807 = vmul.f32 %v1651, %v2679
        %v2808 = vmul.f32 %v1653, %v2680
        %v2809 = vmul.f32 %v1462, %v2681
        %v2810 = vmul.f32 %v1464, %v2682
        %v2811 = vmul.f32 %v1655, %v2683
        %v2812 = vmul.f32 %v1657, %v2684
        %v2813 = vmul.f32 %v1468, %v2685
        %v2814 = vmul.f32 %v1470, %v2686
        %v2815 = vmul.f32 %v1661, %v2687
        %v2816 = vmul.f32 %v1663, %v2688
        %v2817 = vmul.f32 %v1472, %v2689
        %v2818 = vmul.f32 %v1474, %v2690
        %v2819 = vmul.f32 %v1665, %v2691
        %v2820 = vmul.f32 %v1667, %v2692
        %v2821 = vld [vmem:[#allocation3] sm:$0xff]
        %v2822 = vld [vmem:[#allocation3 + $0x8] sm:$0xff]
        %v2823 = vld [vmem:[#allocation3 + $0x10] sm:$0xff]
        %v2824 = vld [vmem:[#allocation3 + $0x18] sm:$0xff]
        %v2825 = vld [vmem:[#allocation3 + $0x20] sm:$0xff]
        %v2826 = vld [vmem:[#allocation3 + $0x28] sm:$0xff]
        %v2827 = vld [vmem:[#allocation3 + $0x30] sm:$0xff]
        %v2828 = vld [vmem:[#allocation3 + $0x38] sm:$0xff]
        %v2829 = vld [vmem:[#allocation3 + $0x40] sm:$0xff]
        %v2830 = vld [vmem:[#allocation3 + $0x48] sm:$0xff]
        %v2831 = vld [vmem:[#allocation3 + $0x50] sm:$0xff]
        %v2832 = vld [vmem:[#allocation3 + $0x58] sm:$0xff]
        %v2833 = vld [vmem:[#allocation3 + $0x60] sm:$0xff]
        %v2834 = vld [vmem:[#allocation3 + $0x68] sm:$0xff]
        %v2835 = vld [vmem:[#allocation3 + $0x70] sm:$0xff]
        %v2836 = vld [vmem:[#allocation3 + $0x78] sm:$0xff]
        %v2837 = vld [vmem:[#allocation3 + $0x80] sm:$0xff]
        %v2838 = vld [vmem:[#allocation3 + $0x88] sm:$0xff]
        %v2839 = vld [vmem:[#allocation3 + $0x90] sm:$0xff]
        %v2840 = vld [vmem:[#allocation3 + $0x98] sm:$0xff]
        %v2841 = vld [vmem:[#allocation3 + $0xa0] sm:$0xff]
        %v2842 = vld [vmem:[#allocation3 + $0xa8] sm:$0xff]
        %v2843 = vld [vmem:[#allocation3 + $0xb0] sm:$0xff]
        %v2844 = vld [vmem:[#allocation3 + $0xb8] sm:$0xff]
        %v2845 = vld [vmem:[#allocation3 + $0xc0] sm:$0xff]
        %v2846 = vld [vmem:[#allocation3 + $0xc8] sm:$0xff]
        %v2847 = vld [vmem:[#allocation3 + $0xd0] sm:$0xff]
        %v2848 = vld [vmem:[#allocation3 + $0xd8] sm:$0xff]
        %v2849 = vld [vmem:[#allocation3 + $0xe0] sm:$0xff]
        %v2850 = vld [vmem:[#allocation3 + $0xe8] sm:$0xff]
        %v2851 = vld [vmem:[#allocation3 + $0xf0] sm:$0xff]
        %v2852 = vld [vmem:[#allocation3 + $0xf8] sm:$0xff]
        %v2853 = vpack.c.bf16 %v2697, %v2693
        %v2854 = vpack.c.bf16 %v2698, %v2694
        %v2855 = vpack.c.bf16 %v2699, %v2695
        %v2856 = vpack.c.bf16 %v2700, %v2696
        %v2857 = vpack.c.bf16 %v2705, %v2701
        %v2858 = vpack.c.bf16 %v2706, %v2702
        %v2859 = vpack.c.bf16 %v2707, %v2703
        %v2860 = vpack.c.bf16 %v2708, %v2704
        %v2861 = vpack.c.bf16 %v2713, %v2709
        %v2862 = vpack.c.bf16 %v2714, %v2710
        %v2863 = vpack.c.bf16 %v2715, %v2711
        %v2864 = vpack.c.bf16 %v2716, %v2712
        %v2865 = vpack.c.bf16 %v2721, %v2717
        %v2866 = vpack.c.bf16 %v2722, %v2718
        %v2867 = vpack.c.bf16 %v2723, %v2719
        %v2868 = vpack.c.bf16 %v2724, %v2720
        %v2869 = vpack.c.bf16 %v2729, %v2725
        %v2870 = vpack.c.bf16 %v2730, %v2726
        %v2871 = vpack.c.bf16 %v2731, %v2727
        %v2872 = vpack.c.bf16 %v2732, %v2728
        %v2873 = vpack.c.bf16 %v2737, %v2733
        %v2874 = vpack.c.bf16 %v2738, %v2734
        %v2875 = vpack.c.bf16 %v2739, %v2735
        %v2876 = vpack.c.bf16 %v2740, %v2736
        %v2877 = vpack.c.bf16 %v2745, %v2741
        %v2878 = vpack.c.bf16 %v2746, %v2742
        %v2879 = vpack.c.bf16 %v2747, %v2743
        %v2880 = vpack.c.bf16 %v2748, %v2744
        %v2881 = vpack.c.bf16 %v2753, %v2749
        %v2882 = vpack.c.bf16 %v2754, %v2750
        %v2883 = vpack.c.bf16 %v2755, %v2751
        %v2884 = vpack.c.bf16 %v2756, %v2752
        %v2885 = vpack.c.bf16 %v2761, %v2757
        %v2886 = vpack.c.bf16 %v2762, %v2758
        %v2887 = vpack.c.bf16 %v2763, %v2759
        %v2888 = vpack.c.bf16 %v2764, %v2760
        %v2889 = vpack.c.bf16 %v2769, %v2765
        %v2890 = vpack.c.bf16 %v2770, %v2766
        %v2891 = vpack.c.bf16 %v2771, %v2767
        %v2892 = vpack.c.bf16 %v2772, %v2768
        %v2893 = vpack.c.bf16 %v2777, %v2773
        %v2894 = vpack.c.bf16 %v2778, %v2774
        %v2895 = vpack.c.bf16 %v2779, %v2775
        %v2896 = vpack.c.bf16 %v2780, %v2776
        %v2897 = vpack.c.bf16 %v2785, %v2781
        %v2898 = vpack.c.bf16 %v2786, %v2782
        %v2899 = vpack.c.bf16 %v2787, %v2783
        %v2900 = vpack.c.bf16 %v2788, %v2784
        %v2901 = vpack.c.bf16 %v2793, %v2789
        %v2902 = vpack.c.bf16 %v2794, %v2790
        %v2903 = vpack.c.bf16 %v2795, %v2791
        %v2904 = vpack.c.bf16 %v2796, %v2792
        %v2905 = vpack.c.bf16 %v2801, %v2797
        %v2906 = vpack.c.bf16 %v2802, %v2798
        %v2907 = vpack.c.bf16 %v2803, %v2799
        %v2908 = vpack.c.bf16 %v2804, %v2800
        %v2909 = vpack.c.bf16 %v2809, %v2805
        %v2910 = vpack.c.bf16 %v2810, %v2806
        %v2911 = vpack.c.bf16 %v2811, %v2807
        %v2912 = vpack.c.bf16 %v2812, %v2808
        %v2913 = vpack.c.bf16 %v2817, %v2813
        %v2914 = vpack.c.bf16 %v2818, %v2814
        %v2915 = vpack.c.bf16 %v2819, %v2815
        %v2916 = vpack.c.bf16 %v2820, %v2816
        %v2917 = vld [vmem:[#allocation9] sm:$0xf]
        %v2918 = vld [vmem:[#allocation9 + $0x4] sm:$0xf]
        %v2919 = vld [vmem:[#allocation9 + $0x8] sm:$0xf]
        %v2920 = vld [vmem:[#allocation9 + $0xc] sm:$0xf]
        %v2921 = vld [vmem:[#allocation9 + $0x10] sm:$0xf]
        %v2922 = vld [vmem:[#allocation9 + $0x14] sm:$0xf]
        %v2923 = vld [vmem:[#allocation9 + $0x18] sm:$0xf]
        %v2924 = vld [vmem:[#allocation9 + $0x1c] sm:$0xf]
        %v2925 = vld [vmem:[#allocation9 + $0x20] sm:$0xf]
        %v2926 = vld [vmem:[#allocation9 + $0x24] sm:$0xf]
        %v2927 = vld [vmem:[#allocation9 + $0x28] sm:$0xf]
        %v2928 = vld [vmem:[#allocation9 + $0x2c] sm:$0xf]
        %v2929 = vld [vmem:[#allocation9 + $0x30] sm:$0xf]
        %v2930 = vld [vmem:[#allocation9 + $0x34] sm:$0xf]
        %v2931 = vld [vmem:[#allocation9 + $0x38] sm:$0xf]
        %v2932 = vld [vmem:[#allocation9 + $0x3c] sm:$0xf]
        %v2933 = vld [vmem:[#allocation9 + $0x40] sm:$0xf]
        %v2934 = vld [vmem:[#allocation9 + $0x44] sm:$0xf]
        %v2935 = vld [vmem:[#allocation9 + $0x48] sm:$0xf]
        %v2936 = vld [vmem:[#allocation9 + $0x4c] sm:$0xf]
        %v2937 = vld [vmem:[#allocation9 + $0x50] sm:$0xf]
        %v2938 = vld [vmem:[#allocation9 + $0x54] sm:$0xf]
        %v2939 = vld [vmem:[#allocation9 + $0x58] sm:$0xf]
        %v2940 = vld [vmem:[#allocation9 + $0x5c] sm:$0xf]
        %v2941 = vld [vmem:[#allocation9 + $0x60] sm:$0xf]
        %v2942 = vld [vmem:[#allocation9 + $0x64] sm:$0xf]
        %v2943 = vld [vmem:[#allocation9 + $0x68] sm:$0xf]
        %v2944 = vld [vmem:[#allocation9 + $0x6c] sm:$0xf]
        %v2945 = vld [vmem:[#allocation9 + $0x70] sm:$0xf]
        %v2946 = vld [vmem:[#allocation9 + $0x74] sm:$0xf]
        %v2947 = vld [vmem:[#allocation9 + $0x78] sm:$0xf]
        %v2948 = vld [vmem:[#allocation9 + $0x7c] sm:$0xf]
        %v2949 = vld [vmem:[#allocation9 + $0x80] sm:$0xf]
        %v2950 = vld [vmem:[#allocation9 + $0x84] sm:$0xf]
        %v2951 = vld [vmem:[#allocation9 + $0x88] sm:$0xf]
        %v2952 = vld [vmem:[#allocation9 + $0x8c] sm:$0xf]
        %v2953 = vld [vmem:[#allocation9 + $0x90] sm:$0xf]
        %v2954 = vld [vmem:[#allocation9 + $0x94] sm:$0xf]
        %v2955 = vld [vmem:[#allocation9 + $0x98] sm:$0xf]
        %v2956 = vld [vmem:[#allocation9 + $0x9c] sm:$0xf]
        %v2957 = vld [vmem:[#allocation9 + $0xa0] sm:$0xf]
        %v2958 = vld [vmem:[#allocation9 + $0xa4] sm:$0xf]
        %v2959 = vld [vmem:[#allocation9 + $0xa8] sm:$0xf]
        %v2960 = vld [vmem:[#allocation9 + $0xac] sm:$0xf]
        %v2961 = vld [vmem:[#allocation9 + $0xb0] sm:$0xf]
        %v2962 = vld [vmem:[#allocation9 + $0xb4] sm:$0xf]
        %v2963 = vld [vmem:[#allocation9 + $0xb8] sm:$0xf]
        %v2964 = vld [vmem:[#allocation9 + $0xbc] sm:$0xf]
        %v2965 = vld [vmem:[#allocation9 + $0xc0] sm:$0xf]
        %v2966 = vld [vmem:[#allocation9 + $0xc4] sm:$0xf]
        %v2967 = vld [vmem:[#allocation9 + $0xc8] sm:$0xf]
        %v2968 = vld [vmem:[#allocation9 + $0xcc] sm:$0xf]
        %v2969 = vld [vmem:[#allocation9 + $0xd0] sm:$0xf]
        %v2970 = vld [vmem:[#allocation9 + $0xd4] sm:$0xf]
        %v2971 = vld [vmem:[#allocation9 + $0xd8] sm:$0xf]
        %v2972 = vld [vmem:[#allocation9 + $0xdc] sm:$0xf]
        %v2973 = vld [vmem:[#allocation9 + $0xe0] sm:$0xf]
        %v2974 = vld [vmem:[#allocation9 + $0xe4] sm:$0xf]
        %v2975 = vld [vmem:[#allocation9 + $0xe8] sm:$0xf]
        %v2976 = vld [vmem:[#allocation9 + $0xec] sm:$0xf]
        %v2977 = vld [vmem:[#allocation9 + $0xf0] sm:$0xf]
        %v2978 = vld [vmem:[#allocation9 + $0xf4] sm:$0xf]
        %v2979 = vld [vmem:[#allocation9 + $0xf8] sm:$0xf]
        %v2980 = vld [vmem:[#allocation9 + $0xfc] sm:$0xf]
        %v3045 = vunpack.c.l.b16 %v2917
        %v3046 = vunpack.c.l.b16 %v2918
        %v3047 = vunpack.c.l.b16 %v2919
        %v3048 = vunpack.c.l.b16 %v2920
        %v3049 = vunpack.c.l.b16 %v2921
        %v3050 = vunpack.c.l.b16 %v2922
        %v3051 = vunpack.c.l.b16 %v2923
        %v3052 = vunpack.c.l.b16 %v2924
        %v3053 = vunpack.c.l.b16 %v2925
        %v3054 = vunpack.c.l.b16 %v2926
        %v3055 = vunpack.c.l.b16 %v2927
        %v3056 = vunpack.c.l.b16 %v2928
        %v3057 = vunpack.c.l.b16 %v2929
        %v3058 = vunpack.c.l.b16 %v2930
        %v3059 = vunpack.c.l.b16 %v2931
        %v3060 = vunpack.c.l.b16 %v2932
        %v3061 = vunpack.c.l.b16 %v2933
        %v3062 = vunpack.c.l.b16 %v2934
        %v3063 = vunpack.c.l.b16 %v2935
        %v3064 = vunpack.c.l.b16 %v2936
        %v3065 = vunpack.c.l.b16 %v2937
        %v3066 = vunpack.c.l.b16 %v2938
        %v3067 = vunpack.c.l.b16 %v2939
        %v3068 = vunpack.c.l.b16 %v2940
        %v3069 = vunpack.c.l.b16 %v2941
        %v3070 = vunpack.c.l.b16 %v2942
        %v3071 = vunpack.c.l.b16 %v2943
        %v3072 = vunpack.c.l.b16 %v2944
        %v3073 = vunpack.c.l.b16 %v2945
        %v3074 = vunpack.c.l.b16 %v2946
        %v3075 = vunpack.c.l.b16 %v2947
        %v3076 = vunpack.c.l.b16 %v2948
        %v3077 = vunpack.c.l.b16 %v2949
        %v3078 = vunpack.c.l.b16 %v2950
        %v3079 = vunpack.c.l.b16 %v2951
        %v3080 = vunpack.c.l.b16 %v2952
        %v3081 = vunpack.c.l.b16 %v2953
        %v3082 = vunpack.c.l.b16 %v2954
        %v3083 = vunpack.c.l.b16 %v2955
        %v3084 = vunpack.c.l.b16 %v2956
        %v3085 = vunpack.c.l.b16 %v2957
        %v3086 = vunpack.c.l.b16 %v2958
        %v3087 = vunpack.c.l.b16 %v2959
        %v3088 = vunpack.c.l.b16 %v2960
        %v3089 = vunpack.c.l.b16 %v2961
        %v3090 = vunpack.c.l.b16 %v2962
        %v3091 = vunpack.c.l.b16 %v2963
        %v3092 = vunpack.c.l.b16 %v2964
        %v3093 = vunpack.c.l.b16 %v2965
        %v3094 = vunpack.c.l.b16 %v2966
        %v3095 = vunpack.c.l.b16 %v2967
        %v3096 = vunpack.c.l.b16 %v2968
        %v3097 = vunpack.c.l.b16 %v2969
        %v3098 = vunpack.c.l.b16 %v2970
        %v3099 = vunpack.c.l.b16 %v2971
        %v3100 = vunpack.c.l.b16 %v2972
        %v3101 = vunpack.c.l.b16 %v2973
        %v3102 = vunpack.c.l.b16 %v2974
        %v3103 = vunpack.c.l.b16 %v2975
        %v3104 = vunpack.c.l.b16 %v2976
        %v3105 = vunpack.c.l.b16 %v2977
        %v3106 = vunpack.c.l.b16 %v2978
        %v3107 = vunpack.c.l.b16 %v2979
        %v3108 = vunpack.c.l.b16 %v2980
        %v3109 = vpack.c.b16 %v3046, %v3045
        %v3110 = vpack.c.b16 %v3048, %v3047
        %v3111 = vpack.c.b16 %v3050, %v3049
        %v3112 = vpack.c.b16 %v3052, %v3051
        %v3113 = vpack.c.b16 %v3054, %v3053
        %v3114 = vpack.c.b16 %v3056, %v3055
        %v3115 = vpack.c.b16 %v3058, %v3057
        %v3116 = vpack.c.b16 %v3060, %v3059
        %v3117 = vpack.c.b16 %v3062, %v3061
        %v3118 = vpack.c.b16 %v3064, %v3063
        %v3119 = vpack.c.b16 %v3066, %v3065
        %v3120 = vpack.c.b16 %v3068, %v3067
        %v3121 = vpack.c.b16 %v3070, %v3069
        %v3122 = vpack.c.b16 %v3072, %v3071
        %v3123 = vpack.c.b16 %v3074, %v3073
        %v3124 = vpack.c.b16 %v3076, %v3075
        %v3125 = vpack.c.b16 %v3078, %v3077
        %v3126 = vpack.c.b16 %v3080, %v3079
        %v3127 = vpack.c.b16 %v3082, %v3081
        %v3128 = vpack.c.b16 %v3084, %v3083
        %v3129 = vpack.c.b16 %v3086, %v3085
        %v3130 = vpack.c.b16 %v3088, %v3087
        %v3131 = vpack.c.b16 %v3090, %v3089
        %v3132 = vpack.c.b16 %v3092, %v3091
        %v3133 = vpack.c.b16 %v3094, %v3093
        %v3134 = vpack.c.b16 %v3096, %v3095
        %v3135 = vpack.c.b16 %v3098, %v3097
        %v3136 = vpack.c.b16 %v3100, %v3099
        %v3137 = vpack.c.b16 %v3102, %v3101
        %v3138 = vpack.c.b16 %v3104, %v3103
        %v3139 = vpack.c.b16 %v3106, %v3105
        %v3140 = vpack.c.b16 %v3108, %v3107
        %3173 = vmatprep.subr.bf16.mxu0 0
        %3174 = vmatpush1.bf16.msra.mxu0 %v3109
        %3175 = vmatprep.subr.bf16.mxu0 0
        %3176 = vmatpush1.bf16.msra.mxu0 %v3110
        %3177 = vmatprep.subr.bf16.mxu0 0
        %3178 = vmatpush1.bf16.msra.mxu0 %v3111
        %3179 = vmatprep.subr.bf16.mxu0 0
        %3180 = vmatpush1.bf16.msra.mxu0 %v3112
        %3181 = vmatprep.subr.bf16.mxu0 0
        %3182 = vmatpush1.bf16.msra.mxu0 %v3113
        %3183 = vmatprep.subr.bf16.mxu0 0
        %3184 = vmatpush1.bf16.msra.mxu0 %v3114
        %3185 = vmatprep.subr.bf16.mxu0 0
        %3186 = vmatpush1.bf16.msra.mxu0 %v3115
        %3187 = vmatprep.subr.bf16.mxu0 0
        %3188 = vmatpush1.bf16.msra.mxu0 %v3116
        %3189 = vmatprep.subr.bf16.mxu0 0
        %3190 = vmatpush1.bf16.msra.mxu0 %v3117
        %3191 = vmatprep.subr.bf16.mxu0 0
        %3192 = vmatpush1.bf16.msra.mxu0 %v3118
        %3193 = vmatprep.subr.bf16.mxu0 0
        %3194 = vmatpush1.bf16.msra.mxu0 %v3119
        %3195 = vmatprep.subr.bf16.mxu0 0
        %3196 = vmatpush1.bf16.msra.mxu0 %v3120
        %3197 = vmatprep.subr.bf16.mxu0 0
        %3198 = vmatpush1.bf16.msra.mxu0 %v3121
        %3199 = vmatprep.subr.bf16.mxu0 0
        %3200 = vmatpush1.bf16.msra.mxu0 %v3122
        %3201 = vmatprep.subr.bf16.mxu0 0
        %3202 = vmatpush1.bf16.msra.mxu0 %v3123
        %3203 = vmatprep.subr.bf16.mxu0 0
        %3204 = vmatpush1.bf16.msra.mxu0 %v3124
        %3205 = vmatprep.mubr.bf16.mxu0 %v2854
        %3206 = vmatmul.mubr.bf16.gmra.mrb[0].mxu0 %v2853
        %v3207 = vpop.f32.mrb[0].mxu0
        %v3208 = vadd.f32 0.0, %v3207
        %v3209 = vpop.f32.mrb[0].mxu0
        %v3210 = vpop.f32.mrb[0].mxu0
        %v3211 = vadd.f32 0.0, %v3210
        %v3212 = vpop.f32.mrb[0].mxu0
        %3213 = vmatprep.mubr.bf16.mxu0 %v2858
        %3214 = vmatmul.mubr.bf16.gmra.mrb[0].mxu0 %v2857
        %v3215 = vpop.f32.mrb[0].mxu0
        %v3216 = vadd.f32 0.0, %v3215
        %v3217 = vpop.f32.mrb[0].mxu0
        %v3218 = vpop.f32.mrb[0].mxu0
        %v3219 = vadd.f32 0.0, %v3218
        %v3220 = vpop.f32.mrb[0].mxu0
        %3221 = vmatprep.mubr.bf16.mxu0 %v2862
        %3222 = vmatmul.mubr.bf16.gmra.mrb[0].mxu0 %v2861
        %v3223 = vpop.f32.mrb[0].mxu0
        %v3224 = vadd.f32 0.0, %v3223
        %v3225 = vpop.f32.mrb[0].mxu0
        %v3226 = vpop.f32.mrb[0].mxu0
        %v3227 = vadd.f32 0.0, %v3226
        %v3228 = vpop.f32.mrb[0].mxu0
        %3229 = vmatprep.mubr.bf16.mxu0 %v2866
        %3230 = vmatmul.mubr.bf16.gmra.mrb[0].mxu0 %v2865
        %v3231 = vpop.f32.mrb[0].mxu0
        %v3232 = vadd.f32 0.0, %v3231
        %v3233 = vpop.f32.mrb[0].mxu0
        %v3234 = vpop.f32.mrb[0].mxu0
        %v3235 = vadd.f32 0.0, %v3234
        %v3236 = vpop.f32.mrb[0].mxu0
        %3237 = vmatprep.mubr.bf16.mxu0 %v2870
        %3238 = vmatmul.mubr.bf16.gmra.mrb[0].mxu0 %v2869
        %v3239 = vpop.f32.mrb[0].mxu0
        %v3240 = vadd.f32 0.0, %v3239
        %v3241 = vpop.f32.mrb[0].mxu0
        %v3242 = vpop.f32.mrb[0].mxu0
        %v3243 = vadd.f32 0.0, %v3242
        %v3244 = vpop.f32.mrb[0].mxu0
        %3245 = vmatprep.mubr.bf16.mxu0 %v2874
        %3246 = vmatmul.mubr.bf16.gmra.mrb[0].mxu0 %v2873
        %v3247 = vpop.f32.mrb[0].mxu0
        %v3248 = vadd.f32 0.0, %v3247
        %v3249 = vpop.f32.mrb[0].mxu0
        %v3250 = vpop.f32.mrb[0].mxu0
        %v3251 = vadd.f32 0.0, %v3250
        %v3252 = vpop.f32.mrb[0].mxu0
        %3253 = vmatprep.mubr.bf16.mxu0 %v2878
        %3254 = vmatmul.mubr.bf16.gmra.mrb[0].mxu0 %v2877
        %v3255 = vpop.f32.mrb[0].mxu0
        %v3256 = vadd.f32 0.0, %v3255
        %v3257 = vpop.f32.mrb[0].mxu0
        %v3258 = vpop.f32.mrb[0].mxu0
        %v3259 = vadd.f32 0.0, %v3258
        %v3260 = vpop.f32.mrb[0].mxu0
        %3261 = vmatprep.mubr.bf16.mxu0 %v2882
        %3262 = vmatmul.mubr.bf16.gmra.mrb[0].mxu0 %v2881
        %v3263 = vpop.f32.mrb[0].mxu0
        %v3264 = vadd.f32 0.0, %v3263
        %v3265 = vpop.f32.mrb[0].mxu0
        %v3266 = vpop.f32.mrb[0].mxu0
        %v3267 = vadd.f32 0.0, %v3266
        %v3268 = vpop.f32.mrb[0].mxu0
        %3269 = vmatprep.mubr.bf16.mxu0 %v2886
        %3270 = vmatmul.mubr.bf16.gmra.mrb[0].mxu0 %v2885
        %v3271 = vpop.f32.mrb[0].mxu0
        %v3272 = vadd.f32 0.0, %v3271
        %v3273 = vpop.f32.mrb[0].mxu0
        %v3274 = vpop.f32.mrb[0].mxu0
        %v3275 = vadd.f32 0.0, %v3274
        %v3276 = vpop.f32.mrb[0].mxu0
        %3277 = vmatprep.mubr.bf16.mxu0 %v2890
        %3278 = vmatmul.mubr.bf16.gmra.mrb[0].mxu0 %v2889
        %v3279 = vpop.f32.mrb[0].mxu0
        %v3280 = vadd.f32 0.0, %v3279
        %v3281 = vpop.f32.mrb[0].mxu0
        %v3282 = vpop.f32.mrb[0].mxu0
        %v3283 = vadd.f32 0.0, %v3282
        %v3284 = vpop.f32.mrb[0].mxu0
        %3285 = vmatprep.mubr.bf16.mxu0 %v2894
        %3286 = vmatmul.mubr.bf16.gmra.mrb[0].mxu0 %v2893
        %v3287 = vpop.f32.mrb[0].mxu0
        %v3288 = vadd.f32 0.0, %v3287
        %v3289 = vpop.f32.mrb[0].mxu0
        %v3290 = vpop.f32.mrb[0].mxu0
        %v3291 = vadd.f32 0.0, %v3290
        %v3292 = vpop.f32.mrb[0].mxu0
        %3293 = vmatprep.mubr.bf16.mxu0 %v2898
        %3294 = vmatmul.mubr.bf16.gmra.mrb[0].mxu0 %v2897
        %v3295 = vpop.f32.mrb[0].mxu0
        %v3296 = vadd.f32 0.0, %v3295
        %v3297 = vpop.f32.mrb[0].mxu0
        %v3298 = vpop.f32.mrb[0].mxu0
        %v3299 = vadd.f32 0.0, %v3298
        %v3300 = vpop.f32.mrb[0].mxu0
        %3301 = vmatprep.mubr.bf16.mxu0 %v2902
        %3302 = vmatmul.mubr.bf16.gmra.mrb[0].mxu0 %v2901
        %v3303 = vpop.f32.mrb[0].mxu0
        %v3304 = vadd.f32 0.0, %v3303
        %v3305 = vpop.f32.mrb[0].mxu0
        %v3306 = vpop.f32.mrb[0].mxu0
        %v3307 = vadd.f32 0.0, %v3306
        %v3308 = vpop.f32.mrb[0].mxu0
        %3309 = vmatprep.mubr.bf16.mxu0 %v2906
        %3310 = vmatmul.mubr.bf16.gmra.mrb[0].mxu0 %v2905
        %v3311 = vpop.f32.mrb[0].mxu0
        %v3312 = vadd.f32 0.0, %v3311
        %v3313 = vpop.f32.mrb[0].mxu0
        %v3314 = vpop.f32.mrb[0].mxu0
        %v3315 = vadd.f32 0.0, %v3314
        %v3316 = vpop.f32.mrb[0].mxu0
        %3317 = vmatprep.mubr.bf16.mxu0 %v2910
        %3318 = vmatmul.mubr.bf16.gmra.mrb[0].mxu0 %v2909
        %v3319 = vpop.f32.mrb[0].mxu0
        %v3320 = vadd.f32 0.0, %v3319
        %v3321 = vpop.f32.mrb[0].mxu0
        %v3322 = vpop.f32.mrb[0].mxu0
        %v3323 = vadd.f32 0.0, %v3322
        %v3324 = vpop.f32.mrb[0].mxu0
        %3325 = vmatprep.mubr.bf16.mxu0 %v2914
        %3326 = vmatmul.mubr.bf16.gmra.mrb[0].mxu0 %v2913
        %v3327 = vpop.f32.mrb[0].mxu0
        %v3328 = vadd.f32 0.0, %v3327
        %v3329 = vpop.f32.mrb[0].mxu0
        %v3330 = vpop.f32.mrb[0].mxu0
        %v3331 = vadd.f32 0.0, %v3330
        %v3332 = vpop.f32.mrb[0].mxu0
        %3333 = vdwg.mxu0
        %3334 = vmatprep.subr.bf16.mxu0 0
        %3335 = vmatpush1.bf16.msra.mxu0 %v3125
        %3336 = vmatprep.subr.bf16.mxu0 0
        %3337 = vmatpush1.bf16.msra.mxu0 %v3126
        %3338 = vmatprep.subr.bf16.mxu0 0
        %3339 = vmatpush1.bf16.msra.mxu0 %v3127
        %3340 = vmatprep.subr.bf16.mxu0 0
        %3341 = vmatpush1.bf16.msra.mxu0 %v3128
        %3342 = vmatprep.subr.bf16.mxu0 0
        %3343 = vmatpush1.bf16.msra.mxu0 %v3129
        %3344 = vmatprep.subr.bf16.mxu0 0
        %3345 = vmatpush1.bf16.msra.mxu0 %v3130
        %3346 = vmatprep.subr.bf16.mxu0 0
        %3347 = vmatpush1.bf16.msra.mxu0 %v3131
        %3348 = vmatprep.subr.bf16.mxu0 0
        %3349 = vmatpush1.bf16.msra.mxu0 %v3132
        %3350 = vmatprep.subr.bf16.mxu0 0
        %3351 = vmatpush1.bf16.msra.mxu0 %v3133
        %3352 = vmatprep.subr.bf16.mxu0 0
        %3353 = vmatpush1.bf16.msra.mxu0 %v3134
        %3354 = vmatprep.subr.bf16.mxu0 0
        %3355 = vmatpush1.bf16.msra.mxu0 %v3135
        %3356 = vmatprep.subr.bf16.mxu0 0
        %3357 = vmatpush1.bf16.msra.mxu0 %v3136
        %3358 = vmatprep.subr.bf16.mxu0 0
        %3359 = vmatpush1.bf16.msra.mxu0 %v3137
        %3360 = vmatprep.subr.bf16.mxu0 0
        %3361 = vmatpush1.bf16.msra.mxu0 %v3138
        %3362 = vmatprep.subr.bf16.mxu0 0
        %3363 = vmatpush1.bf16.msra.mxu0 %v3139
        %3364 = vmatprep.subr.bf16.mxu0 0
        %3365 = vmatpush1.bf16.msra.mxu0 %v3140
        %3366 = vmatprep.mubr.bf16.mxu0 %v2856
        %3367 = vmatmul.mubr.bf16.gmra.mrb[0].mxu0 %v2855
        %v3368 = vpop.f32.mrb[0].mxu0
        %v3369 = vadd.f32 %v3208, %v3368
        %v3370 = vpop.f32.mrb[0].mxu0
        %v3371 = vpop.f32.mrb[0].mxu0
        %v3372 = vadd.f32 %v3211, %v3371
        %v3373 = vpop.f32.mrb[0].mxu0
        %3374 = vmatprep.mubr.bf16.mxu0 %v2860
        %3375 = vmatmul.mubr.bf16.gmra.mrb[0].mxu0 %v2859
        %v3376 = vpop.f32.mrb[0].mxu0
        %v3377 = vadd.f32 %v3216, %v3376
        %v3378 = vpop.f32.mrb[0].mxu0
        %v3379 = vpop.f32.mrb[0].mxu0
        %v3380 = vadd.f32 %v3219, %v3379
        %v3381 = vpop.f32.mrb[0].mxu0
        %3382 = vmatprep.mubr.bf16.mxu0 %v2864
        %3383 = vmatmul.mubr.bf16.gmra.mrb[0].mxu0 %v2863
        %v3384 = vpop.f32.mrb[0].mxu0
        %v3385 = vadd.f32 %v3224, %v3384
        %v3386 = vpop.f32.mrb[0].mxu0
        %v3387 = vpop.f32.mrb[0].mxu0
        %v3388 = vadd.f32 %v3227, %v3387
        %v3389 = vpop.f32.mrb[0].mxu0
        %3390 = vmatprep.mubr.bf16.mxu0 %v2868
        %3391 = vmatmul.mubr.bf16.gmra.mrb[0].mxu0 %v2867
        %v3392 = vpop.f32.mrb[0].mxu0
        %v3393 = vadd.f32 %v3232, %v3392
        %v3394 = vpop.f32.mrb[0].mxu0
        %v3395 = vpop.f32.mrb[0].mxu0
        %v3396 = vadd.f32 %v3235, %v3395
        %v3397 = vpop.f32.mrb[0].mxu0
        %3398 = vmatprep.mubr.bf16.mxu0 %v2872
        %3399 = vmatmul.mubr.bf16.gmra.mrb[0].mxu0 %v2871
        %v3400 = vpop.f32.mrb[0].mxu0
        %v3401 = vadd.f32 %v3240, %v3400
        %v3402 = vpop.f32.mrb[0].mxu0
        %v3403 = vpop.f32.mrb[0].mxu0
        %v3404 = vadd.f32 %v3243, %v3403
        %v3405 = vpop.f32.mrb[0].mxu0
        %3406 = vmatprep.mubr.bf16.mxu0 %v2876
        %3407 = vmatmul.mubr.bf16.gmra.mrb[0].mxu0 %v2875
        %v3408 = vpop.f32.mrb[0].mxu0
        %v3409 = vadd.f32 %v3248, %v3408
        %v3410 = vpop.f32.mrb[0].mxu0
        %v3411 = vpop.f32.mrb[0].mxu0
        %v3412 = vadd.f32 %v3251, %v3411
        %v3413 = vpop.f32.mrb[0].mxu0
        %3414 = vmatprep.mubr.bf16.mxu0 %v2880
        %3415 = vmatmul.mubr.bf16.gmra.mrb[0].mxu0 %v2879
        %v3416 = vpop.f32.mrb[0].mxu0
        %v3417 = vadd.f32 %v3256, %v3416
        %v3418 = vpop.f32.mrb[0].mxu0
        %v3419 = vpop.f32.mrb[0].mxu0
        %v3420 = vadd.f32 %v3259, %v3419
        %v3421 = vpop.f32.mrb[0].mxu0
        %3422 = vmatprep.mubr.bf16.mxu0 %v2884
        %3423 = vmatmul.mubr.bf16.gmra.mrb[0].mxu0 %v2883
        %v3424 = vpop.f32.mrb[0].mxu0
        %v3425 = vadd.f32 %v3264, %v3424
        %v3426 = vpop.f32.mrb[0].mxu0
        %v3427 = vpop.f32.mrb[0].mxu0
        %v3428 = vadd.f32 %v3267, %v3427
        %v3429 = vpop.f32.mrb[0].mxu0
        %3430 = vmatprep.mubr.bf16.mxu0 %v2888
        %3431 = vmatmul.mubr.bf16.gmra.mrb[0].mxu0 %v2887
        %v3432 = vpop.f32.mrb[0].mxu0
        %v3433 = vadd.f32 %v3272, %v3432
        %v3434 = vpop.f32.mrb[0].mxu0
        %v3435 = vpop.f32.mrb[0].mxu0
        %v3436 = vadd.f32 %v3275, %v3435
        %v3437 = vpop.f32.mrb[0].mxu0
        %3438 = vmatprep.mubr.bf16.mxu0 %v2892
        %3439 = vmatmul.mubr.bf16.gmra.mrb[0].mxu0 %v2891
        %v3440 = vpop.f32.mrb[0].mxu0
        %v3441 = vadd.f32 %v3280, %v3440
        %v3442 = vpop.f32.mrb[0].mxu0
        %v3443 = vpop.f32.mrb[0].mxu0
        %v3444 = vadd.f32 %v3283, %v3443
        %v3445 = vpop.f32.mrb[0].mxu0
        %3446 = vmatprep.mubr.bf16.mxu0 %v2896
        %3447 = vmatmul.mubr.bf16.gmra.mrb[0].mxu0 %v2895
        %v3448 = vpop.f32.mrb[0].mxu0
        %v3449 = vadd.f32 %v3288, %v3448
        %v3450 = vpop.f32.mrb[0].mxu0
        %v3451 = vpop.f32.mrb[0].mxu0
        %v3452 = vadd.f32 %v3291, %v3451
        %v3453 = vpop.f32.mrb[0].mxu0
        %3454 = vmatprep.mubr.bf16.mxu0 %v2900
        %3455 = vmatmul.mubr.bf16.gmra.mrb[0].mxu0 %v2899
        %v3456 = vpop.f32.mrb[0].mxu0
        %v3457 = vadd.f32 %v3296, %v3456
        %v3458 = vpop.f32.mrb[0].mxu0
        %v3459 = vpop.f32.mrb[0].mxu0
        %v3460 = vadd.f32 %v3299, %v3459
        %v3461 = vpop.f32.mrb[0].mxu0
        %3462 = vmatprep.mubr.bf16.mxu0 %v2904
        %3463 = vmatmul.mubr.bf16.gmra.mrb[0].mxu0 %v2903
        %v3464 = vpop.f32.mrb[0].mxu0
        %v3465 = vadd.f32 %v3304, %v3464
        %v3466 = vpop.f32.mrb[0].mxu0
        %v3467 = vpop.f32.mrb[0].mxu0
        %v3468 = vadd.f32 %v3307, %v3467
        %v3469 = vpop.f32.mrb[0].mxu0
        %3470 = vmatprep.mubr.bf16.mxu0 %v2908
        %3471 = vmatmul.mubr.bf16.gmra.mrb[0].mxu0 %v2907
        %v3472 = vpop.f32.mrb[0].mxu0
        %v3473 = vadd.f32 %v3312, %v3472
        %v3474 = vpop.f32.mrb[0].mxu0
        %v3475 = vpop.f32.mrb[0].mxu0
        %v3476 = vadd.f32 %v3315, %v3475
        %v3477 = vpop.f32.mrb[0].mxu0
        %3478 = vmatprep.mubr.bf16.mxu0 %v2912
        %3479 = vmatmul.mubr.bf16.gmra.mrb[0].mxu0 %v2911
        %v3480 = vpop.f32.mrb[0].mxu0
        %v3481 = vadd.f32 %v3320, %v3480
        %v3482 = vpop.f32.mrb[0].mxu0
        %v3483 = vpop.f32.mrb[0].mxu0
        %v3484 = vadd.f32 %v3323, %v3483
        %v3485 = vpop.f32.mrb[0].mxu0
        %3486 = vmatprep.mubr.bf16.mxu0 %v2916
        %3487 = vmatmul.mubr.bf16.gmra.mrb[0].mxu0 %v2915
        %v3488 = vpop.f32.mrb[0].mxu0
        %v3489 = vadd.f32 %v3328, %v3488
        %v3490 = vpop.f32.mrb[0].mxu0
        %v3491 = vpop.f32.mrb[0].mxu0
        %v3492 = vadd.f32 %v3331, %v3491
        %v3493 = vpop.f32.mrb[0].mxu0
        %3494 = vdwg.mxu0
        %v3495 = vadd.f32 %v2821, %v3369
        %v3496 = vadd.f32 %v2822, %v3372
        %v3497 = vadd.f32 %v2823, %v3377
        %v3498 = vadd.f32 %v2824, %v3380
        %v3499 = vadd.f32 %v2825, %v3385
        %v3500 = vadd.f32 %v2826, %v3388
        %v3501 = vadd.f32 %v2827, %v3393
        %v3502 = vadd.f32 %v2828, %v3396
        %v3503 = vadd.f32 %v2829, %v3401
        %v3504 = vadd.f32 %v2830, %v3404
        %v3505 = vadd.f32 %v2831, %v3409
        %v3506 = vadd.f32 %v2832, %v3412
        %v3507 = vadd.f32 %v2833, %v3417
        %v3508 = vadd.f32 %v2834, %v3420
        %v3509 = vadd.f32 %v2835, %v3425
        %v3510 = vadd.f32 %v2836, %v3428
        %v3511 = vadd.f32 %v2837, %v3433
        %v3512 = vadd.f32 %v2838, %v3436
        %v3513 = vadd.f32 %v2839, %v3441
        %v3514 = vadd.f32 %v2840, %v3444
        %v3515 = vadd.f32 %v2841, %v3449
        %v3516 = vadd.f32 %v2842, %v3452
        %v3517 = vadd.f32 %v2843, %v3457
        %v3518 = vadd.f32 %v2844, %v3460
        %v3519 = vadd.f32 %v2845, %v3465
        %v3520 = vadd.f32 %v2846, %v3468
        %v3521 = vadd.f32 %v2847, %v3473
        %v3522 = vadd.f32 %v2848, %v3476
        %v3523 = vadd.f32 %v2849, %v3481
        %v3524 = vadd.f32 %v2850, %v3484
        %v3525 = vadd.f32 %v2851, %v3489
        %v3526 = vadd.f32 %v2852, %v3492
        %3527 = vst [vmem:[#allocation3] sm:$0xff] %v3495
        %3528 = vst [vmem:[#allocation3 + $0x8] sm:$0xff] %v3496
        %3529 = vst [vmem:[#allocation3 + $0x10] sm:$0xff] %v3497
        %3530 = vst [vmem:[#allocation3 + $0x18] sm:$0xff] %v3498
        %3531 = vst [vmem:[#allocation3 + $0x20] sm:$0xff] %v3499
        %3532 = vst [vmem:[#allocation3 + $0x28] sm:$0xff] %v3500
        %3533 = vst [vmem:[#allocation3 + $0x30] sm:$0xff] %v3501
        %3534 = vst [vmem:[#allocation3 + $0x38] sm:$0xff] %v3502
        %3535 = vst [vmem:[#allocation3 + $0x40] sm:$0xff] %v3503
        %3536 = vst [vmem:[#allocation3 + $0x48] sm:$0xff] %v3504
        %3537 = vst [vmem:[#allocation3 + $0x50] sm:$0xff] %v3505
        %3538 = vst [vmem:[#allocation3 + $0x58] sm:$0xff] %v3506
        %3539 = vst [vmem:[#allocation3 + $0x60] sm:$0xff] %v3507
        %3540 = vst [vmem:[#allocation3 + $0x68] sm:$0xff] %v3508
        %3541 = vst [vmem:[#allocation3 + $0x70] sm:$0xff] %v3509
        %3542 = vst [vmem:[#allocation3 + $0x78] sm:$0xff] %v3510
        %3543 = vst [vmem:[#allocation3 + $0x80] sm:$0xff] %v3511
        %3544 = vst [vmem:[#allocation3 + $0x88] sm:$0xff] %v3512
        %3545 = vst [vmem:[#allocation3 + $0x90] sm:$0xff] %v3513
        %3546 = vst [vmem:[#allocation3 + $0x98] sm:$0xff] %v3514
        %3547 = vst [vmem:[#allocation3 + $0xa0] sm:$0xff] %v3515
        %3548 = vst [vmem:[#allocation3 + $0xa8] sm:$0xff] %v3516
        %3549 = vst [vmem:[#allocation3 + $0xb0] sm:$0xff] %v3517
        %3550 = vst [vmem:[#allocation3 + $0xb8] sm:$0xff] %v3518
        %3551 = vst [vmem:[#allocation3 + $0xc0] sm:$0xff] %v3519
        %3552 = vst [vmem:[#allocation3 + $0xc8] sm:$0xff] %v3520
        %3553 = vst [vmem:[#allocation3 + $0xd0] sm:$0xff] %v3521
        %3554 = vst [vmem:[#allocation3 + $0xd8] sm:$0xff] %v3522
        %3555 = vst [vmem:[#allocation3 + $0xe0] sm:$0xff] %v3523
        %3556 = vst [vmem:[#allocation3 + $0xe8] sm:$0xff] %v3524
        %3557 = vst [vmem:[#allocation3 + $0xf0] sm:$0xff] %v3525
        %3558 = vst [vmem:[#allocation3 + $0xf8] sm:$0xff] %v3526
        // Predicated region
        $region77: #{mod_transformer_forward.1} parent=59 // pred_check
          %p3559 = pneg %p459
        $region78: #{mod_transformer_forward.1} parent=59 // pred_check_branch
          %3561 = sbr.rel (%p3559) target = $region80
        $region79: #{mod_transformer_forward.1} parent=59 // pred_region
          %v3562 = vld [vmem:[%s400] sm:$0xff]
          %v3563 = vld [vmem:[%s400 + $0x8] sm:$0xff]
          %v3564 = vld [vmem:[%s400 + $0x10] sm:$0xff]
          %v3565 = vld [vmem:[%s400 + $0x18] sm:$0xff]
          %v3566 = vld [vmem:[%s400 + $0x20] sm:$0xff]
          %v3567 = vld [vmem:[%s400 + $0x28] sm:$0xff]
          %v3568 = vld [vmem:[%s400 + $0x30] sm:$0xff]
          %v3569 = vld [vmem:[%s400 + $0x38] sm:$0xff]
          %v3570 = vld [vmem:[%s400 + $0x40] sm:$0xff]
          %v3571 = vld [vmem:[%s400 + $0x48] sm:$0xff]
          %v3572 = vld [vmem:[%s400 + $0x50] sm:$0xff]
          %v3573 = vld [vmem:[%s400 + $0x58] sm:$0xff]
          %v3574 = vld [vmem:[%s400 + $0x60] sm:$0xff]
          %v3575 = vld [vmem:[%s400 + $0x68] sm:$0xff]
          %v3576 = vld [vmem:[%s400 + $0x70] sm:$0xff]
          %v3577 = vld [vmem:[%s400 + $0x78] sm:$0xff]
          %v3578 = vld [vmem:[%s400 + $0x80] sm:$0xff]
          %v3579 = vld [vmem:[%s400 + $0x88] sm:$0xff]
          %v3580 = vld [vmem:[%s400 + $0x90] sm:$0xff]
          %v3581 = vld [vmem:[%s400 + $0x98] sm:$0xff]
          %v3582 = vld [vmem:[%s400 + $0xa0] sm:$0xff]
          %v3583 = vld [vmem:[%s400 + $0xa8] sm:$0xff]
          %v3584 = vld [vmem:[%s400 + $0xb0] sm:$0xff]
          %v3585 = vld [vmem:[%s400 + $0xb8] sm:$0xff]
          %v3586 = vld [vmem:[%s400 + $0xc0] sm:$0xff]
          %v3587 = vld [vmem:[%s400 + $0xc8] sm:$0xff]
          %v3588 = vld [vmem:[%s400 + $0xd0] sm:$0xff]
          %v3589 = vld [vmem:[%s400 + $0xd8] sm:$0xff]
          %v3590 = vld [vmem:[%s400 + $0xe0] sm:$0xff]
          %v3591 = vld [vmem:[%s400 + $0xe8] sm:$0xff]
          %v3592 = vld [vmem:[%s400 + $0xf0] sm:$0xff]
          %v3593 = vld [vmem:[%s400 + $0xf8] sm:$0xff]
          %v3594 = vld [vmem:[%s3] sm:$0x1]
          %v3595 = vld [vmem:[%s1] sm:$0x1]
          %v3597 = vlaneseq
          %v3598 = vshrl.u32 %v3597, 7
          %v3599 = vsub.s32 0, %v3598
          %v3600 = vrot.slane %v3595, %v3599
          %v3602 = vmul.f32 %v3562, %v3600
          %v3603 = vmul.f32 %v3563, %v3600
          %v3604 = vmul.f32 %v3564, %v3600
          %v3605 = vmul.f32 %v3565, %v3600
          %v3606 = vmul.f32 %v3566, %v3600
          %v3607 = vmul.f32 %v3567, %v3600
          %v3608 = vmul.f32 %v3568, %v3600
          %v3609 = vmul.f32 %v3569, %v3600
          %v3610 = vmul.f32 %v3570, %v3600
          %v3611 = vmul.f32 %v3571, %v3600
          %v3612 = vmul.f32 %v3572, %v3600
          %v3613 = vmul.f32 %v3573, %v3600
          %v3614 = vmul.f32 %v3574, %v3600
          %v3615 = vmul.f32 %v3575, %v3600
          %v3616 = vmul.f32 %v3576, %v3600
          %v3617 = vmul.f32 %v3577, %v3600
          %v3618 = vmul.f32 %v3578, %v3600
          %v3619 = vmul.f32 %v3579, %v3600
          %v3620 = vmul.f32 %v3580, %v3600
          %v3621 = vmul.f32 %v3581, %v3600
          %v3622 = vmul.f32 %v3582, %v3600
          %v3623 = vmul.f32 %v3583, %v3600
          %v3624 = vmul.f32 %v3584, %v3600
          %v3625 = vmul.f32 %v3585, %v3600
          %v3626 = vmul.f32 %v3586, %v3600
          %v3627 = vmul.f32 %v3587, %v3600
          %v3628 = vmul.f32 %v3588, %v3600
          %v3629 = vmul.f32 %v3589, %v3600
          %v3630 = vmul.f32 %v3590, %v3600
          %v3631 = vmul.f32 %v3591, %v3600
          %v3632 = vmul.f32 %v3592, %v3600
          %v3633 = vmul.f32 %v3593, %v3600
          %3634 = vadd.xlane.f32.xlu0 %v3602
          %v3635 = vpop.xlane.xlu0 %3634
          %3636 = vadd.xlane.f32.xlu0 %v3603
          %v3637 = vpop.xlane.xlu0 %3636
          %3638 = vadd.xlane.f32.xlu0 %v3604
          %v3639 = vpop.xlane.xlu0 %3638
          %3640 = vadd.xlane.f32.xlu0 %v3605
          %v3641 = vpop.xlane.xlu0 %3640
          %3642 = vadd.xlane.f32.xlu0 %v3606
          %v3643 = vpop.xlane.xlu0 %3642
          %3644 = vadd.xlane.f32.xlu0 %v3607
          %v3645 = vpop.xlane.xlu0 %3644
          %3646 = vadd.xlane.f32.xlu0 %v3608
          %v3647 = vpop.xlane.xlu0 %3646
          %3648 = vadd.xlane.f32.xlu0 %v3609
          %v3649 = vpop.xlane.xlu0 %3648
          %3650 = vadd.xlane.f32.xlu0 %v3610
          %v3651 = vpop.xlane.xlu0 %3650
          %3652 = vadd.xlane.f32.xlu0 %v3611
          %v3653 = vpop.xlane.xlu0 %3652
          %3654 = vadd.xlane.f32.xlu0 %v3612
          %v3655 = vpop.xlane.xlu0 %3654
          %3656 = vadd.xlane.f32.xlu0 %v3613
          %v3657 = vpop.xlane.xlu0 %3656
          %3658 = vadd.xlane.f32.xlu0 %v3614
          %v3659 = vpop.xlane.xlu0 %3658
          %3660 = vadd.xlane.f32.xlu0 %v3615
          %v3661 = vpop.xlane.xlu0 %3660
          %3662 = vadd.xlane.f32.xlu0 %v3616
          %v3663 = vpop.xlane.xlu0 %3662
          %3664 = vadd.xlane.f32.xlu0 %v3617
          %v3665 = vpop.xlane.xlu0 %3664
          %3666 = vadd.xlane.f32.xlu0 %v3618
          %v3667 = vpop.xlane.xlu0 %3666
          %3668 = vadd.xlane.f32.xlu0 %v3619
          %v3669 = vpop.xlane.xlu0 %3668
          %3670 = vadd.xlane.f32.xlu0 %v3620
          %v3671 = vpop.xlane.xlu0 %3670
          %3672 = vadd.xlane.f32.xlu0 %v3621
          %v3673 = vpop.xlane.xlu0 %3672
          %3674 = vadd.xlane.f32.xlu0 %v3622
          %v3675 = vpop.xlane.xlu0 %3674
          %3676 = vadd.xlane.f32.xlu0 %v3623
          %v3677 = vpop.xlane.xlu0 %3676
          %3678 = vadd.xlane.f32.xlu0 %v3624
          %v3679 = vpop.xlane.xlu0 %3678
          %3680 = vadd.xlane.f32.xlu0 %v3625
          %v3681 = vpop.xlane.xlu0 %3680
          %3682 = vadd.xlane.f32.xlu0 %v3626
          %v3683 = vpop.xlane.xlu0 %3682
          %3684 = vadd.xlane.f32.xlu0 %v3627
          %v3685 = vpop.xlane.xlu0 %3684
          %3686 = vadd.xlane.f32.xlu0 %v3628
          %v3687 = vpop.xlane.xlu0 %3686
          %3688 = vadd.xlane.f32.xlu0 %v3629
          %v3689 = vpop.xlane.xlu0 %3688
          %3690 = vadd.xlane.f32.xlu0 %v3630
          %v3691 = vpop.xlane.xlu0 %3690
          %3692 = vadd.xlane.f32.xlu0 %v3631
          %v3693 = vpop.xlane.xlu0 %3692
          %3694 = vadd.xlane.f32.xlu0 %v3632
          %v3695 = vpop.xlane.xlu0 %3694
          %3696 = vadd.xlane.f32.xlu0 %v3633
          %v3697 = vpop.xlane.xlu0 %3696
          %v3699 = vlaneseq
          %v3700 = vshrl.u32 %v3699, 7
          %v3701 = vsub.s32 0, %v3700
          %v3702 = vrot.slane %v3594, %v3701
          %v3704 = vadd.f32 %v3635, %v3702
          %v3705 = vadd.f32 %v3637, %v3702
          %v3706 = vadd.f32 %v3639, %v3702
          %v3707 = vadd.f32 %v3641, %v3702
          %v3708 = vadd.f32 %v3643, %v3702
          %v3709 = vadd.f32 %v3645, %v3702
          %v3710 = vadd.f32 %v3647, %v3702
          %v3711 = vadd.f32 %v3649, %v3702
          %v3712 = vadd.f32 %v3651, %v3702
          %v3713 = vadd.f32 %v3653, %v3702
          %v3714 = vadd.f32 %v3655, %v3702
          %v3715 = vadd.f32 %v3657, %v3702
          %v3716 = vadd.f32 %v3659, %v3702
          %v3717 = vadd.f32 %v3661, %v3702
          %v3718 = vadd.f32 %v3663, %v3702
          %v3719 = vadd.f32 %v3665, %v3702
          %v3720 = vadd.f32 %v3667, %v3702
          %v3721 = vadd.f32 %v3669, %v3702
          %v3722 = vadd.f32 %v3671, %v3702
          %v3723 = vadd.f32 %v3673, %v3702
          %v3724 = vadd.f32 %v3675, %v3702
          %v3725 = vadd.f32 %v3677, %v3702
          %v3726 = vadd.f32 %v3679, %v3702
          %v3727 = vadd.f32 %v3681, %v3702
          %v3728 = vadd.f32 %v3683, %v3702
          %v3729 = vadd.f32 %v3685, %v3702
          %v3730 = vadd.f32 %v3687, %v3702
          %v3731 = vadd.f32 %v3689, %v3702
          %v3732 = vadd.f32 %v3691, %v3702
          %v3733 = vadd.f32 %v3693, %v3702
          %v3734 = vadd.f32 %v3695, %v3702
          %v3735 = vadd.f32 %v3697, %v3702
          %v3736 = vld [vmem:[%s2] sm:$0x1]
          %v3738 = vlaneseq
          %v3739 = vshrl.u32 %v3738, 7
          %v3740 = vsub.s32 0, %v3739
          %v3741 = vrot.slane %v3736, %v3740
          %v3743 = vmul.f32 %v3562, %v3741
          %v3744 = vmul.f32 %v3563, %v3741
          %v3745 = vmul.f32 %v3564, %v3741
          %v3746 = vmul.f32 %v3565, %v3741
          %v3747 = vmul.f32 %v3566, %v3741
          %v3748 = vmul.f32 %v3567, %v3741
          %v3749 = vmul.f32 %v3568, %v3741
          %v3750 = vmul.f32 %v3569, %v3741
          %v3751 = vmul.f32 %v3570, %v3741
          %v3752 = vmul.f32 %v3571, %v3741
          %v3753 = vmul.f32 %v3572, %v3741
          %v3754 = vmul.f32 %v3573, %v3741
          %v3755 = vmul.f32 %v3574, %v3741
          %v3756 = vmul.f32 %v3575, %v3741
          %v3757 = vmul.f32 %v3576, %v3741
          %v3758 = vmul.f32 %v3577, %v3741
          %v3759 = vmul.f32 %v3578, %v3741
          %v3760 = vmul.f32 %v3579, %v3741
          %v3761 = vmul.f32 %v3580, %v3741
          %v3762 = vmul.f32 %v3581, %v3741
          %v3763 = vmul.f32 %v3582, %v3741
          %v3764 = vmul.f32 %v3583, %v3741
          %v3765 = vmul.f32 %v3584, %v3741
          %v3766 = vmul.f32 %v3585, %v3741
          %v3767 = vmul.f32 %v3586, %v3741
          %v3768 = vmul.f32 %v3587, %v3741
          %v3769 = vmul.f32 %v3588, %v3741
          %v3770 = vmul.f32 %v3589, %v3741
          %v3771 = vmul.f32 %v3590, %v3741
          %v3772 = vmul.f32 %v3591, %v3741
          %v3773 = vmul.f32 %v3592, %v3741
          %v3774 = vmul.f32 %v3593, %v3741
          %3775 = vadd.xlane.f32.xlu0 %v3743
          %v3776 = vpop.xlane.xlu0 %3775
          %3777 = vadd.xlane.f32.xlu0 %v3744
          %v3778 = vpop.xlane.xlu0 %3777
          %3779 = vadd.xlane.f32.xlu0 %v3745
          %v3780 = vpop.xlane.xlu0 %3779
          %3781 = vadd.xlane.f32.xlu0 %v3746
          %v3782 = vpop.xlane.xlu0 %3781
          %3783 = vadd.xlane.f32.xlu0 %v3747
          %v3784 = vpop.xlane.xlu0 %3783
          %3785 = vadd.xlane.f32.xlu0 %v3748
          %v3786 = vpop.xlane.xlu0 %3785
          %3787 = vadd.xlane.f32.xlu0 %v3749
          %v3788 = vpop.xlane.xlu0 %3787
          %3789 = vadd.xlane.f32.xlu0 %v3750
          %v3790 = vpop.xlane.xlu0 %3789
          %3791 = vadd.xlane.f32.xlu0 %v3751
          %v3792 = vpop.xlane.xlu0 %3791
          %3793 = vadd.xlane.f32.xlu0 %v3752
          %v3794 = vpop.xlane.xlu0 %3793
          %3795 = vadd.xlane.f32.xlu0 %v3753
          %v3796 = vpop.xlane.xlu0 %3795
          %3797 = vadd.xlane.f32.xlu0 %v3754
          %v3798 = vpop.xlane.xlu0 %3797
          %3799 = vadd.xlane.f32.xlu0 %v3755
          %v3800 = vpop.xlane.xlu0 %3799
          %3801 = vadd.xlane.f32.xlu0 %v3756
          %v3802 = vpop.xlane.xlu0 %3801
          %3803 = vadd.xlane.f32.xlu0 %v3757
          %v3804 = vpop.xlane.xlu0 %3803
          %3805 = vadd.xlane.f32.xlu0 %v3758
          %v3806 = vpop.xlane.xlu0 %3805
          %3807 = vadd.xlane.f32.xlu0 %v3759
          %v3808 = vpop.xlane.xlu0 %3807
          %3809 = vadd.xlane.f32.xlu0 %v3760
          %v3810 = vpop.xlane.xlu0 %3809
          %3811 = vadd.xlane.f32.xlu0 %v3761
          %v3812 = vpop.xlane.xlu0 %3811
          %3813 = vadd.xlane.f32.xlu0 %v3762
          %v3814 = vpop.xlane.xlu0 %3813
          %3815 = vadd.xlane.f32.xlu0 %v3763
          %v3816 = vpop.xlane.xlu0 %3815
          %3817 = vadd.xlane.f32.xlu0 %v3764
          %v3818 = vpop.xlane.xlu0 %3817
          %3819 = vadd.xlane.f32.xlu0 %v3765
          %v3820 = vpop.xlane.xlu0 %3819
          %3821 = vadd.xlane.f32.xlu0 %v3766
          %v3822 = vpop.xlane.xlu0 %3821
          %3823 = vadd.xlane.f32.xlu0 %v3767
          %v3824 = vpop.xlane.xlu0 %3823
          %3825 = vadd.xlane.f32.xlu0 %v3768
          %v3826 = vpop.xlane.xlu0 %3825
          %3827 = vadd.xlane.f32.xlu0 %v3769
          %v3828 = vpop.xlane.xlu0 %3827
          %3829 = vadd.xlane.f32.xlu0 %v3770
          %v3830 = vpop.xlane.xlu0 %3829
          %3831 = vadd.xlane.f32.xlu0 %v3771
          %v3832 = vpop.xlane.xlu0 %3831
          %3833 = vadd.xlane.f32.xlu0 %v3772
          %v3834 = vpop.xlane.xlu0 %3833
          %3835 = vadd.xlane.f32.xlu0 %v3773
          %v3836 = vpop.xlane.xlu0 %3835
          %3837 = vadd.xlane.f32.xlu0 %v3774
          %v3838 = vpop.xlane.xlu0 %3837
          %v3839 = vadd.f32 %v3776, %v3702
          %v3840 = vadd.f32 %v3778, %v3702
          %v3841 = vadd.f32 %v3780, %v3702
          %v3842 = vadd.f32 %v3782, %v3702
          %v3843 = vadd.f32 %v3784, %v3702
          %v3844 = vadd.f32 %v3786, %v3702
          %v3845 = vadd.f32 %v3788, %v3702
          %v3846 = vadd.f32 %v3790, %v3702
          %v3847 = vadd.f32 %v3792, %v3702
          %v3848 = vadd.f32 %v3794, %v3702
          %v3849 = vadd.f32 %v3796, %v3702
          %v3850 = vadd.f32 %v3798, %v3702
          %v3851 = vadd.f32 %v3800, %v3702
          %v3852 = vadd.f32 %v3802, %v3702
          %v3853 = vadd.f32 %v3804, %v3702
          %v3854 = vadd.f32 %v3806, %v3702
          %v3855 = vadd.f32 %v3808, %v3702
          %v3856 = vadd.f32 %v3810, %v3702
          %v3857 = vadd.f32 %v3812, %v3702
          %v3858 = vadd.f32 %v3814, %v3702
          %v3859 = vadd.f32 %v3816, %v3702
          %v3860 = vadd.f32 %v3818, %v3702
          %v3861 = vadd.f32 %v3820, %v3702
          %v3862 = vadd.f32 %v3822, %v3702
          %v3863 = vadd.f32 %v3824, %v3702
          %v3864 = vadd.f32 %v3826, %v3702
          %v3865 = vadd.f32 %v3828, %v3702
          %v3866 = vadd.f32 %v3830, %v3702
          %v3867 = vadd.f32 %v3832, %v3702
          %v3868 = vadd.f32 %v3834, %v3702
          %v3869 = vadd.f32 %v3836, %v3702
          %v3870 = vadd.f32 %v3838, %v3702
          %v3871 = vld [vmem:[#allocation3] sm:$0xff]
          %v3872 = vld [vmem:[#allocation3 + $0x8] sm:$0xff]
          %v3873 = vld [vmem:[#allocation3 + $0x10] sm:$0xff]
          %v3874 = vld [vmem:[#allocation3 + $0x18] sm:$0xff]
          %v3875 = vld [vmem:[#allocation3 + $0x20] sm:$0xff]
          %v3876 = vld [vmem:[#allocation3 + $0x28] sm:$0xff]
          %v3877 = vld [vmem:[#allocation3 + $0x30] sm:$0xff]
          %v3878 = vld [vmem:[#allocation3 + $0x38] sm:$0xff]
          %v3879 = vld [vmem:[#allocation3 + $0x40] sm:$0xff]
          %v3880 = vld [vmem:[#allocation3 + $0x48] sm:$0xff]
          %v3881 = vld [vmem:[#allocation3 + $0x50] sm:$0xff]
          %v3882 = vld [vmem:[#allocation3 + $0x58] sm:$0xff]
          %v3883 = vld [vmem:[#allocation3 + $0x60] sm:$0xff]
          %v3884 = vld [vmem:[#allocation3 + $0x68] sm:$0xff]
          %v3885 = vld [vmem:[#allocation3 + $0x70] sm:$0xff]
          %v3886 = vld [vmem:[#allocation3 + $0x78] sm:$0xff]
          %v3887 = vld [vmem:[#allocation3 + $0x80] sm:$0xff]
          %v3888 = vld [vmem:[#allocation3 + $0x88] sm:$0xff]
          %v3889 = vld [vmem:[#allocation3 + $0x90] sm:$0xff]
          %v3890 = vld [vmem:[#allocation3 + $0x98] sm:$0xff]
          %v3891 = vld [vmem:[#allocation3 + $0xa0] sm:$0xff]
          %v3892 = vld [vmem:[#allocation3 + $0xa8] sm:$0xff]
          %v3893 = vld [vmem:[#allocation3 + $0xb0] sm:$0xff]
          %v3894 = vld [vmem:[#allocation3 + $0xb8] sm:$0xff]
          %v3895 = vld [vmem:[#allocation3 + $0xc0] sm:$0xff]
          %v3896 = vld [vmem:[#allocation3 + $0xc8] sm:$0xff]
          %v3897 = vld [vmem:[#allocation3 + $0xd0] sm:$0xff]
          %v3898 = vld [vmem:[#allocation3 + $0xd8] sm:$0xff]
          %v3899 = vld [vmem:[#allocation3 + $0xe0] sm:$0xff]
          %v3900 = vld [vmem:[#allocation3 + $0xe8] sm:$0xff]
          %v3901 = vld [vmem:[#allocation3 + $0xf0] sm:$0xff]
          %v3902 = vld [vmem:[#allocation3 + $0xf8] sm:$0xff]
          %v3903 = vadd.f32 %v3562, %v3871
          %v3904 = vadd.f32 %v3563, %v3872
          %v3905 = vadd.f32 %v3564, %v3873
          %v3906 = vadd.f32 %v3565, %v3874
          %v3907 = vadd.f32 %v3566, %v3875
          %v3908 = vadd.f32 %v3567, %v3876
          %v3909 = vadd.f32 %v3568, %v3877
          %v3910 = vadd.f32 %v3569, %v3878
          %v3911 = vadd.f32 %v3570, %v3879
          %v3912 = vadd.f32 %v3571, %v3880
          %v3913 = vadd.f32 %v3572, %v3881
          %v3914 = vadd.f32 %v3573, %v3882
          %v3915 = vadd.f32 %v3574, %v3883
          %v3916 = vadd.f32 %v3575, %v3884
          %v3917 = vadd.f32 %v3576, %v3885
          %v3918 = vadd.f32 %v3577, %v3886
          %v3919 = vadd.f32 %v3578, %v3887
          %v3920 = vadd.f32 %v3579, %v3888
          %v3921 = vadd.f32 %v3580, %v3889
          %v3922 = vadd.f32 %v3581, %v3890
          %v3923 = vadd.f32 %v3582, %v3891
          %v3924 = vadd.f32 %v3583, %v3892
          %v3925 = vadd.f32 %v3584, %v3893
          %v3926 = vadd.f32 %v3585, %v3894
          %v3927 = vadd.f32 %v3586, %v3895
          %v3928 = vadd.f32 %v3587, %v3896
          %v3929 = vadd.f32 %v3588, %v3897
          %v3930 = vadd.f32 %v3589, %v3898
          %v3931 = vadd.f32 %v3590, %v3899
          %v3932 = vadd.f32 %v3591, %v3900
          %v3933 = vadd.f32 %v3592, %v3901
          %v3934 = vadd.f32 %v3593, %v3902
          %v3935 = vld [vmem:[%s9] sm:$0x1]
          %v3937 = vlaneseq
          %v3938 = vshrl.u32 %v3937, 7
          %v3939 = vsub.s32 0, %v3938
          %v3940 = vrot.slane %v3935, %v3939
          %v3942 = vadd.f32 %v3903, %v3940
          %v3943 = vadd.f32 %v3904, %v3940
          %v3944 = vadd.f32 %v3905, %v3940
          %v3945 = vadd.f32 %v3906, %v3940
          %v3946 = vadd.f32 %v3907, %v3940
          %v3947 = vadd.f32 %v3908, %v3940
          %v3948 = vadd.f32 %v3909, %v3940
          %v3949 = vadd.f32 %v3910, %v3940
          %v3950 = vadd.f32 %v3911, %v3940
          %v3951 = vadd.f32 %v3912, %v3940
          %v3952 = vadd.f32 %v3913, %v3940
          %v3953 = vadd.f32 %v3914, %v3940
          %v3954 = vadd.f32 %v3915, %v3940
          %v3955 = vadd.f32 %v3916, %v3940
          %v3956 = vadd.f32 %v3917, %v3940
          %v3957 = vadd.f32 %v3918, %v3940
          %v3958 = vadd.f32 %v3919, %v3940
          %v3959 = vadd.f32 %v3920, %v3940
          %v3960 = vadd.f32 %v3921, %v3940
          %v3961 = vadd.f32 %v3922, %v3940
          %v3962 = vadd.f32 %v3923, %v3940
          %v3963 = vadd.f32 %v3924, %v3940
          %v3964 = vadd.f32 %v3925, %v3940
          %v3965 = vadd.f32 %v3926, %v3940
          %v3966 = vadd.f32 %v3927, %v3940
          %v3967 = vadd.f32 %v3928, %v3940
          %v3968 = vadd.f32 %v3929, %v3940
          %v3969 = vadd.f32 %v3930, %v3940
          %v3970 = vadd.f32 %v3931, %v3940
          %v3971 = vadd.f32 %v3932, %v3940
          %v3972 = vadd.f32 %v3933, %v3940
          %v3973 = vadd.f32 %v3934, %v3940
          %vm3974 = vcmp.gt.f32.partialorder %v3839, 0.0
          %vm3975 = vcmp.gt.f32.partialorder %v3840, 0.0
          %vm3976 = vcmp.gt.f32.partialorder %v3841, 0.0
          %vm3977 = vcmp.gt.f32.partialorder %v3842, 0.0
          %vm3978 = vcmp.gt.f32.partialorder %v3843, 0.0
          %vm3979 = vcmp.gt.f32.partialorder %v3844, 0.0
          %vm3980 = vcmp.gt.f32.partialorder %v3845, 0.0
          %vm3981 = vcmp.gt.f32.partialorder %v3846, 0.0
          %vm3982 = vcmp.gt.f32.partialorder %v3847, 0.0
          %vm3983 = vcmp.gt.f32.partialorder %v3848, 0.0
          %vm3984 = vcmp.gt.f32.partialorder %v3849, 0.0
          %vm3985 = vcmp.gt.f32.partialorder %v3850, 0.0
          %vm3986 = vcmp.gt.f32.partialorder %v3851, 0.0
          %vm3987 = vcmp.gt.f32.partialorder %v3852, 0.0
          %vm3988 = vcmp.gt.f32.partialorder %v3853, 0.0
          %vm3989 = vcmp.gt.f32.partialorder %v3854, 0.0
          %vm3990 = vcmp.gt.f32.partialorder %v3855, 0.0
          %vm3991 = vcmp.gt.f32.partialorder %v3856, 0.0
          %vm3992 = vcmp.gt.f32.partialorder %v3857, 0.0
          %vm3993 = vcmp.gt.f32.partialorder %v3858, 0.0
          %vm3994 = vcmp.gt.f32.partialorder %v3859, 0.0
          %vm3995 = vcmp.gt.f32.partialorder %v3860, 0.0
          %vm3996 = vcmp.gt.f32.partialorder %v3861, 0.0
          %vm3997 = vcmp.gt.f32.partialorder %v3862, 0.0
          %vm3998 = vcmp.gt.f32.partialorder %v3863, 0.0
          %vm3999 = vcmp.gt.f32.partialorder %v3864, 0.0
          %vm4000 = vcmp.gt.f32.partialorder %v3865, 0.0
          %vm4001 = vcmp.gt.f32.partialorder %v3866, 0.0
          %vm4002 = vcmp.gt.f32.partialorder %v3867, 0.0
          %vm4003 = vcmp.gt.f32.partialorder %v3868, 0.0
          %vm4004 = vcmp.gt.f32.partialorder %v3869, 0.0
          %vm4005 = vcmp.gt.f32.partialorder %v3870, 0.0
          %4007 = vset.pattern.permute.xlu0 0
          %4008 = vperm.xlu0 %4007, %v3704
          %v4009 = vpop.permute.xlu0 %4008
          %4012 = vset.pattern.permute.xlu0 0
          %4013 = vperm.xlu0 %4012, %v3705
          %v4014 = vpop.permute.xlu0 %4013
          %4017 = vset.pattern.permute.xlu0 0
          %4018 = vperm.xlu0 %4017, %v3706
          %v4019 = vpop.permute.xlu0 %4018
          %4022 = vset.pattern.permute.xlu0 0
          %4023 = vperm.xlu0 %4022, %v3707
          %v4024 = vpop.permute.xlu0 %4023
          %4027 = vset.pattern.permute.xlu0 0
          %4028 = vperm.xlu0 %4027, %v3708
          %v4029 = vpop.permute.xlu0 %4028
          %4032 = vset.pattern.permute.xlu0 0
          %4033 = vperm.xlu0 %4032, %v3709
          %v4034 = vpop.permute.xlu0 %4033
          %4037 = vset.pattern.permute.xlu0 0
          %4038 = vperm.xlu0 %4037, %v3710
          %v4039 = vpop.permute.xlu0 %4038
          %4042 = vset.pattern.permute.xlu0 0
          %4043 = vperm.xlu0 %4042, %v3711
          %v4044 = vpop.permute.xlu0 %4043
          %4047 = vset.pattern.permute.xlu0 0
          %4048 = vperm.xlu0 %4047, %v3712
          %v4049 = vpop.permute.xlu0 %4048
          %4052 = vset.pattern.permute.xlu0 0
          %4053 = vperm.xlu0 %4052, %v3713
          %v4054 = vpop.permute.xlu0 %4053
          %4057 = vset.pattern.permute.xlu0 0
          %4058 = vperm.xlu0 %4057, %v3714
          %v4059 = vpop.permute.xlu0 %4058
          %4062 = vset.pattern.permute.xlu0 0
          %4063 = vperm.xlu0 %4062, %v3715
          %v4064 = vpop.permute.xlu0 %4063
          %4067 = vset.pattern.permute.xlu0 0
          %4068 = vperm.xlu0 %4067, %v3716
          %v4069 = vpop.permute.xlu0 %4068
          %4072 = vset.pattern.permute.xlu0 0
          %4073 = vperm.xlu0 %4072, %v3717
          %v4074 = vpop.permute.xlu0 %4073
          %4077 = vset.pattern.permute.xlu0 0
          %4078 = vperm.xlu0 %4077, %v3718
          %v4079 = vpop.permute.xlu0 %4078
          %4082 = vset.pattern.permute.xlu0 0
          %4083 = vperm.xlu0 %4082, %v3719
          %v4084 = vpop.permute.xlu0 %4083
          %4087 = vset.pattern.permute.xlu0 0
          %4088 = vperm.xlu0 %4087, %v3720
          %v4089 = vpop.permute.xlu0 %4088
          %4092 = vset.pattern.permute.xlu0 0
          %4093 = vperm.xlu0 %4092, %v3721
          %v4094 = vpop.permute.xlu0 %4093
          %4097 = vset.pattern.permute.xlu0 0
          %4098 = vperm.xlu0 %4097, %v3722
          %v4099 = vpop.permute.xlu0 %4098
          %4102 = vset.pattern.permute.xlu0 0
          %4103 = vperm.xlu0 %4102, %v3723
          %v4104 = vpop.permute.xlu0 %4103
          %4107 = vset.pattern.permute.xlu0 0
          %4108 = vperm.xlu0 %4107, %v3724
          %v4109 = vpop.permute.xlu0 %4108
          %4112 = vset.pattern.permute.xlu0 0
          %4113 = vperm.xlu0 %4112, %v3725
          %v4114 = vpop.permute.xlu0 %4113
          %4117 = vset.pattern.permute.xlu0 0
          %4118 = vperm.xlu0 %4117, %v3726
          %v4119 = vpop.permute.xlu0 %4118
          %4122 = vset.pattern.permute.xlu0 0
          %4123 = vperm.xlu0 %4122, %v3727
          %v4124 = vpop.permute.xlu0 %4123
          %4127 = vset.pattern.permute.xlu0 0
          %4128 = vperm.xlu0 %4127, %v3728
          %v4129 = vpop.permute.xlu0 %4128
          %4132 = vset.pattern.permute.xlu0 0
          %4133 = vperm.xlu0 %4132, %v3729
          %v4134 = vpop.permute.xlu0 %4133
          %4137 = vset.pattern.permute.xlu0 0
          %4138 = vperm.xlu0 %4137, %v3730
          %v4139 = vpop.permute.xlu0 %4138
          %4142 = vset.pattern.permute.xlu0 0
          %4143 = vperm.xlu0 %4142, %v3731
          %v4144 = vpop.permute.xlu0 %4143
          %4147 = vset.pattern.permute.xlu0 0
          %4148 = vperm.xlu0 %4147, %v3732
          %v4149 = vpop.permute.xlu0 %4148
          %4152 = vset.pattern.permute.xlu0 0
          %4153 = vperm.xlu0 %4152, %v3733
          %v4154 = vpop.permute.xlu0 %4153
          %4157 = vset.pattern.permute.xlu0 0
          %4158 = vperm.xlu0 %4157, %v3734
          %v4159 = vpop.permute.xlu0 %4158
          %4162 = vset.pattern.permute.xlu0 0
          %4163 = vperm.xlu0 %4162, %v3735
          %v4164 = vpop.permute.xlu0 %4163
          %v4166 = vmul.f32 %v3942, %v4009
          %v4167 = vmul.f32 %v3943, %v4014
          %v4168 = vmul.f32 %v3944, %v4019
          %v4169 = vmul.f32 %v3945, %v4024
          %v4170 = vmul.f32 %v3946, %v4029
          %v4171 = vmul.f32 %v3947, %v4034
          %v4172 = vmul.f32 %v3948, %v4039
          %v4173 = vmul.f32 %v3949, %v4044
          %v4174 = vmul.f32 %v3950, %v4049
          %v4175 = vmul.f32 %v3951, %v4054
          %v4176 = vmul.f32 %v3952, %v4059
          %v4177 = vmul.f32 %v3953, %v4064
          %v4178 = vmul.f32 %v3954, %v4069
          %v4179 = vmul.f32 %v3955, %v4074
          %v4180 = vmul.f32 %v3956, %v4079
          %v4181 = vmul.f32 %v3957, %v4084
          %v4182 = vmul.f32 %v3958, %v4089
          %v4183 = vmul.f32 %v3959, %v4094
          %v4184 = vmul.f32 %v3960, %v4099
          %v4185 = vmul.f32 %v3961, %v4104
          %v4186 = vmul.f32 %v3962, %v4109
          %v4187 = vmul.f32 %v3963, %v4114
          %v4188 = vmul.f32 %v3964, %v4119
          %v4189 = vmul.f32 %v3965, %v4124
          %v4190 = vmul.f32 %v3966, %v4129
          %v4191 = vmul.f32 %v3967, %v4134
          %v4192 = vmul.f32 %v3968, %v4139
          %v4193 = vmul.f32 %v3969, %v4144
          %v4194 = vmul.f32 %v3970, %v4149
          %v4195 = vmul.f32 %v3971, %v4154
          %v4196 = vmul.f32 %v3972, %v4159
          %v4197 = vmul.f32 %v3973, %v4164
          %v4198 = vsel %vm3974, 1, 0
          %v4199 = vsel %vm3975, 1, 0
          %v4200 = vsel %vm3976, 1, 0
          %v4201 = vsel %vm3977, 1, 0
          %v4202 = vsel %vm3978, 1, 0
          %v4203 = vsel %vm3979, 1, 0
          %v4204 = vsel %vm3980, 1, 0
          %v4205 = vsel %vm3981, 1, 0
          %v4206 = vsel %vm3982, 1, 0
          %v4207 = vsel %vm3983, 1, 0
          %v4208 = vsel %vm3984, 1, 0
          %v4209 = vsel %vm3985, 1, 0
          %v4210 = vsel %vm3986, 1, 0
          %v4211 = vsel %vm3987, 1, 0
          %v4212 = vsel %vm3988, 1, 0
          %v4213 = vsel %vm3989, 1, 0
          %v4214 = vsel %vm3990, 1, 0
          %v4215 = vsel %vm3991, 1, 0
          %v4216 = vsel %vm3992, 1, 0
          %v4217 = vsel %vm3993, 1, 0
          %v4218 = vsel %vm3994, 1, 0
          %v4219 = vsel %vm3995, 1, 0
          %v4220 = vsel %vm3996, 1, 0
          %v4221 = vsel %vm3997, 1, 0
          %v4222 = vsel %vm3998, 1, 0
          %v4223 = vsel %vm3999, 1, 0
          %v4224 = vsel %vm4000, 1, 0
          %v4225 = vsel %vm4001, 1, 0
          %v4226 = vsel %vm4002, 1, 0
          %v4227 = vsel %vm4003, 1, 0
          %v4228 = vsel %vm4004, 1, 0
          %v4229 = vsel %vm4005, 1, 0
          %4230 = vset.pattern.permute.xlu0 1
          %4231 = vperm.xlu0 %4230, %v4198
          %v4232 = vpop.permute.xlu0 %4231
          %4233 = vset.pattern.permute.xlu0 1
          %4234 = vperm.xlu0 %4233, %v4199
          %v4235 = vpop.permute.xlu0 %4234
          %4236 = vset.pattern.permute.xlu0 1
          %4237 = vperm.xlu0 %4236, %v4200
          %v4238 = vpop.permute.xlu0 %4237
          %4239 = vset.pattern.permute.xlu0 1
          %4240 = vperm.xlu0 %4239, %v4201
          %v4241 = vpop.permute.xlu0 %4240
          %4242 = vset.pattern.permute.xlu0 1
          %4243 = vperm.xlu0 %4242, %v4202
          %v4244 = vpop.permute.xlu0 %4243
          %4245 = vset.pattern.permute.xlu0 1
          %4246 = vperm.xlu0 %4245, %v4203
          %v4247 = vpop.permute.xlu0 %4246
          %4248 = vset.pattern.permute.xlu0 1
          %4249 = vperm.xlu0 %4248, %v4204
          %v4250 = vpop.permute.xlu0 %4249
          %4251 = vset.pattern.permute.xlu0 1
          %4252 = vperm.xlu0 %4251, %v4205
          %v4253 = vpop.permute.xlu0 %4252
          %4254 = vset.pattern.permute.xlu0 1
          %4255 = vperm.xlu0 %4254, %v4206
          %v4256 = vpop.permute.xlu0 %4255
          %4257 = vset.pattern.permute.xlu0 1
          %4258 = vperm.xlu0 %4257, %v4207
          %v4259 = vpop.permute.xlu0 %4258
          %4260 = vset.pattern.permute.xlu0 1
          %4261 = vperm.xlu0 %4260, %v4208
          %v4262 = vpop.permute.xlu0 %4261
          %4263 = vset.pattern.permute.xlu0 1
          %4264 = vperm.xlu0 %4263, %v4209
          %v4265 = vpop.permute.xlu0 %4264
          %4266 = vset.pattern.permute.xlu0 1
          %4267 = vperm.xlu0 %4266, %v4210
          %v4268 = vpop.permute.xlu0 %4267
          %4269 = vset.pattern.permute.xlu0 1
          %4270 = vperm.xlu0 %4269, %v4211
          %v4271 = vpop.permute.xlu0 %4270
          %4272 = vset.pattern.permute.xlu0 1
          %4273 = vperm.xlu0 %4272, %v4212
          %v4274 = vpop.permute.xlu0 %4273
          %4275 = vset.pattern.permute.xlu0 1
          %4276 = vperm.xlu0 %4275, %v4213
          %v4277 = vpop.permute.xlu0 %4276
          %4278 = vset.pattern.permute.xlu0 1
          %4279 = vperm.xlu0 %4278, %v4214
          %v4280 = vpop.permute.xlu0 %4279
          %4281 = vset.pattern.permute.xlu0 1
          %4282 = vperm.xlu0 %4281, %v4215
          %v4283 = vpop.permute.xlu0 %4282
          %4284 = vset.pattern.permute.xlu0 1
          %4285 = vperm.xlu0 %4284, %v4216
          %v4286 = vpop.permute.xlu0 %4285
          %4287 = vset.pattern.permute.xlu0 1
          %4288 = vperm.xlu0 %4287, %v4217
          %v4289 = vpop.permute.xlu0 %4288
          %4290 = vset.pattern.permute.xlu0 1
          %4291 = vperm.xlu0 %4290, %v4218
          %v4292 = vpop.permute.xlu0 %4291
          %4293 = vset.pattern.permute.xlu0 1
          %4294 = vperm.xlu0 %4293, %v4219
          %v4295 = vpop.permute.xlu0 %4294
          %4296 = vset.pattern.permute.xlu0 1
          %4297 = vperm.xlu0 %4296, %v4220
          %v4298 = vpop.permute.xlu0 %4297
          %4299 = vset.pattern.permute.xlu0 1
          %4300 = vperm.xlu0 %4299, %v4221
          %v4301 = vpop.permute.xlu0 %4300
          %4302 = vset.pattern.permute.xlu0 1
          %4303 = vperm.xlu0 %4302, %v4222
          %v4304 = vpop.permute.xlu0 %4303
          %4305 = vset.pattern.permute.xlu0 1
          %4306 = vperm.xlu0 %4305, %v4223
          %v4307 = vpop.permute.xlu0 %4306
          %4308 = vset.pattern.permute.xlu0 1
          %4309 = vperm.xlu0 %4308, %v4224
          %v4310 = vpop.permute.xlu0 %4309
          %4311 = vset.pattern.permute.xlu0 1
          %4312 = vperm.xlu0 %4311, %v4225
          %v4313 = vpop.permute.xlu0 %4312
          %4314 = vset.pattern.permute.xlu0 1
          %4315 = vperm.xlu0 %4314, %v4226
          %v4316 = vpop.permute.xlu0 %4315
          %4317 = vset.pattern.permute.xlu0 1
          %4318 = vperm.xlu0 %4317, %v4227
          %v4319 = vpop.permute.xlu0 %4318
          %4320 = vset.pattern.permute.xlu0 1
          %4321 = vperm.xlu0 %4320, %v4228
          %v4322 = vpop.permute.xlu0 %4321
          %4323 = vset.pattern.permute.xlu0 1
          %4324 = vperm.xlu0 %4323, %v4229
          %v4325 = vpop.permute.xlu0 %4324
          %vm4326 = vcmp.eq.s32.totalorder %v4232, 1
          %vm4327 = vcmp.eq.s32.totalorder %v4235, 1
          %vm4328 = vcmp.eq.s32.totalorder %v4238, 1
          %vm4329 = vcmp.eq.s32.totalorder %v4241, 1
          %vm4330 = vcmp.eq.s32.totalorder %v4244, 1
          %vm4331 = vcmp.eq.s32.totalorder %v4247, 1
          %vm4332 = vcmp.eq.s32.totalorder %v4250, 1
          %vm4333 = vcmp.eq.s32.totalorder %v4253, 1
          %vm4334 = vcmp.eq.s32.totalorder %v4256, 1
          %vm4335 = vcmp.eq.s32.totalorder %v4259, 1
          %vm4336 = vcmp.eq.s32.totalorder %v4262, 1
          %vm4337 = vcmp.eq.s32.totalorder %v4265, 1
          %vm4338 = vcmp.eq.s32.totalorder %v4268, 1
          %vm4339 = vcmp.eq.s32.totalorder %v4271, 1
          %vm4340 = vcmp.eq.s32.totalorder %v4274, 1
          %vm4341 = vcmp.eq.s32.totalorder %v4277, 1
          %vm4342 = vcmp.eq.s32.totalorder %v4280, 1
          %vm4343 = vcmp.eq.s32.totalorder %v4283, 1
          %vm4344 = vcmp.eq.s32.totalorder %v4286, 1
          %vm4345 = vcmp.eq.s32.totalorder %v4289, 1
          %vm4346 = vcmp.eq.s32.totalorder %v4292, 1
          %vm4347 = vcmp.eq.s32.totalorder %v4295, 1
          %vm4348 = vcmp.eq.s32.totalorder %v4298, 1
          %vm4349 = vcmp.eq.s32.totalorder %v4301, 1
          %vm4350 = vcmp.eq.s32.totalorder %v4304, 1
          %vm4351 = vcmp.eq.s32.totalorder %v4307, 1
          %vm4352 = vcmp.eq.s32.totalorder %v4310, 1
          %vm4353 = vcmp.eq.s32.totalorder %v4313, 1
          %vm4354 = vcmp.eq.s32.totalorder %v4316, 1
          %vm4355 = vcmp.eq.s32.totalorder %v4319, 1
          %vm4356 = vcmp.eq.s32.totalorder %v4322, 1
          %vm4357 = vcmp.eq.s32.totalorder %v4325, 1
          %v4358 = vsel %vm4326, %v4166, %v3562
          %v4359 = vsel %vm4327, %v4167, %v3563
          %v4360 = vsel %vm4328, %v4168, %v3564
          %v4361 = vsel %vm4329, %v4169, %v3565
          %v4362 = vsel %vm4330, %v4170, %v3566
          %v4363 = vsel %vm4331, %v4171, %v3567
          %v4364 = vsel %vm4332, %v4172, %v3568
          %v4365 = vsel %vm4333, %v4173, %v3569
          %v4366 = vsel %vm4334, %v4174, %v3570
          %v4367 = vsel %vm4335, %v4175, %v3571
          %v4368 = vsel %vm4336, %v4176, %v3572
          %v4369 = vsel %vm4337, %v4177, %v3573
          %v4370 = vsel %vm4338, %v4178, %v3574
          %v4371 = vsel %vm4339, %v4179, %v3575
          %v4372 = vsel %vm4340, %v4180, %v3576
          %v4373 = vsel %vm4341, %v4181, %v3577
          %v4374 = vsel %vm4342, %v4182, %v3578
          %v4375 = vsel %vm4343, %v4183, %v3579
          %v4376 = vsel %vm4344, %v4184, %v3580
          %v4377 = vsel %vm4345, %v4185, %v3581
          %v4378 = vsel %vm4346, %v4186, %v3582
          %v4379 = vsel %vm4347, %v4187, %v3583
          %v4380 = vsel %vm4348, %v4188, %v3584
          %v4381 = vsel %vm4349, %v4189, %v3585
          %v4382 = vsel %vm4350, %v4190, %v3586
          %v4383 = vsel %vm4351, %v4191, %v3587
          %v4384 = vsel %vm4352, %v4192, %v3588
          %v4385 = vsel %vm4353, %v4193, %v3589
          %v4386 = vsel %vm4354, %v4194, %v3590
          %v4387 = vsel %vm4355, %v4195, %v3591
          %v4388 = vsel %vm4356, %v4196, %v3592
          %v4389 = vsel %vm4357, %v4197, %v3593
          %4390 = vst [vmem:[%s448] sm:$0xff] %v4358
          %4391 = vst [vmem:[%s448 + $0x8] sm:$0xff] %v4359
          %4392 = vst [vmem:[%s448 + $0x10] sm:$0xff] %v4360
          %4393 = vst [vmem:[%s448 + $0x18] sm:$0xff] %v4361
          %4394 = vst [vmem:[%s448 + $0x20] sm:$0xff] %v4362
          %4395 = vst [vmem:[%s448 + $0x28] sm:$0xff] %v4363
          %4396 = vst [vmem:[%s448 + $0x30] sm:$0xff] %v4364
          %4397 = vst [vmem:[%s448 + $0x38] sm:$0xff] %v4365
          %4398 = vst [vmem:[%s448 + $0x40] sm:$0xff] %v4366
          %4399 = vst [vmem:[%s448 + $0x48] sm:$0xff] %v4367
          %4400 = vst [vmem:[%s448 + $0x50] sm:$0xff] %v4368
          %4401 = vst [vmem:[%s448 + $0x58] sm:$0xff] %v4369
          %4402 = vst [vmem:[%s448 + $0x60] sm:$0xff] %v4370
          %4403 = vst [vmem:[%s448 + $0x68] sm:$0xff] %v4371
          %4404 = vst [vmem:[%s448 + $0x70] sm:$0xff] %v4372
          %4405 = vst [vmem:[%s448 + $0x78] sm:$0xff] %v4373
          %4406 = vst [vmem:[%s448 + $0x80] sm:$0xff] %v4374
          %4407 = vst [vmem:[%s448 + $0x88] sm:$0xff] %v4375
          %4408 = vst [vmem:[%s448 + $0x90] sm:$0xff] %v4376
          %4409 = vst [vmem:[%s448 + $0x98] sm:$0xff] %v4377
          %4410 = vst [vmem:[%s448 + $0xa0] sm:$0xff] %v4378
          %4411 = vst [vmem:[%s448 + $0xa8] sm:$0xff] %v4379
          %4412 = vst [vmem:[%s448 + $0xb0] sm:$0xff] %v4380
          %4413 = vst [vmem:[%s448 + $0xb8] sm:$0xff] %v4381
          %4414 = vst [vmem:[%s448 + $0xc0] sm:$0xff] %v4382
          %4415 = vst [vmem:[%s448 + $0xc8] sm:$0xff] %v4383
          %4416 = vst [vmem:[%s448 + $0xd0] sm:$0xff] %v4384
          %4417 = vst [vmem:[%s448 + $0xd8] sm:$0xff] %v4385
          %4418 = vst [vmem:[%s448 + $0xe0] sm:$0xff] %v4386
          %4419 = vst [vmem:[%s448 + $0xe8] sm:$0xff] %v4387
          %4420 = vst [vmem:[%s448 + $0xf0] sm:$0xff] %v4388
          %4421 = vst [vmem:[%s448 + $0xf8] sm:$0xff] %v4389
        $region80: #{mod_transformer_forward.1} parent=59 // pred_fallthru
          _
        %s4422 = sand.u32 %s278, 1
        %s4423 = scalar_lea.sflag [#allocation6], %s4422
        %s4424 = sand.u32 %s278, 1
        %s4425 = smul.addr %s4424, 256
        %s4426 = scalar_lea.vmem [#allocation10], %s4425
        // Predicated region
        $region81: #{mod_transformer_forward.1} parent=59 // pred_check
          %p4427 = pneg %p288
        $region82: #{mod_transformer_forward.1} parent=59 // pred_check_branch
          %4429 = sbr.rel (%p4427) target = $region84
        $region83: #{mod_transformer_forward.1} parent=59 // pred_region
          %s4430 = smul.u32 32, %s32
          %s4432 = ssub.s32 4096, 4096
          %4433 = vsyncadd %s4423, %s4432
          %s4434 = smul.addr %s4430, 128
          %s4435 = scalar_lea.hbm %s10, %s4434
          %s4436 = sshll.u32 %s4426, 4
          %s4437 = int_to_ptr.vmem [resolvable:$true] %s4436
          %4442 = dma.vmem_to_hbm [thread:$0]  %s4437, 4096, %s4435, %s4423, 128, 128, 8
        $region84: #{mod_transformer_forward.1} parent=59 // pred_fallthru
          _
      $region60: #{mod_transformer_forward.1} parent=5 // pred_fallthru
        _
      %p4443 = scmp.le.s32.totalorder 2, %s23
      // Predicated region
      $region85: #{mod_transformer_forward.1} parent=5 // pred_check
        %p4444 = pneg %p4443
      $region86: #{mod_transformer_forward.1} parent=5 // pred_check_branch
        %4446 = sbr.rel (%p4444) target = $region88
      $region87: #{mod_transformer_forward.1} parent=5 // pred_region
        %s4447 = ssub.s32 %s23, 2
        // Predicated region
        $region89: #{mod_transformer_forward.1} parent=87 // pred_check
          %p4448 = pneg %p294
        $region90: #{mod_transformer_forward.1} parent=87 // pred_check_branch
          %4450 = sbr.rel (%p4448) target = $region92
        $region91: #{mod_transformer_forward.1} parent=87 // pred_region
          %s4451 = sand.u32 %s279, 1
          %s4452 = scalar_lea.sflag [#allocation6], %s4451
          %s4453 = sand.u32 %s279, 1
          %s4454 = smul.addr %s4453, 256
          %s4455 = scalar_lea.vmem [#allocation10], %s4454
          %4456 = dma.done %s4452, 4096
        $region92: #{mod_transformer_forward.1} parent=87 // pred_fallthru
          _
      $region88: #{mod_transformer_forward.1} parent=5 // pred_fallthru
        _
    $region6: #{mod_transformer_forward.1} parent=1 // loop_footer
      %s27 = sadd.s32 1, %s23
    $region7: #{mod_transformer_forward.1} parent=1 // loop_footer_branch
      %22 = sbr.rel target = $region3
    $region8: #{mod_transformer_forward.1} parent=1 // loop_exit
      _
    %4457 = vsyncpa [#allocation5], 1
    %s4458 = scalar_lea.sflag [#allocation5], 1
    %4459 = vsyncpa %s4458, 1
    %4460 = vsyncpa [#allocation8], 1
    %4461 = vsyncpa [#allocation6], 1
    %s4462 = scalar_lea.sflag [#allocation6], 1
    %4463 = vsyncpa %s4462, 1

</llo_original>
